<compile_context>
chip_gen: v7x
topology: tpu7x:2x2x1
jax: 0.10.0
libtpu: 0.0.40
codegen_flags: <defaults>
</compile_context>

<pallas_src>
import math
from functools import partial

import jax
import jax.numpy as jnp
from jax.experimental import pallas as pl
from jax.experimental.pallas import tpu as pltpu

LOG2 = math.log(2.0)
LANE = 128


def _ssp(v):
    # shifted_softplus(v) = softplus(v) - log(2); _ssp(0) == 0 (pad-safe).
    return jnp.maximum(v, 0.0) + jnp.log1p(jnp.exp(-jnp.abs(v))) - LOG2


def _pad_to(n, m):
    return ((n + m - 1) // m) * m


def _pad2(a, rows, cols):
    r, c = a.shape
    return jnp.pad(a, ((0, rows - r), (0, cols - c)))


# --------------------------------------------------------------------------- #
# Pair-side kernel: filter network + rcut scaling + elementwise products.     #
# Runs exactly once per pair tile.                                            #
# --------------------------------------------------------------------------- #
def _pair_kernel(f_ij_ref, rcut_ref, yi_ref, xj_ref,
                 wf1_ref, bf1_ref, wf2_ref, bf2_ref,
                 x_ij_ref, y_ij_ref, *, compute_dtype):
    f32 = jnp.float32
    h = _ssp(jnp.dot(f_ij_ref[...], wf1_ref[...], preferred_element_type=f32)
             + bf1_ref[...])
    Wij = (jnp.dot(h.astype(compute_dtype), wf2_ref[...],
                   preferred_element_type=f32) + bf2_ref[...])
    Wij = Wij * rcut_ref[...]                                   # [Pt, Fp], f32

    x_ij_ref[...] = (xj_ref[...].astype(f32) * Wij).astype(x_ij_ref.dtype)
    y_ij_ref[...] = (yi_ref[...].astype(f32) * Wij).astype(y_ij_ref.dtype)


# --------------------------------------------------------------------------- #
# Scatter-add + f2out kernel: grid (atom tiles, pair tiles).                  #
# --------------------------------------------------------------------------- #
def _scatter_f2out_kernel(x_ij_ref, y_ij_ref, idx_i_row_ref, idx_j_row_ref,
                          wo1x_ref, bo1x_ref, wo2x_ref, bo2x_ref,
                          wo1y_ref, bo1y_ref, wo2y_ref, bo2y_ref,
                          out_x_ref, out_y_ref,
                          conv_x_acc, conv_y_acc,
                          *, atom_tile, compute_dtype):
    f32 = jnp.float32
    a = pl.program_id(0)          # atom tile (parallel)
    p = pl.program_id(1)          # pair tile (reduction)
    last_p = pl.num_programs(1) - 1

    @pl.when(p == 0)
    def _init():
        conv_x_acc[...] = jnp.zeros_like(conv_x_acc)
        conv_y_acc[...] = jnp.zeros_like(conv_y_acc)

    pt = x_ij_ref.shape[0]
    idx_i_row = idx_i_row_ref[...].reshape(1, pt)               # [1, Pt] int32
    idx_j_row = idx_j_row_ref[...].reshape(1, pt)

    # Scatter one-hots built directly in transposed layout, restricted to the
    # current atom tile (no .T / relayout; footprint is atom_tile x pair_tile).
    s_iota = (jax.lax.broadcasted_iota(jnp.int32, (atom_tile, pt), 0)
              + a * atom_tile)
    oh_i = jnp.where(s_iota == idx_i_row, 1.0, 0.0).astype(compute_dtype)
    oh_j = jnp.where(s_iota == idx_j_row, 1.0, 0.0).astype(compute_dtype)

    conv_x_acc[...] += jnp.dot(oh_i, x_ij_ref[...], preferred_element_type=f32)
    conv_y_acc[...] += jnp.dot(oh_j, y_ij_ref[...], preferred_element_type=f32)

    @pl.when(p == last_p)
    def _finalize():
        hx = _ssp(jnp.dot(conv_x_acc[...].astype(compute_dtype), wo1x_ref[...],
                          preferred_element_type=f32) + bo1x_ref[...])
        out_x_ref[...] = (jnp.dot(hx.astype(compute_dtype), wo2x_ref[...],
                                  preferred_element_type=f32) + bo2x_ref[...])
        hy = _ssp(jnp.dot(conv_y_acc[...].astype(compute_dtype), wo1y_ref[...],
                          preferred_element_type=f32) + bo1y_ref[...])
        out_y_ref[...] = (jnp.dot(hy.astype(compute_dtype), wo2y_ref[...],
                                  preferred_element_type=f32) + bo2y_ref[...])


def cross_interaction_pallas(x, y, f_ij, idx_i, idx_j, rcut_ij, params,
                             *, pair_tile=512, atom_tile=256,
                             compute_dtype=jnp.bfloat16):
    """Fused forward of LargeScalePBGNNCrossInteraction (XLA prelude + 2 kernels)."""
    f32 = jnp.float32
    cd = compute_dtype
    n_atoms_x, n_atom_basis = x.shape
    n_atoms_y = y.shape[0]
    n_pairs, n_rbf = f_ij.shape
    n_filters = params["w_in2f"].shape[1]

    # ---- lane-dense padding of feature dims; tile-aligned atoms / pairs ----
    Bp = _pad_to(n_atom_basis, LANE)
    Rp = _pad_to(n_rbf, LANE)
    Fp = _pad_to(n_filters, LANE)
    NAp = _pad_to(max(n_atoms_x, n_atoms_y), atom_tile)
    Pp = _pad_to(n_pairs, pair_tile)
    n_at = NAp // atom_tile
    n_pt = Pp // pair_tile

    # ---- Stage 0 (plain XLA, hoisted per perf review): in2f projections + gathers ----
    xf = jnp.dot(x.astype(cd), params["w_in2f"].astype(cd),
                 preferred_element_type=f32)                    # [n_atoms_x, F]
    yf = jnp.dot(y.astype(cd), params["w_in2f_y"].astype(cd),
                 preferred_element_type=f32)                    # [n_atoms_y, F]
    y_i = jnp.take(xf, idx_i.astype(jnp.int32), axis=0)         # [n_pairs, F]
    x_j = jnp.take(yf, idx_j.astype(jnp.int32), axis=0)

    yi_p = _pad2(y_i, Pp, Fp).astype(cd)                        # streamed bf16
    xj_p = _pad2(x_j, Pp, Fp).astype(cd)
    fp = _pad2(f_ij.astype(f32), Pp, Rp).astype(cd)             # bf16 f_ij stream
    rcut_col = jnp.pad(rcut_ij.astype(f32),
                       (0, Pp - n_pairs)).reshape(Pp, 1)        # rcut=0 kills pads
    idx_i_p = jnp.pad(idx_i.astype(jnp.int32), (0, Pp - n_pairs))
    idx_j_p = jnp.pad(idx_j.astype(jnp.int32), (0, Pp - n_pairs))
    idx_i_row = idx_i_p.reshape(n_pt, 1, pair_tile)             # lane-dense rows
    idx_j_row = idx_j_p.reshape(n_pt, 1, pair_tile)

    wf1 = _pad2(params["wf1"], Rp, Fp).astype(cd)
    bf1 = _pad2(params["bf1"], 1, Fp).astype(f32)
    wf2 = _pad2(params["wf2"], Fp, Fp).astype(cd)
    bf2 = _pad2(params["bf2"], 1, Fp).astype(f32)
    wo1x = _pad2(params["wo1x"], Fp, Bp).astype(cd)
    bo1x = _pad2(params["bo1x"], 1, Bp).astype(f32)
    wo2x = _pad2(params["wo2x"], Bp, Bp).astype(cd)
    bo2x = _pad2(params["bo2x"], 1, Bp).astype(f32)
    wo1y = _pad2(params["wo1y"], Fp, Bp).astype(cd)
    bo1y = _pad2(params["bo1y"], 1, Bp).astype(f32)
    wo2y = _pad2(params["wo2y"], Bp, Bp).astype(cd)
    bo2y = _pad2(params["bo2y"], 1, Bp).astype(f32)

    itemsize = jnp.dtype(cd).itemsize

    # ---- Stage 1: pair kernel (filter net + scaling), once per pair tile ----
    def pconst(shape):
        return pl.BlockSpec(shape, lambda p_, _n=len(shape): (0,) * _n)

    pair_flops = int(2 * Pp * Rp * Fp + 2 * Pp * Fp * Fp + 6 * Pp * Fp)
    pair_trans = int(2 * Pp * Fp)
    pair_bytes = int(Pp * Rp * itemsize + Pp * 4 + 2 * Pp * Fp * itemsize
                     + (Rp * Fp + Fp * Fp) * itemsize + 2 * Fp * 4
                     + 2 * Pp * Fp * itemsize)

    x_ij_p, y_ij_p = pl.pallas_call(
        partial(_pair_kernel, compute_dtype=cd),
        out_shape=(jax.ShapeDtypeStruct((Pp, Fp), cd),
                   jax.ShapeDtypeStruct((Pp, Fp), cd)),
        grid_spec=pltpu.PrefetchScalarGridSpec(
            num_scalar_prefetch=0,
            grid=(n_pt,),
            in_specs=[
                pl.BlockSpec((pair_tile, Rp), lambda p_: (p_, 0)),   # f_ij
                pl.BlockSpec((pair_tile, 1), lambda p_: (p_, 0)),    # rcut
                pl.BlockSpec((pair_tile, Fp), lambda p_: (p_, 0)),   # y_i = xf[idx_i]
                pl.BlockSpec((pair_tile, Fp), lambda p_: (p_, 0)),   # x_j = yf[idx_j]
                pconst((Rp, Fp)), pconst((1, Fp)),                   # filter layer 1
                pconst((Fp, Fp)), pconst((1, Fp)),                   # filter layer 2
            ],
            out_specs=(pl.BlockSpec((pair_tile, Fp), lambda p_: (p_, 0)),
                       pl.BlockSpec((pair_tile, Fp), lambda p_: (p_, 0)))),
        compiler_params=pltpu.CompilerParams(
            dimension_semantics=("parallel",)),
        cost_estimate=pl.CostEstimate(flops=pair_flops,
                                      transcendentals=pair_trans,
                                      bytes_accessed=pair_bytes),
    )(fp, rcut_col, yi_p, xj_p, wf1, bf1, wf2, bf2)

    # ---- Stage 2: scatter_add + f2out / f2out_y kernel ----
    def aconst(shape):
        return pl.BlockSpec(shape, lambda a_, p_, _n=len(shape): (0,) * _n)

    sc_flops = int(4 * NAp * Pp * Fp
                   + 4 * NAp * Fp * Bp + 4 * NAp * Bp * Bp)
    sc_trans = int(2 * NAp * Bp)
    # pair-tiled operands are re-streamed once per atom tile (n_at x).
    sc_bytes = int(n_at * (2 * Pp * Fp * itemsize + 2 * Pp * 4)
                   + (2 * Fp * Bp + 2 * Bp * Bp) * itemsize + 4 * Bp * 4
                   + 2 * NAp * Bp * 4)

    out_x_p, out_y_p = pl.pallas_call(
        partial(_scatter_f2out_kernel, atom_tile=atom_tile, compute_dtype=cd),
        out_shape=(jax.ShapeDtypeStruct((NAp, Bp), f32),
                   jax.ShapeDtypeStruct((NAp, Bp), f32)),
        grid_spec=pltpu.PrefetchScalarGridSpec(
            num_scalar_prefetch=0,
            grid=(n_at, n_pt),
            in_specs=[
                pl.BlockSpec((pair_tile, Fp), lambda a_, p_: (p_, 0)),      # x_ij
                pl.BlockSpec((pair_tile, Fp), lambda a_, p_: (p_, 0)),      # y_ij
                pl.BlockSpec((1, 1, pair_tile), lambda a_, p_: (p_, 0, 0)),  # idx_i
                pl.BlockSpec((1, 1, pair_tile), lambda a_, p_: (p_, 0, 0)),  # idx_j
                aconst((Fp, Bp)), aconst((1, Bp)),                           # f2out x L1
                aconst((Bp, Bp)), aconst((1, Bp)),                           # f2out x L2
                aconst((Fp, Bp)), aconst((1, Bp)),                           # f2out y L1
                aconst((Bp, Bp)), aconst((1, Bp)),                           # f2out y L2
            ],
            out_specs=(pl.BlockSpec((atom_tile, Bp), lambda a_, p_: (a_, 0)),
                       pl.BlockSpec((atom_tile, Bp), lambda a_, p_: (a_, 0))),
            scratch_shapes=[pltpu.VMEM((atom_tile, Fp), jnp.float32),   # conv_x acc
                            pltpu.VMEM((atom_tile, Fp), jnp.float32)]), # conv_y acc
        compiler_params=pltpu.CompilerParams(
            dimension_semantics=("parallel", "arbitrary")),
        # Per-step VMEM footprint is only a few MiB (no full-atom-count residents),
        # so the default scoped VMEM limit suffices on v5e/v6e/v7x.
        cost_estimate=pl.CostEstimate(flops=sc_flops,
                                      transcendentals=sc_trans,
                                      bytes_accessed=sc_bytes),
    )(x_ij_p, y_ij_p, idx_i_row, idx_j_row,
      wo1x, bo1x, wo2x, bo2x, wo1y, bo1y, wo2y, bo2y)

    return (out_x_p[:n_atoms_x, :n_atom_basis],
            out_y_p[:n_atoms_y, :n_atom_basis])


def cross_interaction_ref(x, y, f_ij, idx_i, idx_j, rcut_ij, params):
    """Pure-JAX f32 reference mirroring the PyTorch forward (split_size=None)."""
    xf = x @ params["w_in2f"]
    yf = y @ params["w_in2f_y"]
    h = _ssp(f_ij @ params["wf1"] + params["bf1"])
    Wij = (h @ params["wf2"] + params["bf2"]) * rcut_ij[:, None]
    x_j = yf[idx_j]
    y_i = xf[idx_i]
    x_ij = x_j * Wij
    y_ij = y_i * Wij
    conv_x = jnp.zeros_like(xf).at[idx_i].add(x_ij)
    conv_y = jnp.zeros_like(yf).at[idx_j].add(y_ij)
    ox = _ssp(conv_x @ params["wo1x"] + params["bo1x"]) @ params["wo2x"] + params["bo2x"]
    oy = _ssp(conv_y @ params["wo1y"] + params["bo1y"]) @ params["wo2y"] + params["bo2y"]
    return ox, oy


def init_params(key, n_atom_basis, n_rbf, n_filters):
    """Deterministic synthetic parameters (Dense weights pre-transposed to [in,out])."""
    ks = jax.random.split(key, 10)
    u = lambda k, shape, fan_in: (jax.random.uniform(k, shape, jnp.float32, -1.0, 1.0)
                                  / math.sqrt(fan_in))
    B, R, F = n_atom_basis, n_rbf, n_filters
    return {
        "w_in2f":   u(ks[0], (B, F), B),
        "w_in2f_y": u(ks[1], (B, F), B),
        "wf1":  u(ks[2], (R, F), R), "bf1": jnp.zeros((1, F), jnp.float32),
        "wf2":  u(ks[3], (F, F), F), "bf2": 0.01 * jnp.ones((1, F), jnp.float32),
        "wo1x": u(ks[4], (F, B), F), "bo1x": jnp.zeros((1, B), jnp.float32),
        "wo2x": u(ks[5], (B, B), B), "bo2x": 0.02 * jnp.ones((1, B), jnp.float32),
        "wo1y": u(ks[6], (F, B), F), "bo1y": jnp.zeros((1, B), jnp.float32),
        "wo2y": u(ks[7], (B, B), B), "bo2y": 0.02 * jnp.ones((1, B), jnp.float32),
    }


if __name__ == "__main__":
    # Small shapes, but large enough to exercise the padding paths and (with the
    # 128-tile config) multiple atom tiles x pair tiles.
    n_atoms_x = 160
    n_atoms_y = 144
    n_pairs = 300
    n_atom_basis = 32
    n_rbf = 20
    n_filters = 48

    key = jax.random.PRNGKey(0)
    kx, ky, kf, ki, kj, kr, kp = jax.random.split(key, 7)

    x = jax.random.normal(kx, (n_atoms_x, n_atom_basis), jnp.float32)
    y = jax.random.normal(ky, (n_atoms_y, n_atom_basis), jnp.float32)
    f_ij = jax.random.normal(kf, (n_pairs, n_rbf), jnp.float32)
    idx_i = jax.random.randint(ki, (n_pairs,), 0, n_atoms_x, jnp.int32)
    idx_j = jax.random.randint(kj, (n_pairs,), 0, n_atoms_y, jnp.int32)
    rcut_ij = jax.random.uniform(kr, (n_pairs,), jnp.float32)

    params = init_params(kp, n_atom_basis, n_rbf, n_filters)
    ref_x, ref_y = cross_interaction_ref(x, y, f_ij, idx_i, idx_j, rcut_ij, params)

    # Production-sized tiles (v6e/v7x friendly) and a small-tile config that
    # exercises multi atom-tile / multi pair-tile accumulation.
    for pt_, at_ in ((512, 256), (128, 128)):
        out_x, out_y = cross_interaction_pallas(
            x, y, f_ij, idx_i, idx_j, rcut_ij, params,
            pair_tile=pt_, atom_tile=at_)
        jax.block_until_ready((out_x, out_y))
        # bf16 operands on every MXU matmul (f32 accumulation) -> tolerance 2e-2.
        assert jnp.allclose(out_x, ref_x, rtol=2e-2, atol=2e-2), "x mismatch"
        assert jnp.allclose(out_y, ref_y, rtol=2e-2, atol=2e-2), "y mismatch"

    print("KERNEL_OK")
</pallas_src>

<mosaic_0001>
module attributes {stable_mosaic.version = 11 : i64} {
  func.func @_pair_kernel(%arg0: i32, %arg1: memref<512x128xbf16, #tpu.memory_space<vmem>>, %arg2: memref<512x1xf32, #tpu.memory_space<vmem>>, %arg3: memref<512x128xbf16, #tpu.memory_space<vmem>>, %arg4: memref<512x128xbf16, #tpu.memory_space<vmem>>, %arg5: memref<128x128xbf16, #tpu.memory_space<vmem>>, %arg6: memref<1x128xf32, #tpu.memory_space<vmem>>, %arg7: memref<128x128xbf16, #tpu.memory_space<vmem>>, %arg8: memref<1x128xf32, #tpu.memory_space<vmem>>, %arg9: memref<512x128xbf16, #tpu.memory_space<vmem>>, %arg10: memref<512x128xbf16, #tpu.memory_space<vmem>>) attributes {dimension_semantics = [#tpu.dimension_semantics<parallel>], iteration_bounds = array<i64: 1>, scalar_prefetch = 0 : i64, scratch_operands = 0 : i64, tpu.core_type = #tpu.core_type<tc>, window_params = [{transform_indices = @transform_0, window_bounds = array<i64: 512, 128>}, {transform_indices = @transform_1, window_bounds = array<i64: 512, 1>}, {transform_indices = @transform_2, window_bounds = array<i64: 512, 128>}, {transform_indices = @transform_3, window_bounds = array<i64: 512, 128>}, {pipeline_mode = #tpu.pipeline_mode<synchronous>, transform_indices = @transform_4, window_bounds = array<i64: 128, 128>}, {pipeline_mode = #tpu.pipeline_mode<synchronous>, transform_indices = @transform_5, window_bounds = array<i64: 1, 128>}, {pipeline_mode = #tpu.pipeline_mode<synchronous>, transform_indices = @transform_6, window_bounds = array<i64: 128, 128>}, {pipeline_mode = #tpu.pipeline_mode<synchronous>, transform_indices = @transform_7, window_bounds = array<i64: 1, 128>}, {transform_indices = @transform_8, window_bounds = array<i64: 512, 128>}, {transform_indices = @transform_9, window_bounds = array<i64: 512, 128>}]} {
    %c0 = arith.constant 0 : index
    %c0_0 = arith.constant 0 : index
    %0 = vector.load %arg1[%c0, %c0_0] : memref<512x128xbf16, #tpu.memory_space<vmem>>, vector<512x128xbf16>
    %c0_1 = arith.constant 0 : index
    %c0_2 = arith.constant 0 : index
    %1 = vector.load %arg5[%c0_1, %c0_2] : memref<128x128xbf16, #tpu.memory_space<vmem>>, vector<128x128xbf16>
    %cst = arith.constant dense<0.000000e+00> : vector<512x128xf32>
    %2 = tpu.matmul %0, %1, %cst {dimension_numbers = #tpu.dot_dimension_numbers<[1], [0], [0], [1], [0, 0, 1, 1], [], []>} : vector<512x128xbf16>, vector<128x128xbf16>, vector<512x128xf32> -> vector<512x128xf32>
    %c0_3 = arith.constant 0 : index
    %c0_4 = arith.constant 0 : index
    %3 = vector.load %arg6[%c0_3, %c0_4] : memref<1x128xf32, #tpu.memory_space<vmem>>, vector<1x128xf32>
    %4 = vector.broadcast %3 : vector<1x128xf32> to vector<512x128xf32>
    %5 = arith.addf %2, %4 : vector<512x128xf32>
    %cst_5 = arith.constant 0.000000e+00 : f32
    %6 = vector.broadcast %cst_5 : f32 to vector<512x128xf32>
    %7 = arith.maximumf %5, %6 : vector<512x128xf32>
    %8 = math.absf %5 : vector<512x128xf32>
    %cst_6 = arith.constant 0.000000e+00 : f32
    %9 = vector.broadcast %cst_6 : f32 to vector<512x128xf32>
    %10 = arith.subf %9, %8 : vector<512x128xf32>
    %11 = math.exp %10 : vector<512x128xf32>
    %12 = math.log1p %11 : vector<512x128xf32>
    %13 = arith.addf %7, %12 : vector<512x128xf32>
    %cst_7 = arith.constant 0.693147182 : f32
    %14 = vector.broadcast %cst_7 : f32 to vector<512x128xf32>
    %15 = arith.subf %13, %14 : vector<512x128xf32>
    %16 = arith.truncf %15 : vector<512x128xf32> to vector<512x128xbf16>
    %c0_8 = arith.constant 0 : index
    %c0_9 = arith.constant 0 : index
    %17 = vector.load %arg7[%c0_8, %c0_9] : memref<128x128xbf16, #tpu.memory_space<vmem>>, vector<128x128xbf16>
    %cst_10 = arith.constant dense<0.000000e+00> : vector<512x128xf32>
    %18 = tpu.matmul %16, %17, %cst_10 {dimension_numbers = #tpu.dot_dimension_numbers<[1], [0], [0], [1], [0, 0, 1, 1], [], []>} : vector<512x128xbf16>, vector<128x128xbf16>, vector<512x128xf32> -> vector<512x128xf32>
    %c0_11 = arith.constant 0 : index
    %c0_12 = arith.constant 0 : index
    %19 = vector.load %arg8[%c0_11, %c0_12] : memref<1x128xf32, #tpu.memory_space<vmem>>, vector<1x128xf32>
    %20 = vector.broadcast %19 : vector<1x128xf32> to vector<512x128xf32>
    %21 = arith.addf %18, %20 : vector<512x128xf32>
    %c0_13 = arith.constant 0 : index
    %c0_14 = arith.constant 0 : index
    %22 = vector.load %arg2[%c0_13, %c0_14] : memref<512x1xf32, #tpu.memory_space<vmem>>, vector<512x1xf32>
    %23 = vector.broadcast %22 : vector<512x1xf32> to vector<512x128xf32>
    %24 = arith.mulf %21, %23 : vector<512x128xf32>
    %c0_15 = arith.constant 0 : index
    %c0_16 = arith.constant 0 : index
    %25 = vector.load %arg4[%c0_15, %c0_16] : memref<512x128xbf16, #tpu.memory_space<vmem>>, vector<512x128xbf16>
    %26 = arith.extf %25 : vector<512x128xbf16> to vector<512x128xf32>
    %27 = arith.mulf %26, %24 : vector<512x128xf32>
    %28 = arith.truncf %27 : vector<512x128xf32> to vector<512x128xbf16>
    %c0_17 = arith.constant 0 : index
    %c0_18 = arith.constant 0 : index
    %29 = vector.load %arg9[%c0_17, %c0_18] : memref<512x128xbf16, #tpu.memory_space<vmem>>, vector<512x128xbf16>
    tpu.vector_store %arg9[%c0_17, %c0_18], %28 {strides = array<i32>} : memref<512x128xbf16, #tpu.memory_space<vmem>>, vector<512x128xbf16>,
    %c0_19 = arith.constant 0 : index
    %c0_20 = arith.constant 0 : index
    %30 = vector.load %arg3[%c0_19, %c0_20] : memref<512x128xbf16, #tpu.memory_space<vmem>>, vector<512x128xbf16>
    %31 = arith.extf %30 : vector<512x128xbf16> to vector<512x128xf32>
    %32 = arith.mulf %31, %24 : vector<512x128xf32>
    %33 = arith.truncf %32 : vector<512x128xf32> to vector<512x128xbf16>
    %c0_21 = arith.constant 0 : index
    %c0_22 = arith.constant 0 : index
    %34 = vector.load %arg10[%c0_21, %c0_22] : memref<512x128xbf16, #tpu.memory_space<vmem>>, vector<512x128xbf16>
    tpu.vector_store %arg10[%c0_21, %c0_22], %33 {strides = array<i32>} : memref<512x128xbf16, #tpu.memory_space<vmem>>, vector<512x128xbf16>,
    return
  }
  func.func @transform_0(%arg0: i32) -> (i32, i32) {
    %c0_i32 = arith.constant 0 : i32
    %c0_i32_0 = arith.constant 0 : i32
    return %arg0, %c0_i32 : i32, i32
  }
  func.func @transform_1(%arg0: i32) -> (i32, i32) {
    %c0_i32 = arith.constant 0 : i32
    %c0_i32_0 = arith.constant 0 : i32
    return %arg0, %c0_i32 : i32, i32
  }
  func.func @transform_2(%arg0: i32) -> (i32, i32) {
    %c0_i32 = arith.constant 0 : i32
    %c0_i32_0 = arith.constant 0 : i32
    return %arg0, %c0_i32 : i32, i32
  }
  func.func @transform_3(%arg0: i32) -> (i32, i32) {
    %c0_i32 = arith.constant 0 : i32
    %c0_i32_0 = arith.constant 0 : i32
    return %arg0, %c0_i32 : i32, i32
  }
  func.func @transform_4(%arg0: i32) -> (i32, i32) {
    %c0_i32 = arith.constant 0 : i32
    %c0_i32_0 = arith.constant 0 : i32
    %c0_i32_1 = arith.constant 0 : i32
    return %c0_i32, %c0_i32_0 : i32, i32
  }
  func.func @transform_5(%arg0: i32) -> (i32, i32) {
    %c0_i32 = arith.constant 0 : i32
    %c0_i32_0 = arith.constant 0 : i32
    %c0_i32_1 = arith.constant 0 : i32
    return %c0_i32, %c0_i32_0 : i32, i32
  }
  func.func @transform_6(%arg0: i32) -> (i32, i32) {
    %c0_i32 = arith.constant 0 : i32
    %c0_i32_0 = arith.constant 0 : i32
    %c0_i32_1 = arith.constant 0 : i32
    return %c0_i32, %c0_i32_0 : i32, i32
  }
  func.func @transform_7(%arg0: i32) -> (i32, i32) {
    %c0_i32 = arith.constant 0 : i32
    %c0_i32_0 = arith.constant 0 : i32
    %c0_i32_1 = arith.constant 0 : i32
    return %c0_i32, %c0_i32_0 : i32, i32
  }
  func.func @transform_8(%arg0: i32) -> (i32, i32) {
    %c0_i32 = arith.constant 0 : i32
    %c0_i32_0 = arith.constant 0 : i32
    return %arg0, %c0_i32 : i32, i32
  }
  func.func @transform_9(%arg0: i32) -> (i32, i32) {
    %c0_i32 = arith.constant 0 : i32
    %c0_i32_0 = arith.constant 0 : i32
    return %arg0, %c0_i32 : i32, i32
  }
}

</mosaic_0001>

<llo_original>
// kernel: tpu_custom_call.1
$region0: #{tpu_custom_call.1}
  #allocation0 [shape = 'u32[]', space=smem, size = 0x4, offset = 0x4, fixed_abs, tag = 'smem constant byte address 0x4 - core index']
  #allocation1 [shape = 'u32[144,128]{1,0:T(1,128)}', space=vmem, size = 0x12000, scoped, tag = 'internal scratch']
  %s0 = inlined_call_operand.vmem [shape: bf16[512,128], index: 0, kind: input, shape index: {}]
  %s1 = inlined_call_operand.vmem [shape: f32[512,1], index: 1, kind: input, shape index: {}]
  %s2 = inlined_call_operand.vmem [shape: bf16[512,128], index: 2, kind: input, shape index: {}]
  %s3 = inlined_call_operand.hbm [shape: bf16[512,128], index: 3, kind: input, shape index: {}]
  %s4 = inlined_call_operand.hbm [shape: bf16[128,128], index: 4, kind: input, shape index: {}]
  %s5 = inlined_call_operand.vmem [shape: f32[1,128], index: 5, kind: input, shape index: {}]
  %s6 = inlined_call_operand.hbm [shape: bf16[128,128], index: 6, kind: input, shape index: {}]
  %s7 = inlined_call_operand.vmem [shape: f32[1,128], index: 7, kind: input, shape index: {}]
  %s8 = inlined_call_operand.hbm [shape: bf16[512,128], index: 8, kind: output, shape index: {0}]
  %s9 = inlined_call_operand.hbm [shape: bf16[512,128], index: 9, kind: output, shape index: {1}]
  %10 = xla_tuple %s8, %s9
  %s11 = sld [smem:[#allocation0]]
  $region62: #{tpu_custom_call.1} parent=0
    _
  %s13 = ssub.s32 1, %s11
  %s14 = scalar_select 0, %s13, %s11
  $region1: #{tpu_custom_call.1} parent=0
    #allocation2 [shape = 'u8[131072]{0}', space=vmem, size = 0x20000, scoped, tag = 'input window, operand 3, single buffered']
    #allocation3 [shape = 's32[1]{0}', space=sflag, size = 0x4, scoped, tag = 'scoped memory for tpu_custom_call.1']
    #allocation4 [shape = 's32[1]{0}', space=sflag, size = 0x4, scoped, tag = 'scoped memory for tpu_custom_call.1']
    #allocation5 [shape = 'u8[32768]{0}', space=vmem, size = 0x8000, scoped, tag = 'input window, operand 4, single buffered']
    #allocation6 [shape = 's32[1]{0}', space=sflag, size = 0x4, scoped, tag = 'scoped memory for tpu_custom_call.1']
    #allocation7 [shape = 'u8[32768]{0}', space=vmem, size = 0x8000, scoped, tag = 'input window, operand 6, single buffered']
    #allocation8 [shape = 'u8[131072]{0}', space=vmem, size = 0x20000, scoped, tag = 'output window, operand 0, single buffered']
    #allocation9 [shape = 'u8[131072]{0}', space=vmem, size = 0x20000, scoped, tag = 'output window, operand 1, single buffered']
    #allocation10 [shape = 's32[1]{0}', space=sflag, size = 0x4, scoped, tag = 'scoped memory for tpu_custom_call.1']
    %15 = vsyncpa [#allocation3], 0
    %16 = vsyncpa [#allocation6], 0
    %17 = vsyncpa [#allocation4], 0
    %18 = vsyncpa [#allocation10], 0
    // Predicated region
    $region2: #{tpu_custom_call.1} parent=1 // pred_check
      _
    $region3: #{tpu_custom_call.1} parent=1 // pred_check_branch
      %20 = sbr.rel (0) target = $region5
    $region4: #{tpu_custom_call.1} parent=1 // pred_region
      _
    $region5: #{tpu_custom_call.1} parent=1 // pred_fallthru
      _
    // Predicated region
    $region6: #{tpu_custom_call.1} parent=1 // pred_check
      _
    $region7: #{tpu_custom_call.1} parent=1 // pred_check_branch
      %22 = sbr.rel (0) target = $region9
    $region8: #{tpu_custom_call.1} parent=1 // pred_region
      _
    $region9: #{tpu_custom_call.1} parent=1 // pred_fallthru
      _
    // Predicated region
    $region10: #{tpu_custom_call.1} parent=1 // pred_check
      _
    $region11: #{tpu_custom_call.1} parent=1 // pred_check_branch
      %24 = sbr.rel (0) target = $region13
    $region12: #{tpu_custom_call.1} parent=1 // pred_region
      _
    $region13: #{tpu_custom_call.1} parent=1 // pred_fallthru
      _
    // Predicated region
    $region14: #{tpu_custom_call.1} parent=1 // pred_check
      _
    $region15: #{tpu_custom_call.1} parent=1 // pred_check_branch
      %26 = sbr.rel (0) target = $region17
    $region16: #{tpu_custom_call.1} parent=1 // pred_region
      %s28 = ssub.s32 4096, 4096
      %29 = vsyncadd [#allocation3], %s28
      %s30 = sshll.u32 [#allocation2], 4
      %s31 = int_to_ptr.vmem [resolvable:$true] %s30
      %36 = dma.hbm_to_vmem [thread:$0]  %s3, 4096, %s31, [#allocation3], 64, 64, 4
    $region17: #{tpu_custom_call.1} parent=1 // pred_fallthru
      _
    // Predicated region
    $region18: #{tpu_custom_call.1} parent=1 // pred_check
      _
    $region19: #{tpu_custom_call.1} parent=1 // pred_check_branch
      %38 = sbr.rel (0) target = $region21
    $region20: #{tpu_custom_call.1} parent=1 // pred_region
      %s40 = ssub.s32 1024, 1024
      %41 = vsyncadd [#allocation6], %s40
      %s42 = sshll.u32 [#allocation5], 4
      %s43 = int_to_ptr.vmem [resolvable:$true] %s42
      %48 = dma.hbm_to_vmem [thread:$0]  %s4, 1024, %s43, [#allocation6], 64, 64, 4
    $region21: #{tpu_custom_call.1} parent=1 // pred_fallthru
      _
    // Predicated region
    $region22: #{tpu_custom_call.1} parent=1 // pred_check
      _
    $region23: #{tpu_custom_call.1} parent=1 // pred_check_branch
      %50 = sbr.rel (0) target = $region25
    $region24: #{tpu_custom_call.1} parent=1 // pred_region
      _
    $region25: #{tpu_custom_call.1} parent=1 // pred_fallthru
      _
    // Predicated region
    $region26: #{tpu_custom_call.1} parent=1 // pred_check
      _
    $region27: #{tpu_custom_call.1} parent=1 // pred_check_branch
      %52 = sbr.rel (0) target = $region29
    $region28: #{tpu_custom_call.1} parent=1 // pred_region
      %s54 = ssub.s32 1024, 1024
      %55 = vsyncadd [#allocation6], %s54
      %s56 = sshll.u32 [#allocation7], 4
      %s57 = int_to_ptr.vmem [resolvable:$true] %s56
      %62 = dma.hbm_to_vmem [thread:$0]  %s6, 1024, %s57, [#allocation6], 64, 64, 4
    $region29: #{tpu_custom_call.1} parent=1 // pred_fallthru
      _
    // Predicated region
    $region30: #{tpu_custom_call.1} parent=1 // pred_check
      _
    $region31: #{tpu_custom_call.1} parent=1 // pred_check_branch
      %64 = sbr.rel (0) target = $region33
    $region32: #{tpu_custom_call.1} parent=1 // pred_region
      _
    $region33: #{tpu_custom_call.1} parent=1 // pred_fallthru
      _
    // Predicated region
    $region34: #{tpu_custom_call.1} parent=1 // pred_check
      _
    $region35: #{tpu_custom_call.1} parent=1 // pred_check_branch
      %66 = sbr.rel (0) target = $region37
    $region36: #{tpu_custom_call.1} parent=1 // pred_region
      %67 = dma.done [#allocation3], 4096
    $region37: #{tpu_custom_call.1} parent=1 // pred_fallthru
      _
    // Predicated region
    $region38: #{tpu_custom_call.1} parent=1 // pred_check
      _
    $region39: #{tpu_custom_call.1} parent=1 // pred_check_branch
      %69 = sbr.rel (0) target = $region41
    $region40: #{tpu_custom_call.1} parent=1 // pred_region
      %70 = dma.done [#allocation6], 1024
    $region41: #{tpu_custom_call.1} parent=1 // pred_fallthru
      _
    // Predicated region
    $region42: #{tpu_custom_call.1} parent=1 // pred_check
      _
    $region43: #{tpu_custom_call.1} parent=1 // pred_check_branch
      %72 = sbr.rel (0) target = $region45
    $region44: #{tpu_custom_call.1} parent=1 // pred_region
      %73 = dma.done [#allocation6], 1024
    $region45: #{tpu_custom_call.1} parent=1 // pred_fallthru
      _
    %v75 = vld [vmem:[%s0] sm:$0xf]
    %v76 = vld [vmem:[%s0 + $0x4] sm:$0xf]
    %v77 = vld [vmem:[%s0 + $0x8] sm:$0xf]
    %v78 = vld [vmem:[%s0 + $0xc] sm:$0xf]
    %v79 = vld [vmem:[%s0 + $0x10] sm:$0xf]
    %v80 = vld [vmem:[%s0 + $0x14] sm:$0xf]
    %v81 = vld [vmem:[%s0 + $0x18] sm:$0xf]
    %v82 = vld [vmem:[%s0 + $0x1c] sm:$0xf]
    %v83 = vld [vmem:[%s0 + $0x20] sm:$0xf]
    %v84 = vld [vmem:[%s0 + $0x24] sm:$0xf]
    %v85 = vld [vmem:[%s0 + $0x28] sm:$0xf]
    %v86 = vld [vmem:[%s0 + $0x2c] sm:$0xf]
    %v87 = vld [vmem:[%s0 + $0x30] sm:$0xf]
    %v88 = vld [vmem:[%s0 + $0x34] sm:$0xf]
    %v89 = vld [vmem:[%s0 + $0x38] sm:$0xf]
    %v90 = vld [vmem:[%s0 + $0x3c] sm:$0xf]
    %v91 = vld [vmem:[%s0 + $0x40] sm:$0xf]
    %v92 = vld [vmem:[%s0 + $0x44] sm:$0xf]
    %v93 = vld [vmem:[%s0 + $0x48] sm:$0xf]
    %v94 = vld [vmem:[%s0 + $0x4c] sm:$0xf]
    %v95 = vld [vmem:[%s0 + $0x50] sm:$0xf]
    %v96 = vld [vmem:[%s0 + $0x54] sm:$0xf]
    %v97 = vld [vmem:[%s0 + $0x58] sm:$0xf]
    %v98 = vld [vmem:[%s0 + $0x5c] sm:$0xf]
    %v99 = vld [vmem:[%s0 + $0x60] sm:$0xf]
    %v100 = vld [vmem:[%s0 + $0x64] sm:$0xf]
    %v101 = vld [vmem:[%s0 + $0x68] sm:$0xf]
    %v102 = vld [vmem:[%s0 + $0x6c] sm:$0xf]
    %v103 = vld [vmem:[%s0 + $0x70] sm:$0xf]
    %v104 = vld [vmem:[%s0 + $0x74] sm:$0xf]
    %v105 = vld [vmem:[%s0 + $0x78] sm:$0xf]
    %v106 = vld [vmem:[%s0 + $0x7c] sm:$0xf]
    %v107 = vld [vmem:[%s0 + $0x80] sm:$0xf]
    %v108 = vld [vmem:[%s0 + $0x84] sm:$0xf]
    %v109 = vld [vmem:[%s0 + $0x88] sm:$0xf]
    %v110 = vld [vmem:[%s0 + $0x8c] sm:$0xf]
    %v111 = vld [vmem:[%s0 + $0x90] sm:$0xf]
    %v112 = vld [vmem:[%s0 + $0x94] sm:$0xf]
    %v113 = vld [vmem:[%s0 + $0x98] sm:$0xf]
    %v114 = vld [vmem:[%s0 + $0x9c] sm:$0xf]
    %v115 = vld [vmem:[%s0 + $0xa0] sm:$0xf]
    %v116 = vld [vmem:[%s0 + $0xa4] sm:$0xf]
    %v117 = vld [vmem:[%s0 + $0xa8] sm:$0xf]
    %v118 = vld [vmem:[%s0 + $0xac] sm:$0xf]
    %v119 = vld [vmem:[%s0 + $0xb0] sm:$0xf]
    %v120 = vld [vmem:[%s0 + $0xb4] sm:$0xf]
    %v121 = vld [vmem:[%s0 + $0xb8] sm:$0xf]
    %v122 = vld [vmem:[%s0 + $0xbc] sm:$0xf]
    %v123 = vld [vmem:[%s0 + $0xc0] sm:$0xf]
    %v124 = vld [vmem:[%s0 + $0xc4] sm:$0xf]
    %v125 = vld [vmem:[%s0 + $0xc8] sm:$0xf]
    %v126 = vld [vmem:[%s0 + $0xcc] sm:$0xf]
    %v127 = vld [vmem:[%s0 + $0xd0] sm:$0xf]
    %v128 = vld [vmem:[%s0 + $0xd4] sm:$0xf]
    %v129 = vld [vmem:[%s0 + $0xd8] sm:$0xf]
    %v130 = vld [vmem:[%s0 + $0xdc] sm:$0xf]
    %v131 = vld [vmem:[%s0 + $0xe0] sm:$0xf]
    %v132 = vld [vmem:[%s0 + $0xe4] sm:$0xf]
    %v133 = vld [vmem:[%s0 + $0xe8] sm:$0xf]
    %v134 = vld [vmem:[%s0 + $0xec] sm:$0xf]
    %v135 = vld [vmem:[%s0 + $0xf0] sm:$0xf]
    %v136 = vld [vmem:[%s0 + $0xf4] sm:$0xf]
    %v137 = vld [vmem:[%s0 + $0xf8] sm:$0xf]
    %v138 = vld [vmem:[%s0 + $0xfc] sm:$0xf]
    %v139 = vld [vmem:[#allocation5] sm:$0xf]
    %v140 = vld [vmem:[#allocation5 + $0x4] sm:$0xf]
    %v141 = vld [vmem:[#allocation5 + $0x8] sm:$0xf]
    %v142 = vld [vmem:[#allocation5 + $0xc] sm:$0xf]
    %v143 = vld [vmem:[#allocation5 + $0x10] sm:$0xf]
    %v144 = vld [vmem:[#allocation5 + $0x14] sm:$0xf]
    %v145 = vld [vmem:[#allocation5 + $0x18] sm:$0xf]
    %v146 = vld [vmem:[#allocation5 + $0x1c] sm:$0xf]
    %v147 = vld [vmem:[#allocation5 + $0x20] sm:$0xf]
    %v148 = vld [vmem:[#allocation5 + $0x24] sm:$0xf]
    %v149 = vld [vmem:[#allocation5 + $0x28] sm:$0xf]
    %v150 = vld [vmem:[#allocation5 + $0x2c] sm:$0xf]
    %v151 = vld [vmem:[#allocation5 + $0x30] sm:$0xf]
    %v152 = vld [vmem:[#allocation5 + $0x34] sm:$0xf]
    %v153 = vld [vmem:[#allocation5 + $0x38] sm:$0xf]
    %v154 = vld [vmem:[#allocation5 + $0x3c] sm:$0xf]
    %v155 = vld [vmem:[%s5] sm:$0x1]
    %v157 = vlaneseq
    %v158 = vshrl.u32 %v157, 7
    %v159 = vsub.s32 0, %v158
    %v160 = vrot.slane %v155, %v159
    %v226 = vunpack.c.l.b16 %v75
    %v227 = vunpack.c.l.b16 %v76
    %v228 = vunpack.c.l.b16 %v77
    %v229 = vunpack.c.l.b16 %v78
    %v230 = vunpack.c.l.b16 %v79
    %v231 = vunpack.c.l.b16 %v80
    %v232 = vunpack.c.l.b16 %v81
    %v233 = vunpack.c.l.b16 %v82
    %v234 = vunpack.c.l.b16 %v83
    %v235 = vunpack.c.l.b16 %v84
    %v236 = vunpack.c.l.b16 %v85
    %v237 = vunpack.c.l.b16 %v86
    %v238 = vunpack.c.l.b16 %v87
    %v239 = vunpack.c.l.b16 %v88
    %v240 = vunpack.c.l.b16 %v89
    %v241 = vunpack.c.l.b16 %v90
    %v242 = vunpack.c.l.b16 %v91
    %v243 = vunpack.c.l.b16 %v92
    %v244 = vunpack.c.l.b16 %v93
    %v245 = vunpack.c.l.b16 %v94
    %v246 = vunpack.c.l.b16 %v95
    %v247 = vunpack.c.l.b16 %v96
    %v248 = vunpack.c.l.b16 %v97
    %v249 = vunpack.c.l.b16 %v98
    %v250 = vunpack.c.l.b16 %v99
    %v251 = vunpack.c.l.b16 %v100
    %v252 = vunpack.c.l.b16 %v101
    %v253 = vunpack.c.l.b16 %v102
    %v254 = vunpack.c.l.b16 %v103
    %v255 = vunpack.c.l.b16 %v104
    %v256 = vunpack.c.l.b16 %v105
    %v257 = vunpack.c.l.b16 %v106
    %v258 = vunpack.c.l.b16 %v107
    %v259 = vunpack.c.l.b16 %v108
    %v260 = vunpack.c.l.b16 %v109
    %v261 = vunpack.c.l.b16 %v110
    %v262 = vunpack.c.l.b16 %v111
    %v263 = vunpack.c.l.b16 %v112
    %v264 = vunpack.c.l.b16 %v113
    %v265 = vunpack.c.l.b16 %v114
    %v266 = vunpack.c.l.b16 %v115
    %v267 = vunpack.c.l.b16 %v116
    %v268 = vunpack.c.l.b16 %v117
    %v269 = vunpack.c.l.b16 %v118
    %v270 = vunpack.c.l.b16 %v119
    %v271 = vunpack.c.l.b16 %v120
    %v272 = vunpack.c.l.b16 %v121
    %v273 = vunpack.c.l.b16 %v122
    %v274 = vunpack.c.l.b16 %v123
    %v275 = vunpack.c.l.b16 %v124
    %v276 = vunpack.c.l.b16 %v125
    %v277 = vunpack.c.l.b16 %v126
    %v278 = vunpack.c.l.b16 %v127
    %v279 = vunpack.c.l.b16 %v128
    %v280 = vunpack.c.l.b16 %v129
    %v281 = vunpack.c.l.b16 %v130
    %v282 = vunpack.c.l.b16 %v131
    %v283 = vunpack.c.l.b16 %v132
    %v284 = vunpack.c.l.b16 %v133
    %v285 = vunpack.c.l.b16 %v134
    %v286 = vunpack.c.l.b16 %v135
    %v287 = vunpack.c.l.b16 %v136
    %v288 = vunpack.c.l.b16 %v137
    %v289 = vunpack.c.l.b16 %v138
    %v290 = vpack.c.b16 %v227, %v226
    %v291 = vpack.c.b16 %v229, %v228
    %v292 = vpack.c.b16 %v231, %v230
    %v293 = vpack.c.b16 %v233, %v232
    %v294 = vpack.c.b16 %v235, %v234
    %v295 = vpack.c.b16 %v237, %v236
    %v296 = vpack.c.b16 %v239, %v238
    %v297 = vpack.c.b16 %v241, %v240
    %v298 = vpack.c.b16 %v243, %v242
    %v299 = vpack.c.b16 %v245, %v244
    %v300 = vpack.c.b16 %v247, %v246
    %v301 = vpack.c.b16 %v249, %v248
    %v302 = vpack.c.b16 %v251, %v250
    %v303 = vpack.c.b16 %v253, %v252
    %v304 = vpack.c.b16 %v255, %v254
    %v305 = vpack.c.b16 %v257, %v256
    %v306 = vpack.c.b16 %v259, %v258
    %v307 = vpack.c.b16 %v261, %v260
    %v308 = vpack.c.b16 %v263, %v262
    %v309 = vpack.c.b16 %v265, %v264
    %v310 = vpack.c.b16 %v267, %v266
    %v311 = vpack.c.b16 %v269, %v268
    %v312 = vpack.c.b16 %v271, %v270
    %v313 = vpack.c.b16 %v273, %v272
    %v314 = vpack.c.b16 %v275, %v274
    %v315 = vpack.c.b16 %v277, %v276
    %v316 = vpack.c.b16 %v279, %v278
    %v317 = vpack.c.b16 %v281, %v280
    %v318 = vpack.c.b16 %v283, %v282
    %v319 = vpack.c.b16 %v285, %v284
    %v320 = vpack.c.b16 %v287, %v286
    %v321 = vpack.c.b16 %v289, %v288
    %v370 = vunpack.c.l.b16 %v139
    %v371 = vunpack.c.l.b16 %v140
    %v372 = vunpack.c.l.b16 %v141
    %v373 = vunpack.c.l.b16 %v142
    %v374 = vunpack.c.l.b16 %v143
    %v375 = vunpack.c.l.b16 %v144
    %v376 = vunpack.c.l.b16 %v145
    %v377 = vunpack.c.l.b16 %v146
    %v378 = vunpack.c.l.b16 %v147
    %v379 = vunpack.c.l.b16 %v148
    %v380 = vunpack.c.l.b16 %v149
    %v381 = vunpack.c.l.b16 %v150
    %v382 = vunpack.c.l.b16 %v151
    %v383 = vunpack.c.l.b16 %v152
    %v384 = vunpack.c.l.b16 %v153
    %v385 = vunpack.c.l.b16 %v154
    %v386 = vpack.c.b16 %v371, %v370
    %v387 = vpack.c.b16 %v373, %v372
    %v388 = vpack.c.b16 %v375, %v374
    %v389 = vpack.c.b16 %v377, %v376
    %v390 = vpack.c.b16 %v379, %v378
    %v391 = vpack.c.b16 %v381, %v380
    %v392 = vpack.c.b16 %v383, %v382
    %v393 = vpack.c.b16 %v385, %v384
    %402 = vmatprep.subr.bf16.mxu0 0
    %403 = vmatpush1.bf16.msra.mxu0 %v386
    %404 = vmatprep.subr.bf16.mxu0 0
    %405 = vmatpush1.bf16.msra.mxu0 %v387
    %406 = vmatprep.subr.bf16.mxu0 0
    %407 = vmatpush1.bf16.msra.mxu0 %v388
    %408 = vmatprep.subr.bf16.mxu0 0
    %409 = vmatpush1.bf16.msra.mxu0 %v389
    %410 = vmatprep.subr.bf16.mxu0 0
    %411 = vmatpush1.bf16.msra.mxu0 %v390
    %412 = vmatprep.subr.bf16.mxu0 0
    %413 = vmatpush1.bf16.msra.mxu0 %v391
    %414 = vmatprep.subr.bf16.mxu0 0
    %415 = vmatpush1.bf16.msra.mxu0 %v392
    %416 = vmatprep.subr.bf16.mxu0 0
    %417 = vmatpush1.bf16.msra.mxu0 %v393
    %418 = vmatprep.subr.bf16.mxu0 0
    %419 = vmatpush1.bf16.msra.mxu0 0
    %420 = vmatprep.subr.bf16.mxu0 0
    %421 = vmatpush1.bf16.msra.mxu0 0
    %422 = vmatprep.subr.bf16.mxu0 0
    %423 = vmatpush1.bf16.msra.mxu0 0
    %424 = vmatprep.subr.bf16.mxu0 0
    %425 = vmatpush1.bf16.msra.mxu0 0
    %426 = vmatprep.subr.bf16.mxu0 0
    %427 = vmatpush1.bf16.msra.mxu0 0
    %428 = vmatprep.subr.bf16.mxu0 0
    %429 = vmatpush1.bf16.msra.mxu0 0
    %430 = vmatprep.subr.bf16.mxu0 0
    %431 = vmatpush1.bf16.msra.mxu0 0
    %432 = vmatprep.subr.bf16.mxu0 0
    %433 = vmatpush1.bf16.msra.mxu0 0
    %434 = vmatprep.mubr.bf16.mxu0 0
    %435 = vmatmul.mubr.bf16.gmra.mrb[0].mxu0 %v290
    %v436 = vpop.f32.mrb[0].mxu0
    %v437 = vadd.f32 %v160, %v436
    %v438 = vpop.f32.mrb[0].mxu0
    %v439 = vpop.f32.mrb[0].mxu0
    %v440 = vadd.f32 %v160, %v439
    %v441 = vpop.f32.mrb[0].mxu0
    %442 = vmatprep.mubr.bf16.mxu0 0
    %443 = vmatmul.mubr.bf16.gmra.mrb[0].mxu0 %v291
    %v444 = vpop.f32.mrb[0].mxu0
    %v445 = vadd.f32 %v160, %v444
    %v446 = vpop.f32.mrb[0].mxu0
    %v447 = vpop.f32.mrb[0].mxu0
    %v448 = vadd.f32 %v160, %v447
    %v449 = vpop.f32.mrb[0].mxu0
    %450 = vmatprep.mubr.bf16.mxu0 0
    %451 = vmatmul.mubr.bf16.gmra.mrb[0].mxu0 %v292
    %v452 = vpop.f32.mrb[0].mxu0
    %v453 = vadd.f32 %v160, %v452
    %v454 = vpop.f32.mrb[0].mxu0
    %v455 = vpop.f32.mrb[0].mxu0
    %v456 = vadd.f32 %v160, %v455
    %v457 = vpop.f32.mrb[0].mxu0
    %458 = vmatprep.mubr.bf16.mxu0 0
    %459 = vmatmul.mubr.bf16.gmra.mrb[0].mxu0 %v293
    %v460 = vpop.f32.mrb[0].mxu0
    %v461 = vadd.f32 %v160, %v460
    %v462 = vpop.f32.mrb[0].mxu0
    %v463 = vpop.f32.mrb[0].mxu0
    %v464 = vadd.f32 %v160, %v463
    %v465 = vpop.f32.mrb[0].mxu0
    %466 = vmatprep.mubr.bf16.mxu0 0
    %467 = vmatmul.mubr.bf16.gmra.mrb[0].mxu0 %v294
    %v468 = vpop.f32.mrb[0].mxu0
    %v469 = vadd.f32 %v160, %v468
    %v470 = vpop.f32.mrb[0].mxu0
    %v471 = vpop.f32.mrb[0].mxu0
    %v472 = vadd.f32 %v160, %v471
    %v473 = vpop.f32.mrb[0].mxu0
    %474 = vmatprep.mubr.bf16.mxu0 0
    %475 = vmatmul.mubr.bf16.gmra.mrb[0].mxu0 %v295
    %v476 = vpop.f32.mrb[0].mxu0
    %v477 = vadd.f32 %v160, %v476
    %v478 = vpop.f32.mrb[0].mxu0
    %v479 = vpop.f32.mrb[0].mxu0
    %v480 = vadd.f32 %v160, %v479
    %v481 = vpop.f32.mrb[0].mxu0
    %482 = vmatprep.mubr.bf16.mxu0 0
    %483 = vmatmul.mubr.bf16.gmra.mrb[0].mxu0 %v296
    %v484 = vpop.f32.mrb[0].mxu0
    %v485 = vadd.f32 %v160, %v484
    %v486 = vpop.f32.mrb[0].mxu0
    %v487 = vpop.f32.mrb[0].mxu0
    %v488 = vadd.f32 %v160, %v487
    %v489 = vpop.f32.mrb[0].mxu0
    %490 = vmatprep.mubr.bf16.mxu0 0
    %491 = vmatmul.mubr.bf16.gmra.mrb[0].mxu0 %v297
    %v492 = vpop.f32.mrb[0].mxu0
    %v493 = vadd.f32 %v160, %v492
    %v494 = vpop.f32.mrb[0].mxu0
    %v495 = vpop.f32.mrb[0].mxu0
    %v496 = vadd.f32 %v160, %v495
    %v497 = vpop.f32.mrb[0].mxu0
    %498 = vmatprep.mubr.bf16.mxu0 0
    %499 = vmatmul.mubr.bf16.gmra.mrb[0].mxu0 %v298
    %v500 = vpop.f32.mrb[0].mxu0
    %v501 = vadd.f32 %v160, %v500
    %v502 = vpop.f32.mrb[0].mxu0
    %v503 = vpop.f32.mrb[0].mxu0
    %v504 = vadd.f32 %v160, %v503
    %v505 = vpop.f32.mrb[0].mxu0
    %506 = vmatprep.mubr.bf16.mxu0 0
    %507 = vmatmul.mubr.bf16.gmra.mrb[0].mxu0 %v299
    %v508 = vpop.f32.mrb[0].mxu0
    %v509 = vadd.f32 %v160, %v508
    %v510 = vpop.f32.mrb[0].mxu0
    %v511 = vpop.f32.mrb[0].mxu0
    %v512 = vadd.f32 %v160, %v511
    %v513 = vpop.f32.mrb[0].mxu0
    %514 = vmatprep.mubr.bf16.mxu0 0
    %515 = vmatmul.mubr.bf16.gmra.mrb[0].mxu0 %v300
    %v516 = vpop.f32.mrb[0].mxu0
    %v517 = vadd.f32 %v160, %v516
    %v518 = vpop.f32.mrb[0].mxu0
    %v519 = vpop.f32.mrb[0].mxu0
    %v520 = vadd.f32 %v160, %v519
    %v521 = vpop.f32.mrb[0].mxu0
    %522 = vmatprep.mubr.bf16.mxu0 0
    %523 = vmatmul.mubr.bf16.gmra.mrb[0].mxu0 %v301
    %v524 = vpop.f32.mrb[0].mxu0
    %v525 = vadd.f32 %v160, %v524
    %v526 = vpop.f32.mrb[0].mxu0
    %v527 = vpop.f32.mrb[0].mxu0
    %v528 = vadd.f32 %v160, %v527
    %v529 = vpop.f32.mrb[0].mxu0
    %530 = vmatprep.mubr.bf16.mxu0 0
    %531 = vmatmul.mubr.bf16.gmra.mrb[0].mxu0 %v302
    %v532 = vpop.f32.mrb[0].mxu0
    %v533 = vadd.f32 %v160, %v532
    %v534 = vpop.f32.mrb[0].mxu0
    %v535 = vpop.f32.mrb[0].mxu0
    %v536 = vadd.f32 %v160, %v535
    %v537 = vpop.f32.mrb[0].mxu0
    %538 = vmatprep.mubr.bf16.mxu0 0
    %539 = vmatmul.mubr.bf16.gmra.mrb[0].mxu0 %v303
    %v540 = vpop.f32.mrb[0].mxu0
    %v541 = vadd.f32 %v160, %v540
    %v542 = vpop.f32.mrb[0].mxu0
    %v543 = vpop.f32.mrb[0].mxu0
    %v544 = vadd.f32 %v160, %v543
    %v545 = vpop.f32.mrb[0].mxu0
    %546 = vmatprep.mubr.bf16.mxu0 0
    %547 = vmatmul.mubr.bf16.gmra.mrb[0].mxu0 %v304
    %v548 = vpop.f32.mrb[0].mxu0
    %v549 = vadd.f32 %v160, %v548
    %v550 = vpop.f32.mrb[0].mxu0
    %v551 = vpop.f32.mrb[0].mxu0
    %v552 = vadd.f32 %v160, %v551
    %v553 = vpop.f32.mrb[0].mxu0
    %554 = vmatprep.mubr.bf16.mxu0 0
    %555 = vmatmul.mubr.bf16.gmra.mrb[0].mxu0 %v305
    %v556 = vpop.f32.mrb[0].mxu0
    %v557 = vadd.f32 %v160, %v556
    %v558 = vpop.f32.mrb[0].mxu0
    %v559 = vpop.f32.mrb[0].mxu0
    %v560 = vadd.f32 %v160, %v559
    %v561 = vpop.f32.mrb[0].mxu0
    %562 = vmatprep.mubr.bf16.mxu0 0
    %563 = vmatmul.mubr.bf16.gmra.mrb[0].mxu0 %v306
    %v564 = vpop.f32.mrb[0].mxu0
    %v565 = vadd.f32 %v160, %v564
    %v566 = vpop.f32.mrb[0].mxu0
    %v567 = vpop.f32.mrb[0].mxu0
    %v568 = vadd.f32 %v160, %v567
    %v569 = vpop.f32.mrb[0].mxu0
    %570 = vmatprep.mubr.bf16.mxu0 0
    %571 = vmatmul.mubr.bf16.gmra.mrb[0].mxu0 %v307
    %v572 = vpop.f32.mrb[0].mxu0
    %v573 = vadd.f32 %v160, %v572
    %v574 = vpop.f32.mrb[0].mxu0
    %v575 = vpop.f32.mrb[0].mxu0
    %v576 = vadd.f32 %v160, %v575
    %v577 = vpop.f32.mrb[0].mxu0
    %578 = vmatprep.mubr.bf16.mxu0 0
    %579 = vmatmul.mubr.bf16.gmra.mrb[0].mxu0 %v308
    %v580 = vpop.f32.mrb[0].mxu0
    %v581 = vadd.f32 %v160, %v580
    %v582 = vpop.f32.mrb[0].mxu0
    %v583 = vpop.f32.mrb[0].mxu0
    %v584 = vadd.f32 %v160, %v583
    %v585 = vpop.f32.mrb[0].mxu0
    %586 = vmatprep.mubr.bf16.mxu0 0
    %587 = vmatmul.mubr.bf16.gmra.mrb[0].mxu0 %v309
    %v588 = vpop.f32.mrb[0].mxu0
    %v589 = vadd.f32 %v160, %v588
    %v590 = vpop.f32.mrb[0].mxu0
    %v591 = vpop.f32.mrb[0].mxu0
    %v592 = vadd.f32 %v160, %v591
    %v593 = vpop.f32.mrb[0].mxu0
    %594 = vmatprep.mubr.bf16.mxu0 0
    %595 = vmatmul.mubr.bf16.gmra.mrb[0].mxu0 %v310
    %v596 = vpop.f32.mrb[0].mxu0
    %v597 = vadd.f32 %v160, %v596
    %v598 = vpop.f32.mrb[0].mxu0
    %v599 = vpop.f32.mrb[0].mxu0
    %v600 = vadd.f32 %v160, %v599
    %v601 = vpop.f32.mrb[0].mxu0
    %602 = vmatprep.mubr.bf16.mxu0 0
    %603 = vmatmul.mubr.bf16.gmra.mrb[0].mxu0 %v311
    %v604 = vpop.f32.mrb[0].mxu0
    %v605 = vadd.f32 %v160, %v604
    %v606 = vpop.f32.mrb[0].mxu0
    %v607 = vpop.f32.mrb[0].mxu0
    %v608 = vadd.f32 %v160, %v607
    %v609 = vpop.f32.mrb[0].mxu0
    %610 = vmatprep.mubr.bf16.mxu0 0
    %611 = vmatmul.mubr.bf16.gmra.mrb[0].mxu0 %v312
    %v612 = vpop.f32.mrb[0].mxu0
    %v613 = vadd.f32 %v160, %v612
    %v614 = vpop.f32.mrb[0].mxu0
    %v615 = vpop.f32.mrb[0].mxu0
    %v616 = vadd.f32 %v160, %v615
    %v617 = vpop.f32.mrb[0].mxu0
    %618 = vmatprep.mubr.bf16.mxu0 0
    %619 = vmatmul.mubr.bf16.gmra.mrb[0].mxu0 %v313
    %v620 = vpop.f32.mrb[0].mxu0
    %v621 = vadd.f32 %v160, %v620
    %v622 = vpop.f32.mrb[0].mxu0
    %v623 = vpop.f32.mrb[0].mxu0
    %v624 = vadd.f32 %v160, %v623
    %v625 = vpop.f32.mrb[0].mxu0
    %626 = vmatprep.mubr.bf16.mxu0 0
    %627 = vmatmul.mubr.bf16.gmra.mrb[0].mxu0 %v314
    %v628 = vpop.f32.mrb[0].mxu0
    %v629 = vadd.f32 %v160, %v628
    %v630 = vpop.f32.mrb[0].mxu0
    %v631 = vpop.f32.mrb[0].mxu0
    %v632 = vadd.f32 %v160, %v631
    %v633 = vpop.f32.mrb[0].mxu0
    %634 = vmatprep.mubr.bf16.mxu0 0
    %635 = vmatmul.mubr.bf16.gmra.mrb[0].mxu0 %v315
    %v636 = vpop.f32.mrb[0].mxu0
    %v637 = vadd.f32 %v160, %v636
    %v638 = vpop.f32.mrb[0].mxu0
    %v639 = vpop.f32.mrb[0].mxu0
    %v640 = vadd.f32 %v160, %v639
    %v641 = vpop.f32.mrb[0].mxu0
    %642 = vmatprep.mubr.bf16.mxu0 0
    %643 = vmatmul.mubr.bf16.gmra.mrb[0].mxu0 %v316
    %v644 = vpop.f32.mrb[0].mxu0
    %v645 = vadd.f32 %v160, %v644
    %v646 = vpop.f32.mrb[0].mxu0
    %v647 = vpop.f32.mrb[0].mxu0
    %v648 = vadd.f32 %v160, %v647
    %v649 = vpop.f32.mrb[0].mxu0
    %650 = vmatprep.mubr.bf16.mxu0 0
    %651 = vmatmul.mubr.bf16.gmra.mrb[0].mxu0 %v317
    %v652 = vpop.f32.mrb[0].mxu0
    %v653 = vadd.f32 %v160, %v652
    %v654 = vpop.f32.mrb[0].mxu0
    %v655 = vpop.f32.mrb[0].mxu0
    %v656 = vadd.f32 %v160, %v655
    %v657 = vpop.f32.mrb[0].mxu0
    %658 = vmatprep.mubr.bf16.mxu0 0
    %659 = vmatmul.mubr.bf16.gmra.mrb[0].mxu0 %v318
    %v660 = vpop.f32.mrb[0].mxu0
    %v661 = vadd.f32 %v160, %v660
    %v662 = vpop.f32.mrb[0].mxu0
    %v663 = vpop.f32.mrb[0].mxu0
    %v664 = vadd.f32 %v160, %v663
    %v665 = vpop.f32.mrb[0].mxu0
    %666 = vmatprep.mubr.bf16.mxu0 0
    %667 = vmatmul.mubr.bf16.gmra.mrb[0].mxu0 %v319
    %v668 = vpop.f32.mrb[0].mxu0
    %v669 = vadd.f32 %v160, %v668
    %v670 = vpop.f32.mrb[0].mxu0
    %v671 = vpop.f32.mrb[0].mxu0
    %v672 = vadd.f32 %v160, %v671
    %v673 = vpop.f32.mrb[0].mxu0
    %674 = vmatprep.mubr.bf16.mxu0 0
    %675 = vmatmul.mubr.bf16.gmra.mrb[0].mxu0 %v320
    %v676 = vpop.f32.mrb[0].mxu0
    %v677 = vadd.f32 %v160, %v676
    %v678 = vpop.f32.mrb[0].mxu0
    %v679 = vpop.f32.mrb[0].mxu0
    %v680 = vadd.f32 %v160, %v679
    %v681 = vpop.f32.mrb[0].mxu0
    %682 = vmatprep.mubr.bf16.mxu0 0
    %683 = vmatmul.mubr.bf16.gmra.mrb[0].mxu0 %v321
    %v684 = vpop.f32.mrb[0].mxu0
    %v685 = vadd.f32 %v160, %v684
    %v686 = vpop.f32.mrb[0].mxu0
    %v687 = vpop.f32.mrb[0].mxu0
    %v688 = vadd.f32 %v160, %v687
    %v689 = vpop.f32.mrb[0].mxu0
    %690 = vdwg.mxu0
    %v691 = vmax.f32 %v437, 0.0
    %v692 = vmax.f32 %v440, 0.0
    %v693 = vmax.f32 %v445, 0.0
    %v694 = vmax.f32 %v448, 0.0
    %v695 = vmax.f32 %v453, 0.0
    %v696 = vmax.f32 %v456, 0.0
    %v697 = vmax.f32 %v461, 0.0
    %v698 = vmax.f32 %v464, 0.0
    %v699 = vmax.f32 %v469, 0.0
    %v700 = vmax.f32 %v472, 0.0
    %v701 = vmax.f32 %v477, 0.0
    %v702 = vmax.f32 %v480, 0.0
    %v703 = vmax.f32 %v485, 0.0
    %v704 = vmax.f32 %v488, 0.0
    %v705 = vmax.f32 %v493, 0.0
    %v706 = vmax.f32 %v496, 0.0
    %v707 = vmax.f32 %v501, 0.0
    %v708 = vmax.f32 %v504, 0.0
    %v709 = vmax.f32 %v509, 0.0
    %v710 = vmax.f32 %v512, 0.0
    %v711 = vmax.f32 %v517, 0.0
    %v712 = vmax.f32 %v520, 0.0
    %v713 = vmax.f32 %v525, 0.0
    %v714 = vmax.f32 %v528, 0.0
    %v715 = vmax.f32 %v533, 0.0
    %v716 = vmax.f32 %v536, 0.0
    %v717 = vmax.f32 %v541, 0.0
    %v718 = vmax.f32 %v544, 0.0
    %v719 = vmax.f32 %v549, 0.0
    %v720 = vmax.f32 %v552, 0.0
    %v721 = vmax.f32 %v557, 0.0
    %v722 = vmax.f32 %v560, 0.0
    %v723 = vmax.f32 %v565, 0.0
    %v724 = vmax.f32 %v568, 0.0
    %v725 = vmax.f32 %v573, 0.0
    %v726 = vmax.f32 %v576, 0.0
    %v727 = vmax.f32 %v581, 0.0
    %v728 = vmax.f32 %v584, 0.0
    %v729 = vmax.f32 %v589, 0.0
    %v730 = vmax.f32 %v592, 0.0
    %v731 = vmax.f32 %v597, 0.0
    %v732 = vmax.f32 %v600, 0.0
    %v733 = vmax.f32 %v605, 0.0
    %v734 = vmax.f32 %v608, 0.0
    %v735 = vmax.f32 %v613, 0.0
    %v736 = vmax.f32 %v616, 0.0
    %v737 = vmax.f32 %v621, 0.0
    %v738 = vmax.f32 %v624, 0.0
    %v739 = vmax.f32 %v629, 0.0
    %v740 = vmax.f32 %v632, 0.0
    %v741 = vmax.f32 %v637, 0.0
    %v742 = vmax.f32 %v640, 0.0
    %v743 = vmax.f32 %v645, 0.0
    %v744 = vmax.f32 %v648, 0.0
    %v745 = vmax.f32 %v653, 0.0
    %v746 = vmax.f32 %v656, 0.0
    %v747 = vmax.f32 %v661, 0.0
    %v748 = vmax.f32 %v664, 0.0
    %v749 = vmax.f32 %v669, 0.0
    %v750 = vmax.f32 %v672, 0.0
    %v751 = vmax.f32 %v677, 0.0
    %v752 = vmax.f32 %v680, 0.0
    %v753 = vmax.f32 %v685, 0.0
    %v754 = vmax.f32 %v688, 0.0
    %v755 = vand.u32 2147483647, %v437
    %v756 = vand.u32 2147483647, %v440
    %v757 = vand.u32 2147483647, %v445
    %v758 = vand.u32 2147483647, %v448
    %v759 = vand.u32 2147483647, %v453
    %v760 = vand.u32 2147483647, %v456
    %v761 = vand.u32 2147483647, %v461
    %v762 = vand.u32 2147483647, %v464
    %v763 = vand.u32 2147483647, %v469
    %v764 = vand.u32 2147483647, %v472
    %v765 = vand.u32 2147483647, %v477
    %v766 = vand.u32 2147483647, %v480
    %v767 = vand.u32 2147483647, %v485
    %v768 = vand.u32 2147483647, %v488
    %v769 = vand.u32 2147483647, %v493
    %v770 = vand.u32 2147483647, %v496
    %v771 = vand.u32 2147483647, %v501
    %v772 = vand.u32 2147483647, %v504
    %v773 = vand.u32 2147483647, %v509
    %v774 = vand.u32 2147483647, %v512
    %v775 = vand.u32 2147483647, %v517
    %v776 = vand.u32 2147483647, %v520
    %v777 = vand.u32 2147483647, %v525
    %v778 = vand.u32 2147483647, %v528
    %v779 = vand.u32 2147483647, %v533
    %v780 = vand.u32 2147483647, %v536
    %v781 = vand.u32 2147483647, %v541
    %v782 = vand.u32 2147483647, %v544
    %v783 = vand.u32 2147483647, %v549
    %v784 = vand.u32 2147483647, %v552
    %v785 = vand.u32 2147483647, %v557
    %v786 = vand.u32 2147483647, %v560
    %v787 = vand.u32 2147483647, %v565
    %v788 = vand.u32 2147483647, %v568
    %v789 = vand.u32 2147483647, %v573
    %v790 = vand.u32 2147483647, %v576
    %v791 = vand.u32 2147483647, %v581
    %v792 = vand.u32 2147483647, %v584
    %v793 = vand.u32 2147483647, %v589
    %v794 = vand.u32 2147483647, %v592
    %v795 = vand.u32 2147483647, %v597
    %v796 = vand.u32 2147483647, %v600
    %v797 = vand.u32 2147483647, %v605
    %v798 = vand.u32 2147483647, %v608
    %v799 = vand.u32 2147483647, %v613
    %v800 = vand.u32 2147483647, %v616
    %v801 = vand.u32 2147483647, %v621
    %v802 = vand.u32 2147483647, %v624
    %v803 = vand.u32 2147483647, %v629
    %v804 = vand.u32 2147483647, %v632
    %v805 = vand.u32 2147483647, %v637
    %v806 = vand.u32 2147483647, %v640
    %v807 = vand.u32 2147483647, %v645
    %v808 = vand.u32 2147483647, %v648
    %v809 = vand.u32 2147483647, %v653
    %v810 = vand.u32 2147483647, %v656
    %v811 = vand.u32 2147483647, %v661
    %v812 = vand.u32 2147483647, %v664
    %v813 = vand.u32 2147483647, %v669
    %v814 = vand.u32 2147483647, %v672
    %v815 = vand.u32 2147483647, %v677
    %v816 = vand.u32 2147483647, %v680
    %v817 = vand.u32 2147483647, %v685
    %v818 = vand.u32 2147483647, %v688
    %v819 = vsub.f32 0.0, %v755
    %v820 = vsub.f32 0.0, %v756
    %v821 = vsub.f32 0.0, %v757
    %v822 = vsub.f32 0.0, %v758
    %v823 = vsub.f32 0.0, %v759
    %v824 = vsub.f32 0.0, %v760
    %v825 = vsub.f32 0.0, %v761
    %v826 = vsub.f32 0.0, %v762
    %v827 = vsub.f32 0.0, %v763
    %v828 = vsub.f32 0.0, %v764
    %v829 = vsub.f32 0.0, %v765
    %v830 = vsub.f32 0.0, %v766
    %v831 = vsub.f32 0.0, %v767
    %v832 = vsub.f32 0.0, %v768
    %v833 = vsub.f32 0.0, %v769
    %v834 = vsub.f32 0.0, %v770
    %v835 = vsub.f32 0.0, %v771
    %v836 = vsub.f32 0.0, %v772
    %v837 = vsub.f32 0.0, %v773
    %v838 = vsub.f32 0.0, %v774
    %v839 = vsub.f32 0.0, %v775
    %v840 = vsub.f32 0.0, %v776
    %v841 = vsub.f32 0.0, %v777
    %v842 = vsub.f32 0.0, %v778
    %v843 = vsub.f32 0.0, %v779
    %v844 = vsub.f32 0.0, %v780
    %v845 = vsub.f32 0.0, %v781
    %v846 = vsub.f32 0.0, %v782
    %v847 = vsub.f32 0.0, %v783
    %v848 = vsub.f32 0.0, %v784
    %v849 = vsub.f32 0.0, %v785
    %v850 = vsub.f32 0.0, %v786
    %v851 = vsub.f32 0.0, %v787
    %v852 = vsub.f32 0.0, %v788
    %v853 = vsub.f32 0.0, %v789
    %v854 = vsub.f32 0.0, %v790
    %v855 = vsub.f32 0.0, %v791
    %v856 = vsub.f32 0.0, %v792
    %v857 = vsub.f32 0.0, %v793
    %v858 = vsub.f32 0.0, %v794
    %v859 = vsub.f32 0.0, %v795
    %v860 = vsub.f32 0.0, %v796
    %v861 = vsub.f32 0.0, %v797
    %v862 = vsub.f32 0.0, %v798
    %v863 = vsub.f32 0.0, %v799
    %v864 = vsub.f32 0.0, %v800
    %v865 = vsub.f32 0.0, %v801
    %v866 = vsub.f32 0.0, %v802
    %v867 = vsub.f32 0.0, %v803
    %v868 = vsub.f32 0.0, %v804
    %v869 = vsub.f32 0.0, %v805
    %v870 = vsub.f32 0.0, %v806
    %v871 = vsub.f32 0.0, %v807
    %v872 = vsub.f32 0.0, %v808
    %v873 = vsub.f32 0.0, %v809
    %v874 = vsub.f32 0.0, %v810
    %v875 = vsub.f32 0.0, %v811
    %v876 = vsub.f32 0.0, %v812
    %v877 = vsub.f32 0.0, %v813
    %v878 = vsub.f32 0.0, %v814
    %v879 = vsub.f32 0.0, %v815
    %v880 = vsub.f32 0.0, %v816
    %v881 = vsub.f32 0.0, %v817
    %v882 = vsub.f32 0.0, %v818
    %v883 = vmul.f32 %v819, 1.442695
    %v884 = vpow.pop %v883
    %v885 = vmul.f32 %v820, 1.442695
    %v886 = vpow.pop %v885
    %v887 = vmul.f32 %v821, 1.442695
    %v888 = vpow.pop %v887
    %v889 = vmul.f32 %v822, 1.442695
    %v890 = vpow.pop %v889
    %v891 = vmul.f32 %v823, 1.442695
    %v892 = vpow.pop %v891
    %v893 = vmul.f32 %v824, 1.442695
    %v894 = vpow.pop %v893
    %v895 = vmul.f32 %v825, 1.442695
    %v896 = vpow.pop %v895
    %v897 = vmul.f32 %v826, 1.442695
    %v898 = vpow.pop %v897
    %v899 = vmul.f32 %v827, 1.442695
    %v900 = vpow.pop %v899
    %v901 = vmul.f32 %v828, 1.442695
    %v902 = vpow.pop %v901
    %v903 = vmul.f32 %v829, 1.442695
    %v904 = vpow.pop %v903
    %v905 = vmul.f32 %v830, 1.442695
    %v906 = vpow.pop %v905
    %v907 = vmul.f32 %v831, 1.442695
    %v908 = vpow.pop %v907
    %v909 = vmul.f32 %v832, 1.442695
    %v910 = vpow.pop %v909
    %v911 = vmul.f32 %v833, 1.442695
    %v912 = vpow.pop %v911
    %v913 = vmul.f32 %v834, 1.442695
    %v914 = vpow.pop %v913
    %v915 = vmul.f32 %v835, 1.442695
    %v916 = vpow.pop %v915
    %v917 = vmul.f32 %v836, 1.442695
    %v918 = vpow.pop %v917
    %v919 = vmul.f32 %v837, 1.442695
    %v920 = vpow.pop %v919
    %v921 = vmul.f32 %v838, 1.442695
    %v922 = vpow.pop %v921
    %v923 = vmul.f32 %v839, 1.442695
    %v924 = vpow.pop %v923
    %v925 = vmul.f32 %v840, 1.442695
    %v926 = vpow.pop %v925
    %v927 = vmul.f32 %v841, 1.442695
    %v928 = vpow.pop %v927
    %v929 = vmul.f32 %v842, 1.442695
    %v930 = vpow.pop %v929
    %v931 = vmul.f32 %v843, 1.442695
    %v932 = vpow.pop %v931
    %v933 = vmul.f32 %v844, 1.442695
    %v934 = vpow.pop %v933
    %v935 = vmul.f32 %v845, 1.442695
    %v936 = vpow.pop %v935
    %v937 = vmul.f32 %v846, 1.442695
    %v938 = vpow.pop %v937
    %v939 = vmul.f32 %v847, 1.442695
    %v940 = vpow.pop %v939
    %v941 = vmul.f32 %v848, 1.442695
    %v942 = vpow.pop %v941
    %v943 = vmul.f32 %v849, 1.442695
    %v944 = vpow.pop %v943
    %v945 = vmul.f32 %v850, 1.442695
    %v946 = vpow.pop %v945
    %v947 = vmul.f32 %v851, 1.442695
    %v948 = vpow.pop %v947
    %v949 = vmul.f32 %v852, 1.442695
    %v950 = vpow.pop %v949
    %v951 = vmul.f32 %v853, 1.442695
    %v952 = vpow.pop %v951
    %v953 = vmul.f32 %v854, 1.442695
    %v954 = vpow.pop %v953
    %v955 = vmul.f32 %v855, 1.442695
    %v956 = vpow.pop %v955
    %v957 = vmul.f32 %v856, 1.442695
    %v958 = vpow.pop %v957
    %v959 = vmul.f32 %v857, 1.442695
    %v960 = vpow.pop %v959
    %v961 = vmul.f32 %v858, 1.442695
    %v962 = vpow.pop %v961
    %v963 = vmul.f32 %v859, 1.442695
    %v964 = vpow.pop %v963
    %v965 = vmul.f32 %v860, 1.442695
    %v966 = vpow.pop %v965
    %v967 = vmul.f32 %v861, 1.442695
    %v968 = vpow.pop %v967
    %v969 = vmul.f32 %v862, 1.442695
    %v970 = vpow.pop %v969
    %v971 = vmul.f32 %v863, 1.442695
    %v972 = vpow.pop %v971
    %v973 = vmul.f32 %v864, 1.442695
    %v974 = vpow.pop %v973
    %v975 = vmul.f32 %v865, 1.442695
    %v976 = vpow.pop %v975
    %v977 = vmul.f32 %v866, 1.442695
    %v978 = vpow.pop %v977
    %v979 = vmul.f32 %v867, 1.442695
    %v980 = vpow.pop %v979
    %v981 = vmul.f32 %v868, 1.442695
    %v982 = vpow.pop %v981
    %v983 = vmul.f32 %v869, 1.442695
    %v984 = vpow.pop %v983
    %v985 = vmul.f32 %v870, 1.442695
    %v986 = vpow.pop %v985
    %v987 = vmul.f32 %v871, 1.442695
    %v988 = vpow.pop %v987
    %v989 = vmul.f32 %v872, 1.442695
    %v990 = vpow.pop %v989
    %v991 = vmul.f32 %v873, 1.442695
    %v992 = vpow.pop %v991
    %v993 = vmul.f32 %v874, 1.442695
    %v994 = vpow.pop %v993
    %v995 = vmul.f32 %v875, 1.442695
    %v996 = vpow.pop %v995
    %v997 = vmul.f32 %v876, 1.442695
    %v998 = vpow.pop %v997
    %v999 = vmul.f32 %v877, 1.442695
    %v1000 = vpow.pop %v999
    %v1001 = vmul.f32 %v878, 1.442695
    %v1002 = vpow.pop %v1001
    %v1003 = vmul.f32 %v879, 1.442695
    %v1004 = vpow.pop %v1003
    %v1005 = vmul.f32 %v880, 1.442695
    %v1006 = vpow.pop %v1005
    %v1007 = vmul.f32 %v881, 1.442695
    %v1008 = vpow.pop %v1007
    %v1009 = vmul.f32 %v882, 1.442695
    %v1010 = vpow.pop %v1009
    %v1011 = vadd.f32 %v884, 1.0
    %v1012 = vlog2.pop %v1011
    %v1013 = vmul.f32 %v1012, 0.6931472
    %v1014 = vmul.f32 -0.5, %v884
    %v1015 = vadd.f32 %v1014, 1.0
    %v1016 = vmul.f32 %v1015, %v884
    %v1017 = vand.u32 2147483647, %v884
    %vm1018 = vcmp.lt.f32.partialorder %v1017, 0.0004427343
    %v1019 = vsel %vm1018, %v1016, %v1013
    %v1020 = vadd.f32 %v886, 1.0
    %v1021 = vlog2.pop %v1020
    %v1022 = vmul.f32 %v1021, 0.6931472
    %v1023 = vmul.f32 -0.5, %v886
    %v1024 = vadd.f32 %v1023, 1.0
    %v1025 = vmul.f32 %v1024, %v886
    %v1026 = vand.u32 2147483647, %v886
    %vm1027 = vcmp.lt.f32.partialorder %v1026, 0.0004427343
    %v1028 = vsel %vm1027, %v1025, %v1022
    %v1029 = vadd.f32 %v888, 1.0
    %v1030 = vlog2.pop %v1029
    %v1031 = vmul.f32 %v1030, 0.6931472
    %v1032 = vmul.f32 -0.5, %v888
    %v1033 = vadd.f32 %v1032, 1.0
    %v1034 = vmul.f32 %v1033, %v888
    %v1035 = vand.u32 2147483647, %v888
    %vm1036 = vcmp.lt.f32.partialorder %v1035, 0.0004427343
    %v1037 = vsel %vm1036, %v1034, %v1031
    %v1038 = vadd.f32 %v890, 1.0
    %v1039 = vlog2.pop %v1038
    %v1040 = vmul.f32 %v1039, 0.6931472
    %v1041 = vmul.f32 -0.5, %v890
    %v1042 = vadd.f32 %v1041, 1.0
    %v1043 = vmul.f32 %v1042, %v890
    %v1044 = vand.u32 2147483647, %v890
    %vm1045 = vcmp.lt.f32.partialorder %v1044, 0.0004427343
    %v1046 = vsel %vm1045, %v1043, %v1040
    %v1047 = vadd.f32 %v892, 1.0
    %v1048 = vlog2.pop %v1047
    %v1049 = vmul.f32 %v1048, 0.6931472
    %v1050 = vmul.f32 -0.5, %v892
    %v1051 = vadd.f32 %v1050, 1.0
    %v1052 = vmul.f32 %v1051, %v892
    %v1053 = vand.u32 2147483647, %v892
    %vm1054 = vcmp.lt.f32.partialorder %v1053, 0.0004427343
    %v1055 = vsel %vm1054, %v1052, %v1049
    %v1056 = vadd.f32 %v894, 1.0
    %v1057 = vlog2.pop %v1056
    %v1058 = vmul.f32 %v1057, 0.6931472
    %v1059 = vmul.f32 -0.5, %v894
    %v1060 = vadd.f32 %v1059, 1.0
    %v1061 = vmul.f32 %v1060, %v894
    %v1062 = vand.u32 2147483647, %v894
    %vm1063 = vcmp.lt.f32.partialorder %v1062, 0.0004427343
    %v1064 = vsel %vm1063, %v1061, %v1058
    %v1065 = vadd.f32 %v896, 1.0
    %v1066 = vlog2.pop %v1065
    %v1067 = vmul.f32 %v1066, 0.6931472
    %v1068 = vmul.f32 -0.5, %v896
    %v1069 = vadd.f32 %v1068, 1.0
    %v1070 = vmul.f32 %v1069, %v896
    %v1071 = vand.u32 2147483647, %v896
    %vm1072 = vcmp.lt.f32.partialorder %v1071, 0.0004427343
    %v1073 = vsel %vm1072, %v1070, %v1067
    %v1074 = vadd.f32 %v898, 1.0
    %v1075 = vlog2.pop %v1074
    %v1076 = vmul.f32 %v1075, 0.6931472
    %v1077 = vmul.f32 -0.5, %v898
    %v1078 = vadd.f32 %v1077, 1.0
    %v1079 = vmul.f32 %v1078, %v898
    %v1080 = vand.u32 2147483647, %v898
    %vm1081 = vcmp.lt.f32.partialorder %v1080, 0.0004427343
    %v1082 = vsel %vm1081, %v1079, %v1076
    %v1083 = vadd.f32 %v900, 1.0
    %v1084 = vlog2.pop %v1083
    %v1085 = vmul.f32 %v1084, 0.6931472
    %v1086 = vmul.f32 -0.5, %v900
    %v1087 = vadd.f32 %v1086, 1.0
    %v1088 = vmul.f32 %v1087, %v900
    %v1089 = vand.u32 2147483647, %v900
    %vm1090 = vcmp.lt.f32.partialorder %v1089, 0.0004427343
    %v1091 = vsel %vm1090, %v1088, %v1085
    %v1092 = vadd.f32 %v902, 1.0
    %v1093 = vlog2.pop %v1092
    %v1094 = vmul.f32 %v1093, 0.6931472
    %v1095 = vmul.f32 -0.5, %v902
    %v1096 = vadd.f32 %v1095, 1.0
    %v1097 = vmul.f32 %v1096, %v902
    %v1098 = vand.u32 2147483647, %v902
    %vm1099 = vcmp.lt.f32.partialorder %v1098, 0.0004427343
    %v1100 = vsel %vm1099, %v1097, %v1094
    %v1101 = vadd.f32 %v904, 1.0
    %v1102 = vlog2.pop %v1101
    %v1103 = vmul.f32 %v1102, 0.6931472
    %v1104 = vmul.f32 -0.5, %v904
    %v1105 = vadd.f32 %v1104, 1.0
    %v1106 = vmul.f32 %v1105, %v904
    %v1107 = vand.u32 2147483647, %v904
    %vm1108 = vcmp.lt.f32.partialorder %v1107, 0.0004427343
    %v1109 = vsel %vm1108, %v1106, %v1103
    %v1110 = vadd.f32 %v906, 1.0
    %v1111 = vlog2.pop %v1110
    %v1112 = vmul.f32 %v1111, 0.6931472
    %v1113 = vmul.f32 -0.5, %v906
    %v1114 = vadd.f32 %v1113, 1.0
    %v1115 = vmul.f32 %v1114, %v906
    %v1116 = vand.u32 2147483647, %v906
    %vm1117 = vcmp.lt.f32.partialorder %v1116, 0.0004427343
    %v1118 = vsel %vm1117, %v1115, %v1112
    %v1119 = vadd.f32 %v908, 1.0
    %v1120 = vlog2.pop %v1119
    %v1121 = vmul.f32 %v1120, 0.6931472
    %v1122 = vmul.f32 -0.5, %v908
    %v1123 = vadd.f32 %v1122, 1.0
    %v1124 = vmul.f32 %v1123, %v908
    %v1125 = vand.u32 2147483647, %v908
    %vm1126 = vcmp.lt.f32.partialorder %v1125, 0.0004427343
    %v1127 = vsel %vm1126, %v1124, %v1121
    %v1128 = vadd.f32 %v910, 1.0
    %v1129 = vlog2.pop %v1128
    %v1130 = vmul.f32 %v1129, 0.6931472
    %v1131 = vmul.f32 -0.5, %v910
    %v1132 = vadd.f32 %v1131, 1.0
    %v1133 = vmul.f32 %v1132, %v910
    %v1134 = vand.u32 2147483647, %v910
    %vm1135 = vcmp.lt.f32.partialorder %v1134, 0.0004427343
    %v1136 = vsel %vm1135, %v1133, %v1130
    %v1137 = vadd.f32 %v912, 1.0
    %v1138 = vlog2.pop %v1137
    %v1139 = vmul.f32 %v1138, 0.6931472
    %v1140 = vmul.f32 -0.5, %v912
    %v1141 = vadd.f32 %v1140, 1.0
    %v1142 = vmul.f32 %v1141, %v912
    %v1143 = vand.u32 2147483647, %v912
    %vm1144 = vcmp.lt.f32.partialorder %v1143, 0.0004427343
    %v1145 = vsel %vm1144, %v1142, %v1139
    %v1146 = vadd.f32 %v914, 1.0
    %v1147 = vlog2.pop %v1146
    %v1148 = vmul.f32 %v1147, 0.6931472
    %v1149 = vmul.f32 -0.5, %v914
    %v1150 = vadd.f32 %v1149, 1.0
    %v1151 = vmul.f32 %v1150, %v914
    %v1152 = vand.u32 2147483647, %v914
    %vm1153 = vcmp.lt.f32.partialorder %v1152, 0.0004427343
    %v1154 = vsel %vm1153, %v1151, %v1148
    %v1155 = vadd.f32 %v916, 1.0
    %v1156 = vlog2.pop %v1155
    %v1157 = vmul.f32 %v1156, 0.6931472
    %v1158 = vmul.f32 -0.5, %v916
    %v1159 = vadd.f32 %v1158, 1.0
    %v1160 = vmul.f32 %v1159, %v916
    %v1161 = vand.u32 2147483647, %v916
    %vm1162 = vcmp.lt.f32.partialorder %v1161, 0.0004427343
    %v1163 = vsel %vm1162, %v1160, %v1157
    %v1164 = vadd.f32 %v918, 1.0
    %v1165 = vlog2.pop %v1164
    %v1166 = vmul.f32 %v1165, 0.6931472
    %v1167 = vmul.f32 -0.5, %v918
    %v1168 = vadd.f32 %v1167, 1.0
    %v1169 = vmul.f32 %v1168, %v918
    %v1170 = vand.u32 2147483647, %v918
    %vm1171 = vcmp.lt.f32.partialorder %v1170, 0.0004427343
    %v1172 = vsel %vm1171, %v1169, %v1166
    %v1173 = vadd.f32 %v920, 1.0
    %v1174 = vlog2.pop %v1173
    %v1175 = vmul.f32 %v1174, 0.6931472
    %v1176 = vmul.f32 -0.5, %v920
    %v1177 = vadd.f32 %v1176, 1.0
    %v1178 = vmul.f32 %v1177, %v920
    %v1179 = vand.u32 2147483647, %v920
    %vm1180 = vcmp.lt.f32.partialorder %v1179, 0.0004427343
    %v1181 = vsel %vm1180, %v1178, %v1175
    %v1182 = vadd.f32 %v922, 1.0
    %v1183 = vlog2.pop %v1182
    %v1184 = vmul.f32 %v1183, 0.6931472
    %v1185 = vmul.f32 -0.5, %v922
    %v1186 = vadd.f32 %v1185, 1.0
    %v1187 = vmul.f32 %v1186, %v922
    %v1188 = vand.u32 2147483647, %v922
    %vm1189 = vcmp.lt.f32.partialorder %v1188, 0.0004427343
    %v1190 = vsel %vm1189, %v1187, %v1184
    %v1191 = vadd.f32 %v924, 1.0
    %v1192 = vlog2.pop %v1191
    %v1193 = vmul.f32 %v1192, 0.6931472
    %v1194 = vmul.f32 -0.5, %v924
    %v1195 = vadd.f32 %v1194, 1.0
    %v1196 = vmul.f32 %v1195, %v924
    %v1197 = vand.u32 2147483647, %v924
    %vm1198 = vcmp.lt.f32.partialorder %v1197, 0.0004427343
    %v1199 = vsel %vm1198, %v1196, %v1193
    %v1200 = vadd.f32 %v926, 1.0
    %v1201 = vlog2.pop %v1200
    %v1202 = vmul.f32 %v1201, 0.6931472
    %v1203 = vmul.f32 -0.5, %v926
    %v1204 = vadd.f32 %v1203, 1.0
    %v1205 = vmul.f32 %v1204, %v926
    %v1206 = vand.u32 2147483647, %v926
    %vm1207 = vcmp.lt.f32.partialorder %v1206, 0.0004427343
    %v1208 = vsel %vm1207, %v1205, %v1202
    %v1209 = vadd.f32 %v928, 1.0
    %v1210 = vlog2.pop %v1209
    %v1211 = vmul.f32 %v1210, 0.6931472
    %v1212 = vmul.f32 -0.5, %v928
    %v1213 = vadd.f32 %v1212, 1.0
    %v1214 = vmul.f32 %v1213, %v928
    %v1215 = vand.u32 2147483647, %v928
    %vm1216 = vcmp.lt.f32.partialorder %v1215, 0.0004427343
    %v1217 = vsel %vm1216, %v1214, %v1211
    %v1218 = vadd.f32 %v930, 1.0
    %v1219 = vlog2.pop %v1218
    %v1220 = vmul.f32 %v1219, 0.6931472
    %v1221 = vmul.f32 -0.5, %v930
    %v1222 = vadd.f32 %v1221, 1.0
    %v1223 = vmul.f32 %v1222, %v930
    %v1224 = vand.u32 2147483647, %v930
    %vm1225 = vcmp.lt.f32.partialorder %v1224, 0.0004427343
    %v1226 = vsel %vm1225, %v1223, %v1220
    %v1227 = vadd.f32 %v932, 1.0
    %v1228 = vlog2.pop %v1227
    %v1229 = vmul.f32 %v1228, 0.6931472
    %v1230 = vmul.f32 -0.5, %v932
    %v1231 = vadd.f32 %v1230, 1.0
    %v1232 = vmul.f32 %v1231, %v932
    %v1233 = vand.u32 2147483647, %v932
    %vm1234 = vcmp.lt.f32.partialorder %v1233, 0.0004427343
    %v1235 = vsel %vm1234, %v1232, %v1229
    %v1236 = vadd.f32 %v934, 1.0
    %v1237 = vlog2.pop %v1236
    %v1238 = vmul.f32 %v1237, 0.6931472
    %v1239 = vmul.f32 -0.5, %v934
    %v1240 = vadd.f32 %v1239, 1.0
    %v1241 = vmul.f32 %v1240, %v934
    %v1242 = vand.u32 2147483647, %v934
    %vm1243 = vcmp.lt.f32.partialorder %v1242, 0.0004427343
    %v1244 = vsel %vm1243, %v1241, %v1238
    %v1245 = vadd.f32 %v936, 1.0
    %v1246 = vlog2.pop %v1245
    %v1247 = vmul.f32 %v1246, 0.6931472
    %v1248 = vmul.f32 -0.5, %v936
    %v1249 = vadd.f32 %v1248, 1.0
    %v1250 = vmul.f32 %v1249, %v936
    %v1251 = vand.u32 2147483647, %v936
    %vm1252 = vcmp.lt.f32.partialorder %v1251, 0.0004427343
    %v1253 = vsel %vm1252, %v1250, %v1247
    %v1254 = vadd.f32 %v938, 1.0
    %v1255 = vlog2.pop %v1254
    %v1256 = vmul.f32 %v1255, 0.6931472
    %v1257 = vmul.f32 -0.5, %v938
    %v1258 = vadd.f32 %v1257, 1.0
    %v1259 = vmul.f32 %v1258, %v938
    %v1260 = vand.u32 2147483647, %v938
    %vm1261 = vcmp.lt.f32.partialorder %v1260, 0.0004427343
    %v1262 = vsel %vm1261, %v1259, %v1256
    %v1263 = vadd.f32 %v940, 1.0
    %v1264 = vlog2.pop %v1263
    %v1265 = vmul.f32 %v1264, 0.6931472
    %v1266 = vmul.f32 -0.5, %v940
    %v1267 = vadd.f32 %v1266, 1.0
    %v1268 = vmul.f32 %v1267, %v940
    %v1269 = vand.u32 2147483647, %v940
    %vm1270 = vcmp.lt.f32.partialorder %v1269, 0.0004427343
    %v1271 = vsel %vm1270, %v1268, %v1265
    %v1272 = vadd.f32 %v942, 1.0
    %v1273 = vlog2.pop %v1272
    %v1274 = vmul.f32 %v1273, 0.6931472
    %v1275 = vmul.f32 -0.5, %v942
    %v1276 = vadd.f32 %v1275, 1.0
    %v1277 = vmul.f32 %v1276, %v942
    %v1278 = vand.u32 2147483647, %v942
    %vm1279 = vcmp.lt.f32.partialorder %v1278, 0.0004427343
    %v1280 = vsel %vm1279, %v1277, %v1274
    %v1281 = vadd.f32 %v944, 1.0
    %v1282 = vlog2.pop %v1281
    %v1283 = vmul.f32 %v1282, 0.6931472
    %v1284 = vmul.f32 -0.5, %v944
    %v1285 = vadd.f32 %v1284, 1.0
    %v1286 = vmul.f32 %v1285, %v944
    %v1287 = vand.u32 2147483647, %v944
    %vm1288 = vcmp.lt.f32.partialorder %v1287, 0.0004427343
    %v1289 = vsel %vm1288, %v1286, %v1283
    %v1290 = vadd.f32 %v946, 1.0
    %v1291 = vlog2.pop %v1290
    %v1292 = vmul.f32 %v1291, 0.6931472
    %v1293 = vmul.f32 -0.5, %v946
    %v1294 = vadd.f32 %v1293, 1.0
    %v1295 = vmul.f32 %v1294, %v946
    %v1296 = vand.u32 2147483647, %v946
    %vm1297 = vcmp.lt.f32.partialorder %v1296, 0.0004427343
    %v1298 = vsel %vm1297, %v1295, %v1292
    %v1299 = vadd.f32 %v948, 1.0
    %v1300 = vlog2.pop %v1299
    %v1301 = vmul.f32 %v1300, 0.6931472
    %v1302 = vmul.f32 -0.5, %v948
    %v1303 = vadd.f32 %v1302, 1.0
    %v1304 = vmul.f32 %v1303, %v948
    %v1305 = vand.u32 2147483647, %v948
    %vm1306 = vcmp.lt.f32.partialorder %v1305, 0.0004427343
    %v1307 = vsel %vm1306, %v1304, %v1301
    %v1308 = vadd.f32 %v950, 1.0
    %v1309 = vlog2.pop %v1308
    %v1310 = vmul.f32 %v1309, 0.6931472
    %v1311 = vmul.f32 -0.5, %v950
    %v1312 = vadd.f32 %v1311, 1.0
    %v1313 = vmul.f32 %v1312, %v950
    %v1314 = vand.u32 2147483647, %v950
    %vm1315 = vcmp.lt.f32.partialorder %v1314, 0.0004427343
    %v1316 = vsel %vm1315, %v1313, %v1310
    %v1317 = vadd.f32 %v952, 1.0
    %v1318 = vlog2.pop %v1317
    %v1319 = vmul.f32 %v1318, 0.6931472
    %v1320 = vmul.f32 -0.5, %v952
    %v1321 = vadd.f32 %v1320, 1.0
    %v1322 = vmul.f32 %v1321, %v952
    %v1323 = vand.u32 2147483647, %v952
    %vm1324 = vcmp.lt.f32.partialorder %v1323, 0.0004427343
    %v1325 = vsel %vm1324, %v1322, %v1319
    %v1326 = vadd.f32 %v954, 1.0
    %v1327 = vlog2.pop %v1326
    %v1328 = vmul.f32 %v1327, 0.6931472
    %v1329 = vmul.f32 -0.5, %v954
    %v1330 = vadd.f32 %v1329, 1.0
    %v1331 = vmul.f32 %v1330, %v954
    %v1332 = vand.u32 2147483647, %v954
    %vm1333 = vcmp.lt.f32.partialorder %v1332, 0.0004427343
    %v1334 = vsel %vm1333, %v1331, %v1328
    %v1335 = vadd.f32 %v956, 1.0
    %v1336 = vlog2.pop %v1335
    %v1337 = vmul.f32 %v1336, 0.6931472
    %v1338 = vmul.f32 -0.5, %v956
    %v1339 = vadd.f32 %v1338, 1.0
    %v1340 = vmul.f32 %v1339, %v956
    %v1341 = vand.u32 2147483647, %v956
    %vm1342 = vcmp.lt.f32.partialorder %v1341, 0.0004427343
    %v1343 = vsel %vm1342, %v1340, %v1337
    %v1344 = vadd.f32 %v958, 1.0
    %v1345 = vlog2.pop %v1344
    %v1346 = vmul.f32 %v1345, 0.6931472
    %v1347 = vmul.f32 -0.5, %v958
    %v1348 = vadd.f32 %v1347, 1.0
    %v1349 = vmul.f32 %v1348, %v958
    %v1350 = vand.u32 2147483647, %v958
    %vm1351 = vcmp.lt.f32.partialorder %v1350, 0.0004427343
    %v1352 = vsel %vm1351, %v1349, %v1346
    %v1353 = vadd.f32 %v960, 1.0
    %v1354 = vlog2.pop %v1353
    %v1355 = vmul.f32 %v1354, 0.6931472
    %v1356 = vmul.f32 -0.5, %v960
    %v1357 = vadd.f32 %v1356, 1.0
    %v1358 = vmul.f32 %v1357, %v960
    %v1359 = vand.u32 2147483647, %v960
    %vm1360 = vcmp.lt.f32.partialorder %v1359, 0.0004427343
    %v1361 = vsel %vm1360, %v1358, %v1355
    %v1362 = vadd.f32 %v962, 1.0
    %v1363 = vlog2.pop %v1362
    %v1364 = vmul.f32 %v1363, 0.6931472
    %v1365 = vmul.f32 -0.5, %v962
    %v1366 = vadd.f32 %v1365, 1.0
    %v1367 = vmul.f32 %v1366, %v962
    %v1368 = vand.u32 2147483647, %v962
    %vm1369 = vcmp.lt.f32.partialorder %v1368, 0.0004427343
    %v1370 = vsel %vm1369, %v1367, %v1364
    %v1371 = vadd.f32 %v964, 1.0
    %v1372 = vlog2.pop %v1371
    %v1373 = vmul.f32 %v1372, 0.6931472
    %v1374 = vmul.f32 -0.5, %v964
    %v1375 = vadd.f32 %v1374, 1.0
    %v1376 = vmul.f32 %v1375, %v964
    %v1377 = vand.u32 2147483647, %v964
    %vm1378 = vcmp.lt.f32.partialorder %v1377, 0.0004427343
    %v1379 = vsel %vm1378, %v1376, %v1373
    %v1380 = vadd.f32 %v966, 1.0
    %v1381 = vlog2.pop %v1380
    %v1382 = vmul.f32 %v1381, 0.6931472
    %v1383 = vmul.f32 -0.5, %v966
    %v1384 = vadd.f32 %v1383, 1.0
    %v1385 = vmul.f32 %v1384, %v966
    %v1386 = vand.u32 2147483647, %v966
    %vm1387 = vcmp.lt.f32.partialorder %v1386, 0.0004427343
    %v1388 = vsel %vm1387, %v1385, %v1382
    %v1389 = vadd.f32 %v968, 1.0
    %v1390 = vlog2.pop %v1389
    %v1391 = vmul.f32 %v1390, 0.6931472
    %v1392 = vmul.f32 -0.5, %v968
    %v1393 = vadd.f32 %v1392, 1.0
    %v1394 = vmul.f32 %v1393, %v968
    %v1395 = vand.u32 2147483647, %v968
    %vm1396 = vcmp.lt.f32.partialorder %v1395, 0.0004427343
    %v1397 = vsel %vm1396, %v1394, %v1391
    %v1398 = vadd.f32 %v970, 1.0
    %v1399 = vlog2.pop %v1398
    %v1400 = vmul.f32 %v1399, 0.6931472
    %v1401 = vmul.f32 -0.5, %v970
    %v1402 = vadd.f32 %v1401, 1.0
    %v1403 = vmul.f32 %v1402, %v970
    %v1404 = vand.u32 2147483647, %v970
    %vm1405 = vcmp.lt.f32.partialorder %v1404, 0.0004427343
    %v1406 = vsel %vm1405, %v1403, %v1400
    %v1407 = vadd.f32 %v972, 1.0
    %v1408 = vlog2.pop %v1407
    %v1409 = vmul.f32 %v1408, 0.6931472
    %v1410 = vmul.f32 -0.5, %v972
    %v1411 = vadd.f32 %v1410, 1.0
    %v1412 = vmul.f32 %v1411, %v972
    %v1413 = vand.u32 2147483647, %v972
    %vm1414 = vcmp.lt.f32.partialorder %v1413, 0.0004427343
    %v1415 = vsel %vm1414, %v1412, %v1409
    %v1416 = vadd.f32 %v974, 1.0
    %v1417 = vlog2.pop %v1416
    %v1418 = vmul.f32 %v1417, 0.6931472
    %v1419 = vmul.f32 -0.5, %v974
    %v1420 = vadd.f32 %v1419, 1.0
    %v1421 = vmul.f32 %v1420, %v974
    %v1422 = vand.u32 2147483647, %v974
    %vm1423 = vcmp.lt.f32.partialorder %v1422, 0.0004427343
    %v1424 = vsel %vm1423, %v1421, %v1418
    %v1425 = vadd.f32 %v976, 1.0
    %v1426 = vlog2.pop %v1425
    %v1427 = vmul.f32 %v1426, 0.6931472
    %v1428 = vmul.f32 -0.5, %v976
    %v1429 = vadd.f32 %v1428, 1.0
    %v1430 = vmul.f32 %v1429, %v976
    %v1431 = vand.u32 2147483647, %v976
    %vm1432 = vcmp.lt.f32.partialorder %v1431, 0.0004427343
    %v1433 = vsel %vm1432, %v1430, %v1427
    %v1434 = vadd.f32 %v978, 1.0
    %v1435 = vlog2.pop %v1434
    %v1436 = vmul.f32 %v1435, 0.6931472
    %v1437 = vmul.f32 -0.5, %v978
    %v1438 = vadd.f32 %v1437, 1.0
    %v1439 = vmul.f32 %v1438, %v978
    %v1440 = vand.u32 2147483647, %v978
    %vm1441 = vcmp.lt.f32.partialorder %v1440, 0.0004427343
    %v1442 = vsel %vm1441, %v1439, %v1436
    %v1443 = vadd.f32 %v980, 1.0
    %v1444 = vlog2.pop %v1443
    %v1445 = vmul.f32 %v1444, 0.6931472
    %v1446 = vmul.f32 -0.5, %v980
    %v1447 = vadd.f32 %v1446, 1.0
    %v1448 = vmul.f32 %v1447, %v980
    %v1449 = vand.u32 2147483647, %v980
    %vm1450 = vcmp.lt.f32.partialorder %v1449, 0.0004427343
    %v1451 = vsel %vm1450, %v1448, %v1445
    %v1452 = vadd.f32 %v982, 1.0
    %v1453 = vlog2.pop %v1452
    %v1454 = vmul.f32 %v1453, 0.6931472
    %v1455 = vmul.f32 -0.5, %v982
    %v1456 = vadd.f32 %v1455, 1.0
    %v1457 = vmul.f32 %v1456, %v982
    %v1458 = vand.u32 2147483647, %v982
    %vm1459 = vcmp.lt.f32.partialorder %v1458, 0.0004427343
    %v1460 = vsel %vm1459, %v1457, %v1454
    %v1461 = vadd.f32 %v984, 1.0
    %v1462 = vlog2.pop %v1461
    %v1463 = vmul.f32 %v1462, 0.6931472
    %v1464 = vmul.f32 -0.5, %v984
    %v1465 = vadd.f32 %v1464, 1.0
    %v1466 = vmul.f32 %v1465, %v984
    %v1467 = vand.u32 2147483647, %v984
    %vm1468 = vcmp.lt.f32.partialorder %v1467, 0.0004427343
    %v1469 = vsel %vm1468, %v1466, %v1463
    %v1470 = vadd.f32 %v986, 1.0
    %v1471 = vlog2.pop %v1470
    %v1472 = vmul.f32 %v1471, 0.6931472
    %v1473 = vmul.f32 -0.5, %v986
    %v1474 = vadd.f32 %v1473, 1.0
    %v1475 = vmul.f32 %v1474, %v986
    %v1476 = vand.u32 2147483647, %v986
    %vm1477 = vcmp.lt.f32.partialorder %v1476, 0.0004427343
    %v1478 = vsel %vm1477, %v1475, %v1472
    %v1479 = vadd.f32 %v988, 1.0
    %v1480 = vlog2.pop %v1479
    %v1481 = vmul.f32 %v1480, 0.6931472
    %v1482 = vmul.f32 -0.5, %v988
    %v1483 = vadd.f32 %v1482, 1.0
    %v1484 = vmul.f32 %v1483, %v988
    %v1485 = vand.u32 2147483647, %v988
    %vm1486 = vcmp.lt.f32.partialorder %v1485, 0.0004427343
    %v1487 = vsel %vm1486, %v1484, %v1481
    %v1488 = vadd.f32 %v990, 1.0
    %v1489 = vlog2.pop %v1488
    %v1490 = vmul.f32 %v1489, 0.6931472
    %v1491 = vmul.f32 -0.5, %v990
    %v1492 = vadd.f32 %v1491, 1.0
    %v1493 = vmul.f32 %v1492, %v990
    %v1494 = vand.u32 2147483647, %v990
    %vm1495 = vcmp.lt.f32.partialorder %v1494, 0.0004427343
    %v1496 = vsel %vm1495, %v1493, %v1490
    %v1497 = vadd.f32 %v992, 1.0
    %v1498 = vlog2.pop %v1497
    %v1499 = vmul.f32 %v1498, 0.6931472
    %v1500 = vmul.f32 -0.5, %v992
    %v1501 = vadd.f32 %v1500, 1.0
    %v1502 = vmul.f32 %v1501, %v992
    %v1503 = vand.u32 2147483647, %v992
    %vm1504 = vcmp.lt.f32.partialorder %v1503, 0.0004427343
    %v1505 = vsel %vm1504, %v1502, %v1499
    %v1506 = vadd.f32 %v994, 1.0
    %v1507 = vlog2.pop %v1506
    %v1508 = vmul.f32 %v1507, 0.6931472
    %v1509 = vmul.f32 -0.5, %v994
    %v1510 = vadd.f32 %v1509, 1.0
    %v1511 = vmul.f32 %v1510, %v994
    %v1512 = vand.u32 2147483647, %v994
    %vm1513 = vcmp.lt.f32.partialorder %v1512, 0.0004427343
    %v1514 = vsel %vm1513, %v1511, %v1508
    %v1515 = vadd.f32 %v996, 1.0
    %v1516 = vlog2.pop %v1515
    %v1517 = vmul.f32 %v1516, 0.6931472
    %v1518 = vmul.f32 -0.5, %v996
    %v1519 = vadd.f32 %v1518, 1.0
    %v1520 = vmul.f32 %v1519, %v996
    %v1521 = vand.u32 2147483647, %v996
    %vm1522 = vcmp.lt.f32.partialorder %v1521, 0.0004427343
    %v1523 = vsel %vm1522, %v1520, %v1517
    %v1524 = vadd.f32 %v998, 1.0
    %v1525 = vlog2.pop %v1524
    %v1526 = vmul.f32 %v1525, 0.6931472
    %v1527 = vmul.f32 -0.5, %v998
    %v1528 = vadd.f32 %v1527, 1.0
    %v1529 = vmul.f32 %v1528, %v998
    %v1530 = vand.u32 2147483647, %v998
    %vm1531 = vcmp.lt.f32.partialorder %v1530, 0.0004427343
    %v1532 = vsel %vm1531, %v1529, %v1526
    %v1533 = vadd.f32 %v1000, 1.0
    %v1534 = vlog2.pop %v1533
    %v1535 = vmul.f32 %v1534, 0.6931472
    %v1536 = vmul.f32 -0.5, %v1000
    %v1537 = vadd.f32 %v1536, 1.0
    %v1538 = vmul.f32 %v1537, %v1000
    %v1539 = vand.u32 2147483647, %v1000
    %vm1540 = vcmp.lt.f32.partialorder %v1539, 0.0004427343
    %v1541 = vsel %vm1540, %v1538, %v1535
    %v1542 = vadd.f32 %v1002, 1.0
    %v1543 = vlog2.pop %v1542
    %v1544 = vmul.f32 %v1543, 0.6931472
    %v1545 = vmul.f32 -0.5, %v1002
    %v1546 = vadd.f32 %v1545, 1.0
    %v1547 = vmul.f32 %v1546, %v1002
    %v1548 = vand.u32 2147483647, %v1002
    %vm1549 = vcmp.lt.f32.partialorder %v1548, 0.0004427343
    %v1550 = vsel %vm1549, %v1547, %v1544
    %v1551 = vadd.f32 %v1004, 1.0
    %v1552 = vlog2.pop %v1551
    %v1553 = vmul.f32 %v1552, 0.6931472
    %v1554 = vmul.f32 -0.5, %v1004
    %v1555 = vadd.f32 %v1554, 1.0
    %v1556 = vmul.f32 %v1555, %v1004
    %v1557 = vand.u32 2147483647, %v1004
    %vm1558 = vcmp.lt.f32.partialorder %v1557, 0.0004427343
    %v1559 = vsel %vm1558, %v1556, %v1553
    %v1560 = vadd.f32 %v1006, 1.0
    %v1561 = vlog2.pop %v1560
    %v1562 = vmul.f32 %v1561, 0.6931472
    %v1563 = vmul.f32 -0.5, %v1006
    %v1564 = vadd.f32 %v1563, 1.0
    %v1565 = vmul.f32 %v1564, %v1006
    %v1566 = vand.u32 2147483647, %v1006
    %vm1567 = vcmp.lt.f32.partialorder %v1566, 0.0004427343
    %v1568 = vsel %vm1567, %v1565, %v1562
    %v1569 = vadd.f32 %v1008, 1.0
    %v1570 = vlog2.pop %v1569
    %v1571 = vmul.f32 %v1570, 0.6931472
    %v1572 = vmul.f32 -0.5, %v1008
    %v1573 = vadd.f32 %v1572, 1.0
    %v1574 = vmul.f32 %v1573, %v1008
    %v1575 = vand.u32 2147483647, %v1008
    %vm1576 = vcmp.lt.f32.partialorder %v1575, 0.0004427343
    %v1577 = vsel %vm1576, %v1574, %v1571
    %v1578 = vadd.f32 %v1010, 1.0
    %v1579 = vlog2.pop %v1578
    %v1580 = vmul.f32 %v1579, 0.6931472
    %v1581 = vmul.f32 -0.5, %v1010
    %v1582 = vadd.f32 %v1581, 1.0
    %v1583 = vmul.f32 %v1582, %v1010
    %v1584 = vand.u32 2147483647, %v1010
    %vm1585 = vcmp.lt.f32.partialorder %v1584, 0.0004427343
    %v1586 = vsel %vm1585, %v1583, %v1580
    %v1587 = vadd.f32 %v691, %v1019
    %v1588 = vadd.f32 %v692, %v1028
    %v1589 = vadd.f32 %v693, %v1037
    %v1590 = vadd.f32 %v694, %v1046
    %v1591 = vadd.f32 %v695, %v1055
    %v1592 = vadd.f32 %v696, %v1064
    %v1593 = vadd.f32 %v697, %v1073
    %v1594 = vadd.f32 %v698, %v1082
    %v1595 = vadd.f32 %v699, %v1091
    %v1596 = vadd.f32 %v700, %v1100
    %v1597 = vadd.f32 %v701, %v1109
    %v1598 = vadd.f32 %v702, %v1118
    %v1599 = vadd.f32 %v703, %v1127
    %v1600 = vadd.f32 %v704, %v1136
    %v1601 = vadd.f32 %v705, %v1145
    %v1602 = vadd.f32 %v706, %v1154
    %v1603 = vadd.f32 %v707, %v1163
    %v1604 = vadd.f32 %v708, %v1172
    %v1605 = vadd.f32 %v709, %v1181
    %v1606 = vadd.f32 %v710, %v1190
    %v1607 = vadd.f32 %v711, %v1199
    %v1608 = vadd.f32 %v712, %v1208
    %v1609 = vadd.f32 %v713, %v1217
    %v1610 = vadd.f32 %v714, %v1226
    %v1611 = vadd.f32 %v715, %v1235
    %v1612 = vadd.f32 %v716, %v1244
    %v1613 = vadd.f32 %v717, %v1253
    %v1614 = vadd.f32 %v718, %v1262
    %v1615 = vadd.f32 %v719, %v1271
    %v1616 = vadd.f32 %v720, %v1280
    %v1617 = vadd.f32 %v721, %v1289
    %v1618 = vadd.f32 %v722, %v1298
    %v1619 = vadd.f32 %v723, %v1307
    %v1620 = vadd.f32 %v724, %v1316
    %v1621 = vadd.f32 %v725, %v1325
    %v1622 = vadd.f32 %v726, %v1334
    %v1623 = vadd.f32 %v727, %v1343
    %v1624 = vadd.f32 %v728, %v1352
    %v1625 = vadd.f32 %v729, %v1361
    %v1626 = vadd.f32 %v730, %v1370
    %v1627 = vadd.f32 %v731, %v1379
    %v1628 = vadd.f32 %v732, %v1388
    %v1629 = vadd.f32 %v733, %v1397
    %v1630 = vadd.f32 %v734, %v1406
    %v1631 = vadd.f32 %v735, %v1415
    %v1632 = vadd.f32 %v736, %v1424
    %v1633 = vadd.f32 %v737, %v1433
    %v1634 = vadd.f32 %v738, %v1442
    %v1635 = vadd.f32 %v739, %v1451
    %v1636 = vadd.f32 %v740, %v1460
    %v1637 = vadd.f32 %v741, %v1469
    %v1638 = vadd.f32 %v742, %v1478
    %v1639 = vadd.f32 %v743, %v1487
    %v1640 = vadd.f32 %v744, %v1496
    %v1641 = vadd.f32 %v745, %v1505
    %v1642 = vadd.f32 %v746, %v1514
    %v1643 = vadd.f32 %v747, %v1523
    %v1644 = vadd.f32 %v748, %v1532
    %v1645 = vadd.f32 %v749, %v1541
    %v1646 = vadd.f32 %v750, %v1550
    %v1647 = vadd.f32 %v751, %v1559
    %v1648 = vadd.f32 %v752, %v1568
    %v1649 = vadd.f32 %v753, %v1577
    %v1650 = vadd.f32 %v754, %v1586
    %v1651 = vsub.f32 %v1587, 0.6931472
    %v1652 = vsub.f32 %v1588, 0.6931472
    %v1653 = vsub.f32 %v1589, 0.6931472
    %v1654 = vsub.f32 %v1590, 0.6931472
    %v1655 = vsub.f32 %v1591, 0.6931472
    %v1656 = vsub.f32 %v1592, 0.6931472
    %v1657 = vsub.f32 %v1593, 0.6931472
    %v1658 = vsub.f32 %v1594, 0.6931472
    %v1659 = vsub.f32 %v1595, 0.6931472
    %v1660 = vsub.f32 %v1596, 0.6931472
    %v1661 = vsub.f32 %v1597, 0.6931472
    %v1662 = vsub.f32 %v1598, 0.6931472
    %v1663 = vsub.f32 %v1599, 0.6931472
    %v1664 = vsub.f32 %v1600, 0.6931472
    %v1665 = vsub.f32 %v1601, 0.6931472
    %v1666 = vsub.f32 %v1602, 0.6931472
    %v1667 = vsub.f32 %v1603, 0.6931472
    %v1668 = vsub.f32 %v1604, 0.6931472
    %v1669 = vsub.f32 %v1605, 0.6931472
    %v1670 = vsub.f32 %v1606, 0.6931472
    %v1671 = vsub.f32 %v1607, 0.6931472
    %v1672 = vsub.f32 %v1608, 0.6931472
    %v1673 = vsub.f32 %v1609, 0.6931472
    %v1674 = vsub.f32 %v1610, 0.6931472
    %v1675 = vsub.f32 %v1611, 0.6931472
    %v1676 = vsub.f32 %v1612, 0.6931472
    %v1677 = vsub.f32 %v1613, 0.6931472
    %v1678 = vsub.f32 %v1614, 0.6931472
    %v1679 = vsub.f32 %v1615, 0.6931472
    %v1680 = vsub.f32 %v1616, 0.6931472
    %v1681 = vsub.f32 %v1617, 0.6931472
    %v1682 = vsub.f32 %v1618, 0.6931472
    %v1683 = vsub.f32 %v1619, 0.6931472
    %v1684 = vsub.f32 %v1620, 0.6931472
    %v1685 = vsub.f32 %v1621, 0.6931472
    %v1686 = vsub.f32 %v1622, 0.6931472
    %v1687 = vsub.f32 %v1623, 0.6931472
    %v1688 = vsub.f32 %v1624, 0.6931472
    %v1689 = vsub.f32 %v1625, 0.6931472
    %v1690 = vsub.f32 %v1626, 0.6931472
    %v1691 = vsub.f32 %v1627, 0.6931472
    %v1692 = vsub.f32 %v1628, 0.6931472
    %v1693 = vsub.f32 %v1629, 0.6931472
    %v1694 = vsub.f32 %v1630, 0.6931472
    %v1695 = vsub.f32 %v1631, 0.6931472
    %v1696 = vsub.f32 %v1632, 0.6931472
    %v1697 = vsub.f32 %v1633, 0.6931472
    %v1698 = vsub.f32 %v1634, 0.6931472
    %v1699 = vsub.f32 %v1635, 0.6931472
    %v1700 = vsub.f32 %v1636, 0.6931472
    %v1701 = vsub.f32 %v1637, 0.6931472
    %v1702 = vsub.f32 %v1638, 0.6931472
    %v1703 = vsub.f32 %v1639, 0.6931472
    %v1704 = vsub.f32 %v1640, 0.6931472
    %v1705 = vsub.f32 %v1641, 0.6931472
    %v1706 = vsub.f32 %v1642, 0.6931472
    %v1707 = vsub.f32 %v1643, 0.6931472
    %v1708 = vsub.f32 %v1644, 0.6931472
    %v1709 = vsub.f32 %v1645, 0.6931472
    %v1710 = vsub.f32 %v1646, 0.6931472
    %v1711 = vsub.f32 %v1647, 0.6931472
    %v1712 = vsub.f32 %v1648, 0.6931472
    %v1713 = vsub.f32 %v1649, 0.6931472
    %v1714 = vsub.f32 %v1650, 0.6931472
    %v1715 = vpack.c.bf16 %v1652, %v1651
    %v1716 = vpack.c.bf16 %v1654, %v1653
    %v1717 = vpack.c.bf16 %v1656, %v1655
    %v1718 = vpack.c.bf16 %v1658, %v1657
    %v1719 = vpack.c.bf16 %v1660, %v1659
    %v1720 = vpack.c.bf16 %v1662, %v1661
    %v1721 = vpack.c.bf16 %v1664, %v1663
    %v1722 = vpack.c.bf16 %v1666, %v1665
    %v1723 = vpack.c.bf16 %v1668, %v1667
    %v1724 = vpack.c.bf16 %v1670, %v1669
    %v1725 = vpack.c.bf16 %v1672, %v1671
    %v1726 = vpack.c.bf16 %v1674, %v1673
    %v1727 = vpack.c.bf16 %v1676, %v1675
    %v1728 = vpack.c.bf16 %v1678, %v1677
    %v1729 = vpack.c.bf16 %v1680, %v1679
    %v1730 = vpack.c.bf16 %v1682, %v1681
    %v1731 = vpack.c.bf16 %v1684, %v1683
    %v1732 = vpack.c.bf16 %v1686, %v1685
    %v1733 = vpack.c.bf16 %v1688, %v1687
    %v1734 = vpack.c.bf16 %v1690, %v1689
    %v1735 = vpack.c.bf16 %v1692, %v1691
    %v1736 = vpack.c.bf16 %v1694, %v1693
    %v1737 = vpack.c.bf16 %v1696, %v1695
    %v1738 = vpack.c.bf16 %v1698, %v1697
    %v1739 = vpack.c.bf16 %v1700, %v1699
    %v1740 = vpack.c.bf16 %v1702, %v1701
    %v1741 = vpack.c.bf16 %v1704, %v1703
    %v1742 = vpack.c.bf16 %v1706, %v1705
    %v1743 = vpack.c.bf16 %v1708, %v1707
    %v1744 = vpack.c.bf16 %v1710, %v1709
    %v1745 = vpack.c.bf16 %v1712, %v1711
    %v1746 = vpack.c.bf16 %v1714, %v1713
    %v1747 = vld [vmem:[#allocation7] sm:$0xf]
    %v1748 = vld [vmem:[#allocation7 + $0x4] sm:$0xf]
    %v1749 = vld [vmem:[#allocation7 + $0x8] sm:$0xf]
    %v1750 = vld [vmem:[#allocation7 + $0xc] sm:$0xf]
    %v1751 = vld [vmem:[#allocation7 + $0x10] sm:$0xf]
    %v1752 = vld [vmem:[#allocation7 + $0x14] sm:$0xf]
    %v1753 = vld [vmem:[#allocation7 + $0x18] sm:$0xf]
    %v1754 = vld [vmem:[#allocation7 + $0x1c] sm:$0xf]
    %v1755 = vld [vmem:[#allocation7 + $0x20] sm:$0xf]
    %v1756 = vld [vmem:[#allocation7 + $0x24] sm:$0xf]
    %v1757 = vld [vmem:[#allocation7 + $0x28] sm:$0xf]
    %v1758 = vld [vmem:[#allocation7 + $0x2c] sm:$0xf]
    %v1759 = vld [vmem:[#allocation7 + $0x30] sm:$0xf]
    %v1760 = vld [vmem:[#allocation7 + $0x34] sm:$0xf]
    %v1761 = vld [vmem:[#allocation7 + $0x38] sm:$0xf]
    %v1762 = vld [vmem:[#allocation7 + $0x3c] sm:$0xf]
    %v1763 = vld [vmem:[%s7] sm:$0x1]
    %v1765 = vlaneseq
    %v1766 = vshrl.u32 %v1765, 7
    %v1767 = vsub.s32 0, %v1766
    %v1768 = vrot.slane %v1763, %v1767
    %v1786 = vunpack.c.l.b16 %v1747
    %v1787 = vunpack.c.l.b16 %v1748
    %v1788 = vunpack.c.l.b16 %v1749
    %v1789 = vunpack.c.l.b16 %v1750
    %v1790 = vunpack.c.l.b16 %v1751
    %v1791 = vunpack.c.l.b16 %v1752
    %v1792 = vunpack.c.l.b16 %v1753
    %v1793 = vunpack.c.l.b16 %v1754
    %v1794 = vunpack.c.l.b16 %v1755
    %v1795 = vunpack.c.l.b16 %v1756
    %v1796 = vunpack.c.l.b16 %v1757
    %v1797 = vunpack.c.l.b16 %v1758
    %v1798 = vunpack.c.l.b16 %v1759
    %v1799 = vunpack.c.l.b16 %v1760
    %v1800 = vunpack.c.l.b16 %v1761
    %v1801 = vunpack.c.l.b16 %v1762
    %v1802 = vpack.c.b16 %v1787, %v1786
    %v1803 = vpack.c.b16 %v1789, %v1788
    %v1804 = vpack.c.b16 %v1791, %v1790
    %v1805 = vpack.c.b16 %v1793, %v1792
    %v1806 = vpack.c.b16 %v1795, %v1794
    %v1807 = vpack.c.b16 %v1797, %v1796
    %v1808 = vpack.c.b16 %v1799, %v1798
    %v1809 = vpack.c.b16 %v1801, %v1800
    %1818 = vmatprep.subr.bf16.mxu0 0
    %1819 = vmatpush1.bf16.msra.mxu0 %v1802
    %1820 = vmatprep.subr.bf16.mxu0 0
    %1821 = vmatpush1.bf16.msra.mxu0 %v1803
    %1822 = vmatprep.subr.bf16.mxu0 0
    %1823 = vmatpush1.bf16.msra.mxu0 %v1804
    %1824 = vmatprep.subr.bf16.mxu0 0
    %1825 = vmatpush1.bf16.msra.mxu0 %v1805
    %1826 = vmatprep.subr.bf16.mxu0 0
    %1827 = vmatpush1.bf16.msra.mxu0 %v1806
    %1828 = vmatprep.subr.bf16.mxu0 0
    %1829 = vmatpush1.bf16.msra.mxu0 %v1807
    %1830 = vmatprep.subr.bf16.mxu0 0
    %1831 = vmatpush1.bf16.msra.mxu0 %v1808
    %1832 = vmatprep.subr.bf16.mxu0 0
    %1833 = vmatpush1.bf16.msra.mxu0 %v1809
    %1834 = vmatprep.subr.bf16.mxu0 0
    %1835 = vmatpush1.bf16.msra.mxu0 0
    %1836 = vmatprep.subr.bf16.mxu0 0
    %1837 = vmatpush1.bf16.msra.mxu0 0
    %1838 = vmatprep.subr.bf16.mxu0 0
    %1839 = vmatpush1.bf16.msra.mxu0 0
    %1840 = vmatprep.subr.bf16.mxu0 0
    %1841 = vmatpush1.bf16.msra.mxu0 0
    %1842 = vmatprep.subr.bf16.mxu0 0
    %1843 = vmatpush1.bf16.msra.mxu0 0
    %1844 = vmatprep.subr.bf16.mxu0 0
    %1845 = vmatpush1.bf16.msra.mxu0 0
    %1846 = vmatprep.subr.bf16.mxu0 0
    %1847 = vmatpush1.bf16.msra.mxu0 0
    %1848 = vmatprep.subr.bf16.mxu0 0
    %1849 = vmatpush1.bf16.msra.mxu0 0
    %1850 = vmatprep.mubr.bf16.mxu0 0
    %1851 = vmatmul.mubr.bf16.gmra.mrb[0].mxu0 %v1715
    %v1852 = vpop.f32.mrb[0].mxu0
    %v1853 = vadd.f32 %v1768, %v1852
    %v1854 = vpop.f32.mrb[0].mxu0
    %v1855 = vpop.f32.mrb[0].mxu0
    %v1856 = vadd.f32 %v1768, %v1855
    %v1857 = vpop.f32.mrb[0].mxu0
    %1858 = vmatprep.mubr.bf16.mxu0 0
    %1859 = vmatmul.mubr.bf16.gmra.mrb[0].mxu0 %v1716
    %v1860 = vpop.f32.mrb[0].mxu0
    %v1861 = vadd.f32 %v1768, %v1860
    %v1862 = vpop.f32.mrb[0].mxu0
    %v1863 = vpop.f32.mrb[0].mxu0
    %v1864 = vadd.f32 %v1768, %v1863
    %v1865 = vpop.f32.mrb[0].mxu0
    %1866 = vmatprep.mubr.bf16.mxu0 0
    %1867 = vmatmul.mubr.bf16.gmra.mrb[0].mxu0 %v1717
    %v1868 = vpop.f32.mrb[0].mxu0
    %v1869 = vadd.f32 %v1768, %v1868
    %v1870 = vpop.f32.mrb[0].mxu0
    %v1871 = vpop.f32.mrb[0].mxu0
    %v1872 = vadd.f32 %v1768, %v1871
    %v1873 = vpop.f32.mrb[0].mxu0
    %1874 = vmatprep.mubr.bf16.mxu0 0
    %1875 = vmatmul.mubr.bf16.gmra.mrb[0].mxu0 %v1718
    %v1876 = vpop.f32.mrb[0].mxu0
    %v1877 = vadd.f32 %v1768, %v1876
    %v1878 = vpop.f32.mrb[0].mxu0
    %v1879 = vpop.f32.mrb[0].mxu0
    %v1880 = vadd.f32 %v1768, %v1879
    %v1881 = vpop.f32.mrb[0].mxu0
    %1882 = vmatprep.mubr.bf16.mxu0 0
    %1883 = vmatmul.mubr.bf16.gmra.mrb[0].mxu0 %v1719
    %v1884 = vpop.f32.mrb[0].mxu0
    %v1885 = vadd.f32 %v1768, %v1884
    %v1886 = vpop.f32.mrb[0].mxu0
    %v1887 = vpop.f32.mrb[0].mxu0
    %v1888 = vadd.f32 %v1768, %v1887
    %v1889 = vpop.f32.mrb[0].mxu0
    %1890 = vmatprep.mubr.bf16.mxu0 0
    %1891 = vmatmul.mubr.bf16.gmra.mrb[0].mxu0 %v1720
    %v1892 = vpop.f32.mrb[0].mxu0
    %v1893 = vadd.f32 %v1768, %v1892
    %v1894 = vpop.f32.mrb[0].mxu0
    %v1895 = vpop.f32.mrb[0].mxu0
    %v1896 = vadd.f32 %v1768, %v1895
    %v1897 = vpop.f32.mrb[0].mxu0
    %1898 = vmatprep.mubr.bf16.mxu0 0
    %1899 = vmatmul.mubr.bf16.gmra.mrb[0].mxu0 %v1721
    %v1900 = vpop.f32.mrb[0].mxu0
    %v1901 = vadd.f32 %v1768, %v1900
    %v1902 = vpop.f32.mrb[0].mxu0
    %v1903 = vpop.f32.mrb[0].mxu0
    %v1904 = vadd.f32 %v1768, %v1903
    %v1905 = vpop.f32.mrb[0].mxu0
    %1906 = vmatprep.mubr.bf16.mxu0 0
    %1907 = vmatmul.mubr.bf16.gmra.mrb[0].mxu0 %v1722
    %v1908 = vpop.f32.mrb[0].mxu0
    %v1909 = vadd.f32 %v1768, %v1908
    %v1910 = vpop.f32.mrb[0].mxu0
    %v1911 = vpop.f32.mrb[0].mxu0
    %v1912 = vadd.f32 %v1768, %v1911
    %v1913 = vpop.f32.mrb[0].mxu0
    %1914 = vmatprep.mubr.bf16.mxu0 0
    %1915 = vmatmul.mubr.bf16.gmra.mrb[0].mxu0 %v1723
    %v1916 = vpop.f32.mrb[0].mxu0
    %v1917 = vadd.f32 %v1768, %v1916
    %v1918 = vpop.f32.mrb[0].mxu0
    %v1919 = vpop.f32.mrb[0].mxu0
    %v1920 = vadd.f32 %v1768, %v1919
    %v1921 = vpop.f32.mrb[0].mxu0
    %1922 = vmatprep.mubr.bf16.mxu0 0
    %1923 = vmatmul.mubr.bf16.gmra.mrb[0].mxu0 %v1724
    %v1924 = vpop.f32.mrb[0].mxu0
    %v1925 = vadd.f32 %v1768, %v1924
    %v1926 = vpop.f32.mrb[0].mxu0
    %v1927 = vpop.f32.mrb[0].mxu0
    %v1928 = vadd.f32 %v1768, %v1927
    %v1929 = vpop.f32.mrb[0].mxu0
    %1930 = vmatprep.mubr.bf16.mxu0 0
    %1931 = vmatmul.mubr.bf16.gmra.mrb[0].mxu0 %v1725
    %v1932 = vpop.f32.mrb[0].mxu0
    %v1933 = vadd.f32 %v1768, %v1932
    %v1934 = vpop.f32.mrb[0].mxu0
    %v1935 = vpop.f32.mrb[0].mxu0
    %v1936 = vadd.f32 %v1768, %v1935
    %v1937 = vpop.f32.mrb[0].mxu0
    %1938 = vmatprep.mubr.bf16.mxu0 0
    %1939 = vmatmul.mubr.bf16.gmra.mrb[0].mxu0 %v1726
    %v1940 = vpop.f32.mrb[0].mxu0
    %v1941 = vadd.f32 %v1768, %v1940
    %v1942 = vpop.f32.mrb[0].mxu0
    %v1943 = vpop.f32.mrb[0].mxu0
    %v1944 = vadd.f32 %v1768, %v1943
    %v1945 = vpop.f32.mrb[0].mxu0
    %1946 = vmatprep.mubr.bf16.mxu0 0
    %1947 = vmatmul.mubr.bf16.gmra.mrb[0].mxu0 %v1727
    %v1948 = vpop.f32.mrb[0].mxu0
    %v1949 = vadd.f32 %v1768, %v1948
    %v1950 = vpop.f32.mrb[0].mxu0
    %v1951 = vpop.f32.mrb[0].mxu0
    %v1952 = vadd.f32 %v1768, %v1951
    %v1953 = vpop.f32.mrb[0].mxu0
    %1954 = vmatprep.mubr.bf16.mxu0 0
    %1955 = vmatmul.mubr.bf16.gmra.mrb[0].mxu0 %v1728
    %v1956 = vpop.f32.mrb[0].mxu0
    %v1957 = vadd.f32 %v1768, %v1956
    %v1958 = vpop.f32.mrb[0].mxu0
    %v1959 = vpop.f32.mrb[0].mxu0
    %v1960 = vadd.f32 %v1768, %v1959
    %v1961 = vpop.f32.mrb[0].mxu0
    %1962 = vmatprep.mubr.bf16.mxu0 0
    %1963 = vmatmul.mubr.bf16.gmra.mrb[0].mxu0 %v1729
    %v1964 = vpop.f32.mrb[0].mxu0
    %v1965 = vadd.f32 %v1768, %v1964
    %v1966 = vpop.f32.mrb[0].mxu0
    %v1967 = vpop.f32.mrb[0].mxu0
    %v1968 = vadd.f32 %v1768, %v1967
    %v1969 = vpop.f32.mrb[0].mxu0
    %1970 = vmatprep.mubr.bf16.mxu0 0
    %1971 = vmatmul.mubr.bf16.gmra.mrb[0].mxu0 %v1730
    %v1972 = vpop.f32.mrb[0].mxu0
    %v1973 = vadd.f32 %v1768, %v1972
    %v1974 = vpop.f32.mrb[0].mxu0
    %v1975 = vpop.f32.mrb[0].mxu0
    %v1976 = vadd.f32 %v1768, %v1975
    %v1977 = vpop.f32.mrb[0].mxu0
    %1978 = vmatprep.mubr.bf16.mxu0 0
    %1979 = vmatmul.mubr.bf16.gmra.mrb[0].mxu0 %v1731
    %v1980 = vpop.f32.mrb[0].mxu0
    %v1981 = vadd.f32 %v1768, %v1980
    %v1982 = vpop.f32.mrb[0].mxu0
    %v1983 = vpop.f32.mrb[0].mxu0
    %v1984 = vadd.f32 %v1768, %v1983
    %v1985 = vpop.f32.mrb[0].mxu0
    %1986 = vmatprep.mubr.bf16.mxu0 0
    %1987 = vmatmul.mubr.bf16.gmra.mrb[0].mxu0 %v1732
    %v1988 = vpop.f32.mrb[0].mxu0
    %v1989 = vadd.f32 %v1768, %v1988
    %v1990 = vpop.f32.mrb[0].mxu0
    %v1991 = vpop.f32.mrb[0].mxu0
    %v1992 = vadd.f32 %v1768, %v1991
    %v1993 = vpop.f32.mrb[0].mxu0
    %1994 = vmatprep.mubr.bf16.mxu0 0
    %1995 = vmatmul.mubr.bf16.gmra.mrb[0].mxu0 %v1733
    %v1996 = vpop.f32.mrb[0].mxu0
    %v1997 = vadd.f32 %v1768, %v1996
    %v1998 = vpop.f32.mrb[0].mxu0
    %v1999 = vpop.f32.mrb[0].mxu0
    %v2000 = vadd.f32 %v1768, %v1999
    %v2001 = vpop.f32.mrb[0].mxu0
    %2002 = vmatprep.mubr.bf16.mxu0 0
    %2003 = vmatmul.mubr.bf16.gmra.mrb[0].mxu0 %v1734
    %v2004 = vpop.f32.mrb[0].mxu0
    %v2005 = vadd.f32 %v1768, %v2004
    %v2006 = vpop.f32.mrb[0].mxu0
    %v2007 = vpop.f32.mrb[0].mxu0
    %v2008 = vadd.f32 %v1768, %v2007
    %v2009 = vpop.f32.mrb[0].mxu0
    %2010 = vmatprep.mubr.bf16.mxu0 0
    %2011 = vmatmul.mubr.bf16.gmra.mrb[0].mxu0 %v1735
    %v2012 = vpop.f32.mrb[0].mxu0
    %v2013 = vadd.f32 %v1768, %v2012
    %v2014 = vpop.f32.mrb[0].mxu0
    %v2015 = vpop.f32.mrb[0].mxu0
    %v2016 = vadd.f32 %v1768, %v2015
    %v2017 = vpop.f32.mrb[0].mxu0
    %2018 = vmatprep.mubr.bf16.mxu0 0
    %2019 = vmatmul.mubr.bf16.gmra.mrb[0].mxu0 %v1736
    %v2020 = vpop.f32.mrb[0].mxu0
    %v2021 = vadd.f32 %v1768, %v2020
    %v2022 = vpop.f32.mrb[0].mxu0
    %v2023 = vpop.f32.mrb[0].mxu0
    %v2024 = vadd.f32 %v1768, %v2023
    %v2025 = vpop.f32.mrb[0].mxu0
    %2026 = vmatprep.mubr.bf16.mxu0 0
    %2027 = vmatmul.mubr.bf16.gmra.mrb[0].mxu0 %v1737
    %v2028 = vpop.f32.mrb[0].mxu0
    %v2029 = vadd.f32 %v1768, %v2028
    %v2030 = vpop.f32.mrb[0].mxu0
    %v2031 = vpop.f32.mrb[0].mxu0
    %v2032 = vadd.f32 %v1768, %v2031
    %v2033 = vpop.f32.mrb[0].mxu0
    %2034 = vmatprep.mubr.bf16.mxu0 0
    %2035 = vmatmul.mubr.bf16.gmra.mrb[0].mxu0 %v1738
    %v2036 = vpop.f32.mrb[0].mxu0
    %v2037 = vadd.f32 %v1768, %v2036
    %v2038 = vpop.f32.mrb[0].mxu0
    %v2039 = vpop.f32.mrb[0].mxu0
    %v2040 = vadd.f32 %v1768, %v2039
    %v2041 = vpop.f32.mrb[0].mxu0
    %2042 = vmatprep.mubr.bf16.mxu0 0
    %2043 = vmatmul.mubr.bf16.gmra.mrb[0].mxu0 %v1739
    %v2044 = vpop.f32.mrb[0].mxu0
    %v2045 = vadd.f32 %v1768, %v2044
    %v2046 = vpop.f32.mrb[0].mxu0
    %v2047 = vpop.f32.mrb[0].mxu0
    %v2048 = vadd.f32 %v1768, %v2047
    %v2049 = vpop.f32.mrb[0].mxu0
    %2050 = vmatprep.mubr.bf16.mxu0 0
    %2051 = vmatmul.mubr.bf16.gmra.mrb[0].mxu0 %v1740
    %v2052 = vpop.f32.mrb[0].mxu0
    %v2053 = vadd.f32 %v1768, %v2052
    %v2054 = vpop.f32.mrb[0].mxu0
    %v2055 = vpop.f32.mrb[0].mxu0
    %v2056 = vadd.f32 %v1768, %v2055
    %v2057 = vpop.f32.mrb[0].mxu0
    %2058 = vmatprep.mubr.bf16.mxu0 0
    %2059 = vmatmul.mubr.bf16.gmra.mrb[0].mxu0 %v1741
    %v2060 = vpop.f32.mrb[0].mxu0
    %v2061 = vadd.f32 %v1768, %v2060
    %v2062 = vpop.f32.mrb[0].mxu0
    %v2063 = vpop.f32.mrb[0].mxu0
    %v2064 = vadd.f32 %v1768, %v2063
    %v2065 = vpop.f32.mrb[0].mxu0
    %2066 = vmatprep.mubr.bf16.mxu0 0
    %2067 = vmatmul.mubr.bf16.gmra.mrb[0].mxu0 %v1742
    %v2068 = vpop.f32.mrb[0].mxu0
    %v2069 = vadd.f32 %v1768, %v2068
    %v2070 = vpop.f32.mrb[0].mxu0
    %v2071 = vpop.f32.mrb[0].mxu0
    %v2072 = vadd.f32 %v1768, %v2071
    %v2073 = vpop.f32.mrb[0].mxu0
    %2074 = vmatprep.mubr.bf16.mxu0 0
    %2075 = vmatmul.mubr.bf16.gmra.mrb[0].mxu0 %v1743
    %v2076 = vpop.f32.mrb[0].mxu0
    %v2077 = vadd.f32 %v1768, %v2076
    %v2078 = vpop.f32.mrb[0].mxu0
    %v2079 = vpop.f32.mrb[0].mxu0
    %v2080 = vadd.f32 %v1768, %v2079
    %v2081 = vpop.f32.mrb[0].mxu0
    %2082 = vmatprep.mubr.bf16.mxu0 0
    %2083 = vmatmul.mubr.bf16.gmra.mrb[0].mxu0 %v1744
    %v2084 = vpop.f32.mrb[0].mxu0
    %v2085 = vadd.f32 %v1768, %v2084
    %v2086 = vpop.f32.mrb[0].mxu0
    %v2087 = vpop.f32.mrb[0].mxu0
    %v2088 = vadd.f32 %v1768, %v2087
    %v2089 = vpop.f32.mrb[0].mxu0
    %2090 = vmatprep.mubr.bf16.mxu0 0
    %2091 = vmatmul.mubr.bf16.gmra.mrb[0].mxu0 %v1745
    %v2092 = vpop.f32.mrb[0].mxu0
    %v2093 = vadd.f32 %v1768, %v2092
    %v2094 = vpop.f32.mrb[0].mxu0
    %v2095 = vpop.f32.mrb[0].mxu0
    %v2096 = vadd.f32 %v1768, %v2095
    %v2097 = vpop.f32.mrb[0].mxu0
    %2098 = vmatprep.mubr.bf16.mxu0 0
    %2099 = vmatmul.mubr.bf16.gmra.mrb[0].mxu0 %v1746
    %v2100 = vpop.f32.mrb[0].mxu0
    %v2101 = vadd.f32 %v1768, %v2100
    %v2102 = vpop.f32.mrb[0].mxu0
    %v2103 = vpop.f32.mrb[0].mxu0
    %v2104 = vadd.f32 %v1768, %v2103
    %v2105 = vpop.f32.mrb[0].mxu0
    %2106 = vdwg.mxu0
    %v2107 = vld [vmem:[%s1] sm:$0xff]
    %v2108 = vld [vmem:[%s1 + $0x8] sm:$0xff]
    %v2109 = vld [vmem:[%s1 + $0x10] sm:$0xff]
    %v2110 = vld [vmem:[%s1 + $0x18] sm:$0xff]
    %v2111 = vld [vmem:[%s1 + $0x20] sm:$0xff]
    %v2112 = vld [vmem:[%s1 + $0x28] sm:$0xff]
    %v2113 = vld [vmem:[%s1 + $0x30] sm:$0xff]
    %v2114 = vld [vmem:[%s1 + $0x38] sm:$0xff]
    %v2115 = vld [vmem:[%s1 + $0x40] sm:$0xff]
    %v2116 = vld [vmem:[%s1 + $0x48] sm:$0xff]
    %v2117 = vld [vmem:[%s1 + $0x50] sm:$0xff]
    %v2118 = vld [vmem:[%s1 + $0x58] sm:$0xff]
    %v2119 = vld [vmem:[%s1 + $0x60] sm:$0xff]
    %v2120 = vld [vmem:[%s1 + $0x68] sm:$0xff]
    %v2121 = vld [vmem:[%s1 + $0x70] sm:$0xff]
    %v2122 = vld [vmem:[%s1 + $0x78] sm:$0xff]
    %v2123 = vld [vmem:[%s1 + $0x80] sm:$0xff]
    %v2124 = vld [vmem:[%s1 + $0x88] sm:$0xff]
    %v2125 = vld [vmem:[%s1 + $0x90] sm:$0xff]
    %v2126 = vld [vmem:[%s1 + $0x98] sm:$0xff]
    %v2127 = vld [vmem:[%s1 + $0xa0] sm:$0xff]
    %v2128 = vld [vmem:[%s1 + $0xa8] sm:$0xff]
    %v2129 = vld [vmem:[%s1 + $0xb0] sm:$0xff]
    %v2130 = vld [vmem:[%s1 + $0xb8] sm:$0xff]
    %v2131 = vld [vmem:[%s1 + $0xc0] sm:$0xff]
    %v2132 = vld [vmem:[%s1 + $0xc8] sm:$0xff]
    %v2133 = vld [vmem:[%s1 + $0xd0] sm:$0xff]
    %v2134 = vld [vmem:[%s1 + $0xd8] sm:$0xff]
    %v2135 = vld [vmem:[%s1 + $0xe0] sm:$0xff]
    %v2136 = vld [vmem:[%s1 + $0xe8] sm:$0xff]
    %v2137 = vld [vmem:[%s1 + $0xf0] sm:$0xff]
    %v2138 = vld [vmem:[%s1 + $0xf8] sm:$0xff]
    %v2139 = vld [vmem:[%s1 + $0x100] sm:$0xff]
    %v2140 = vld [vmem:[%s1 + $0x108] sm:$0xff]
    %v2141 = vld [vmem:[%s1 + $0x110] sm:$0xff]
    %v2142 = vld [vmem:[%s1 + $0x118] sm:$0xff]
    %v2143 = vld [vmem:[%s1 + $0x120] sm:$0xff]
    %v2144 = vld [vmem:[%s1 + $0x128] sm:$0xff]
    %v2145 = vld [vmem:[%s1 + $0x130] sm:$0xff]
    %v2146 = vld [vmem:[%s1 + $0x138] sm:$0xff]
    %v2147 = vld [vmem:[%s1 + $0x140] sm:$0xff]
    %v2148 = vld [vmem:[%s1 + $0x148] sm:$0xff]
    %v2149 = vld [vmem:[%s1 + $0x150] sm:$0xff]
    %v2150 = vld [vmem:[%s1 + $0x158] sm:$0xff]
    %v2151 = vld [vmem:[%s1 + $0x160] sm:$0xff]
    %v2152 = vld [vmem:[%s1 + $0x168] sm:$0xff]
    %v2153 = vld [vmem:[%s1 + $0x170] sm:$0xff]
    %v2154 = vld [vmem:[%s1 + $0x178] sm:$0xff]
    %v2155 = vld [vmem:[%s1 + $0x180] sm:$0xff]
    %v2156 = vld [vmem:[%s1 + $0x188] sm:$0xff]
    %v2157 = vld [vmem:[%s1 + $0x190] sm:$0xff]
    %v2158 = vld [vmem:[%s1 + $0x198] sm:$0xff]
    %v2159 = vld [vmem:[%s1 + $0x1a0] sm:$0xff]
    %v2160 = vld [vmem:[%s1 + $0x1a8] sm:$0xff]
    %v2161 = vld [vmem:[%s1 + $0x1b0] sm:$0xff]
    %v2162 = vld [vmem:[%s1 + $0x1b8] sm:$0xff]
    %v2163 = vld [vmem:[%s1 + $0x1c0] sm:$0xff]
    %v2164 = vld [vmem:[%s1 + $0x1c8] sm:$0xff]
    %v2165 = vld [vmem:[%s1 + $0x1d0] sm:$0xff]
    %v2166 = vld [vmem:[%s1 + $0x1d8] sm:$0xff]
    %v2167 = vld [vmem:[%s1 + $0x1e0] sm:$0xff]
    %v2168 = vld [vmem:[%s1 + $0x1e8] sm:$0xff]
    %v2169 = vld [vmem:[%s1 + $0x1f0] sm:$0xff]
    %v2170 = vld [vmem:[%s1 + $0x1f8] sm:$0xff]
    %2172 = vset.pattern.permute.xlu0 0
    %2173 = vperm.xlu0 %2172, %v2107
    %v2174 = vpop.permute.xlu0 %2173
    %2177 = vset.pattern.permute.xlu0 0
    %2178 = vperm.xlu0 %2177, %v2108
    %v2179 = vpop.permute.xlu0 %2178
    %2182 = vset.pattern.permute.xlu0 0
    %2183 = vperm.xlu0 %2182, %v2109
    %v2184 = vpop.permute.xlu0 %2183
    %2187 = vset.pattern.permute.xlu0 0
    %2188 = vperm.xlu0 %2187, %v2110
    %v2189 = vpop.permute.xlu0 %2188
    %2192 = vset.pattern.permute.xlu0 0
    %2193 = vperm.xlu0 %2192, %v2111
    %v2194 = vpop.permute.xlu0 %2193
    %2197 = vset.pattern.permute.xlu0 0
    %2198 = vperm.xlu0 %2197, %v2112
    %v2199 = vpop.permute.xlu0 %2198
    %2202 = vset.pattern.permute.xlu0 0
    %2203 = vperm.xlu0 %2202, %v2113
    %v2204 = vpop.permute.xlu0 %2203
    %2207 = vset.pattern.permute.xlu0 0
    %2208 = vperm.xlu0 %2207, %v2114
    %v2209 = vpop.permute.xlu0 %2208
    %2212 = vset.pattern.permute.xlu0 0
    %2213 = vperm.xlu0 %2212, %v2115
    %v2214 = vpop.permute.xlu0 %2213
    %2217 = vset.pattern.permute.xlu0 0
    %2218 = vperm.xlu0 %2217, %v2116
    %v2219 = vpop.permute.xlu0 %2218
    %2222 = vset.pattern.permute.xlu0 0
    %2223 = vperm.xlu0 %2222, %v2117
    %v2224 = vpop.permute.xlu0 %2223
    %2227 = vset.pattern.permute.xlu0 0
    %2228 = vperm.xlu0 %2227, %v2118
    %v2229 = vpop.permute.xlu0 %2228
    %2232 = vset.pattern.permute.xlu0 0
    %2233 = vperm.xlu0 %2232, %v2119
    %v2234 = vpop.permute.xlu0 %2233
    %2237 = vset.pattern.permute.xlu0 0
    %2238 = vperm.xlu0 %2237, %v2120
    %v2239 = vpop.permute.xlu0 %2238
    %2242 = vset.pattern.permute.xlu0 0
    %2243 = vperm.xlu0 %2242, %v2121
    %v2244 = vpop.permute.xlu0 %2243
    %2247 = vset.pattern.permute.xlu0 0
    %2248 = vperm.xlu0 %2247, %v2122
    %v2249 = vpop.permute.xlu0 %2248
    %2252 = vset.pattern.permute.xlu0 0
    %2253 = vperm.xlu0 %2252, %v2123
    %v2254 = vpop.permute.xlu0 %2253
    %2257 = vset.pattern.permute.xlu0 0
    %2258 = vperm.xlu0 %2257, %v2124
    %v2259 = vpop.permute.xlu0 %2258
    %2262 = vset.pattern.permute.xlu0 0
    %2263 = vperm.xlu0 %2262, %v2125
    %v2264 = vpop.permute.xlu0 %2263
    %2267 = vset.pattern.permute.xlu0 0
    %2268 = vperm.xlu0 %2267, %v2126
    %v2269 = vpop.permute.xlu0 %2268
    %2272 = vset.pattern.permute.xlu0 0
    %2273 = vperm.xlu0 %2272, %v2127
    %v2274 = vpop.permute.xlu0 %2273
    %2277 = vset.pattern.permute.xlu0 0
    %2278 = vperm.xlu0 %2277, %v2128
    %v2279 = vpop.permute.xlu0 %2278
    %2282 = vset.pattern.permute.xlu0 0
    %2283 = vperm.xlu0 %2282, %v2129
    %v2284 = vpop.permute.xlu0 %2283
    %2287 = vset.pattern.permute.xlu0 0
    %2288 = vperm.xlu0 %2287, %v2130
    %v2289 = vpop.permute.xlu0 %2288
    %2292 = vset.pattern.permute.xlu0 0
    %2293 = vperm.xlu0 %2292, %v2131
    %v2294 = vpop.permute.xlu0 %2293
    %2297 = vset.pattern.permute.xlu0 0
    %2298 = vperm.xlu0 %2297, %v2132
    %v2299 = vpop.permute.xlu0 %2298
    %2302 = vset.pattern.permute.xlu0 0
    %2303 = vperm.xlu0 %2302, %v2133
    %v2304 = vpop.permute.xlu0 %2303
    %2307 = vset.pattern.permute.xlu0 0
    %2308 = vperm.xlu0 %2307, %v2134
    %v2309 = vpop.permute.xlu0 %2308
    %2312 = vset.pattern.permute.xlu0 0
    %2313 = vperm.xlu0 %2312, %v2135
    %v2314 = vpop.permute.xlu0 %2313
    %2317 = vset.pattern.permute.xlu0 0
    %2318 = vperm.xlu0 %2317, %v2136
    %v2319 = vpop.permute.xlu0 %2318
    %2322 = vset.pattern.permute.xlu0 0
    %2323 = vperm.xlu0 %2322, %v2137
    %v2324 = vpop.permute.xlu0 %2323
    %2327 = vset.pattern.permute.xlu0 0
    %2328 = vperm.xlu0 %2327, %v2138
    %v2329 = vpop.permute.xlu0 %2328
    %2332 = vset.pattern.permute.xlu0 0
    %2333 = vperm.xlu0 %2332, %v2139
    %v2334 = vpop.permute.xlu0 %2333
    %2337 = vset.pattern.permute.xlu0 0
    %2338 = vperm.xlu0 %2337, %v2140
    %v2339 = vpop.permute.xlu0 %2338
    %2342 = vset.pattern.permute.xlu0 0
    %2343 = vperm.xlu0 %2342, %v2141
    %v2344 = vpop.permute.xlu0 %2343
    %2347 = vset.pattern.permute.xlu0 0
    %2348 = vperm.xlu0 %2347, %v2142
    %v2349 = vpop.permute.xlu0 %2348
    %2352 = vset.pattern.permute.xlu0 0
    %2353 = vperm.xlu0 %2352, %v2143
    %v2354 = vpop.permute.xlu0 %2353
    %2357 = vset.pattern.permute.xlu0 0
    %2358 = vperm.xlu0 %2357, %v2144
    %v2359 = vpop.permute.xlu0 %2358
    %2362 = vset.pattern.permute.xlu0 0
    %2363 = vperm.xlu0 %2362, %v2145
    %v2364 = vpop.permute.xlu0 %2363
    %2367 = vset.pattern.permute.xlu0 0
    %2368 = vperm.xlu0 %2367, %v2146
    %v2369 = vpop.permute.xlu0 %2368
    %2372 = vset.pattern.permute.xlu0 0
    %2373 = vperm.xlu0 %2372, %v2147
    %v2374 = vpop.permute.xlu0 %2373
    %2377 = vset.pattern.permute.xlu0 0
    %2378 = vperm.xlu0 %2377, %v2148
    %v2379 = vpop.permute.xlu0 %2378
    %2382 = vset.pattern.permute.xlu0 0
    %2383 = vperm.xlu0 %2382, %v2149
    %v2384 = vpop.permute.xlu0 %2383
    %2387 = vset.pattern.permute.xlu0 0
    %2388 = vperm.xlu0 %2387, %v2150
    %v2389 = vpop.permute.xlu0 %2388
    %2392 = vset.pattern.permute.xlu0 0
    %2393 = vperm.xlu0 %2392, %v2151
    %v2394 = vpop.permute.xlu0 %2393
    %2397 = vset.pattern.permute.xlu0 0
    %2398 = vperm.xlu0 %2397, %v2152
    %v2399 = vpop.permute.xlu0 %2398
    %2402 = vset.pattern.permute.xlu0 0
    %2403 = vperm.xlu0 %2402, %v2153
    %v2404 = vpop.permute.xlu0 %2403
    %2407 = vset.pattern.permute.xlu0 0
    %2408 = vperm.xlu0 %2407, %v2154
    %v2409 = vpop.permute.xlu0 %2408
    %2412 = vset.pattern.permute.xlu0 0
    %2413 = vperm.xlu0 %2412, %v2155
    %v2414 = vpop.permute.xlu0 %2413
    %2417 = vset.pattern.permute.xlu0 0
    %2418 = vperm.xlu0 %2417, %v2156
    %v2419 = vpop.permute.xlu0 %2418
    %2422 = vset.pattern.permute.xlu0 0
    %2423 = vperm.xlu0 %2422, %v2157
    %v2424 = vpop.permute.xlu0 %2423
    %2427 = vset.pattern.permute.xlu0 0
    %2428 = vperm.xlu0 %2427, %v2158
    %v2429 = vpop.permute.xlu0 %2428
    %2432 = vset.pattern.permute.xlu0 0
    %2433 = vperm.xlu0 %2432, %v2159
    %v2434 = vpop.permute.xlu0 %2433
    %2437 = vset.pattern.permute.xlu0 0
    %2438 = vperm.xlu0 %2437, %v2160
    %v2439 = vpop.permute.xlu0 %2438
    %2442 = vset.pattern.permute.xlu0 0
    %2443 = vperm.xlu0 %2442, %v2161
    %v2444 = vpop.permute.xlu0 %2443
    %2447 = vset.pattern.permute.xlu0 0
    %2448 = vperm.xlu0 %2447, %v2162
    %v2449 = vpop.permute.xlu0 %2448
    %2452 = vset.pattern.permute.xlu0 0
    %2453 = vperm.xlu0 %2452, %v2163
    %v2454 = vpop.permute.xlu0 %2453
    %2457 = vset.pattern.permute.xlu0 0
    %2458 = vperm.xlu0 %2457, %v2164
    %v2459 = vpop.permute.xlu0 %2458
    %2462 = vset.pattern.permute.xlu0 0
    %2463 = vperm.xlu0 %2462, %v2165
    %v2464 = vpop.permute.xlu0 %2463
    %2467 = vset.pattern.permute.xlu0 0
    %2468 = vperm.xlu0 %2467, %v2166
    %v2469 = vpop.permute.xlu0 %2468
    %2472 = vset.pattern.permute.xlu0 0
    %2473 = vperm.xlu0 %2472, %v2167
    %v2474 = vpop.permute.xlu0 %2473
    %2477 = vset.pattern.permute.xlu0 0
    %2478 = vperm.xlu0 %2477, %v2168
    %v2479 = vpop.permute.xlu0 %2478
    %2482 = vset.pattern.permute.xlu0 0
    %2483 = vperm.xlu0 %2482, %v2169
    %v2484 = vpop.permute.xlu0 %2483
    %2487 = vset.pattern.permute.xlu0 0
    %2488 = vperm.xlu0 %2487, %v2170
    %v2489 = vpop.permute.xlu0 %2488
    %v2491 = vmul.f32 %v1853, %v2174
    %v2492 = vmul.f32 %v1856, %v2179
    %v2493 = vmul.f32 %v1861, %v2184
    %v2494 = vmul.f32 %v1864, %v2189
    %v2495 = vmul.f32 %v1869, %v2194
    %v2496 = vmul.f32 %v1872, %v2199
    %v2497 = vmul.f32 %v1877, %v2204
    %v2498 = vmul.f32 %v1880, %v2209
    %v2499 = vmul.f32 %v1885, %v2214
    %v2500 = vmul.f32 %v1888, %v2219
    %v2501 = vmul.f32 %v1893, %v2224
    %v2502 = vmul.f32 %v1896, %v2229
    %v2503 = vmul.f32 %v1901, %v2234
    %v2504 = vmul.f32 %v1904, %v2239
    %v2505 = vmul.f32 %v1909, %v2244
    %v2506 = vmul.f32 %v1912, %v2249
    %v2507 = vmul.f32 %v1917, %v2254
    %v2508 = vmul.f32 %v1920, %v2259
    %v2509 = vmul.f32 %v1925, %v2264
    %v2510 = vmul.f32 %v1928, %v2269
    %v2511 = vmul.f32 %v1933, %v2274
    %v2512 = vmul.f32 %v1936, %v2279
    %v2513 = vmul.f32 %v1941, %v2284
    %v2514 = vmul.f32 %v1944, %v2289
    %v2515 = vmul.f32 %v1949, %v2294
    %v2516 = vmul.f32 %v1952, %v2299
    %v2517 = vmul.f32 %v1957, %v2304
    %v2518 = vmul.f32 %v1960, %v2309
    %v2519 = vmul.f32 %v1965, %v2314
    %v2520 = vmul.f32 %v1968, %v2319
    %v2521 = vmul.f32 %v1973, %v2324
    %v2522 = vmul.f32 %v1976, %v2329
    %v2523 = vmul.f32 %v1981, %v2334
    %v2524 = vmul.f32 %v1984, %v2339
    %v2525 = vmul.f32 %v1989, %v2344
    %v2526 = vmul.f32 %v1992, %v2349
    %v2527 = vmul.f32 %v1997, %v2354
    %v2528 = vmul.f32 %v2000, %v2359
    %v2529 = vmul.f32 %v2005, %v2364
    %v2530 = vmul.f32 %v2008, %v2369
    %v2531 = vmul.f32 %v2013, %v2374
    %v2532 = vmul.f32 %v2016, %v2379
    %v2533 = vmul.f32 %v2021, %v2384
    %v2534 = vmul.f32 %v2024, %v2389
    %v2535 = vmul.f32 %v2029, %v2394
    %v2536 = vmul.f32 %v2032, %v2399
    %v2537 = vmul.f32 %v2037, %v2404
    %v2538 = vmul.f32 %v2040, %v2409
    %v2539 = vmul.f32 %v2045, %v2414
    %v2540 = vmul.f32 %v2048, %v2419
    %v2541 = vmul.f32 %v2053, %v2424
    %v2542 = vmul.f32 %v2056, %v2429
    %v2543 = vmul.f32 %v2061, %v2434
    %v2544 = vmul.f32 %v2064, %v2439
    %v2545 = vmul.f32 %v2069, %v2444
    %v2546 = vmul.f32 %v2072, %v2449
    %v2547 = vmul.f32 %v2077, %v2454
    %v2548 = vmul.f32 %v2080, %v2459
    %v2549 = vmul.f32 %v2085, %v2464
    %v2550 = vmul.f32 %v2088, %v2469
    %v2551 = vmul.f32 %v2093, %v2474
    %v2552 = vmul.f32 %v2096, %v2479
    %v2553 = vmul.f32 %v2101, %v2484
    %v2554 = vmul.f32 %v2104, %v2489
    %v2555 = vld [vmem:[#allocation2] sm:$0xf]
    %v2556 = vld [vmem:[#allocation2 + $0x4] sm:$0xf]
    %v2557 = vld [vmem:[#allocation2 + $0x8] sm:$0xf]
    %v2558 = vld [vmem:[#allocation2 + $0xc] sm:$0xf]
    %v2559 = vld [vmem:[#allocation2 + $0x10] sm:$0xf]
    %v2560 = vld [vmem:[#allocation2 + $0x14] sm:$0xf]
    %v2561 = vld [vmem:[#allocation2 + $0x18] sm:$0xf]
    %v2562 = vld [vmem:[#allocation2 + $0x1c] sm:$0xf]
    %v2563 = vld [vmem:[#allocation2 + $0x20] sm:$0xf]
    %v2564 = vld [vmem:[#allocation2 + $0x24] sm:$0xf]
    %v2565 = vld [vmem:[#allocation2 + $0x28] sm:$0xf]
    %v2566 = vld [vmem:[#allocation2 + $0x2c] sm:$0xf]
    %v2567 = vld [vmem:[#allocation2 + $0x30] sm:$0xf]
    %v2568 = vld [vmem:[#allocation2 + $0x34] sm:$0xf]
    %v2569 = vld [vmem:[#allocation2 + $0x38] sm:$0xf]
    %v2570 = vld [vmem:[#allocation2 + $0x3c] sm:$0xf]
    %v2571 = vld [vmem:[#allocation2 + $0x40] sm:$0xf]
    %v2572 = vld [vmem:[#allocation2 + $0x44] sm:$0xf]
    %v2573 = vld [vmem:[#allocation2 + $0x48] sm:$0xf]
    %v2574 = vld [vmem:[#allocation2 + $0x4c] sm:$0xf]
    %v2575 = vld [vmem:[#allocation2 + $0x50] sm:$0xf]
    %v2576 = vld [vmem:[#allocation2 + $0x54] sm:$0xf]
    %v2577 = vld [vmem:[#allocation2 + $0x58] sm:$0xf]
    %v2578 = vld [vmem:[#allocation2 + $0x5c] sm:$0xf]
    %v2579 = vld [vmem:[#allocation2 + $0x60] sm:$0xf]
    %v2580 = vld [vmem:[#allocation2 + $0x64] sm:$0xf]
    %v2581 = vld [vmem:[#allocation2 + $0x68] sm:$0xf]
    %v2582 = vld [vmem:[#allocation2 + $0x6c] sm:$0xf]
    %v2583 = vld [vmem:[#allocation2 + $0x70] sm:$0xf]
    %v2584 = vld [vmem:[#allocation2 + $0x74] sm:$0xf]
    %v2585 = vld [vmem:[#allocation2 + $0x78] sm:$0xf]
    %v2586 = vld [vmem:[#allocation2 + $0x7c] sm:$0xf]
    %v2587 = vld [vmem:[#allocation2 + $0x80] sm:$0xf]
    %v2588 = vld [vmem:[#allocation2 + $0x84] sm:$0xf]
    %v2589 = vld [vmem:[#allocation2 + $0x88] sm:$0xf]
    %v2590 = vld [vmem:[#allocation2 + $0x8c] sm:$0xf]
    %v2591 = vld [vmem:[#allocation2 + $0x90] sm:$0xf]
    %v2592 = vld [vmem:[#allocation2 + $0x94] sm:$0xf]
    %v2593 = vld [vmem:[#allocation2 + $0x98] sm:$0xf]
    %v2594 = vld [vmem:[#allocation2 + $0x9c] sm:$0xf]
    %v2595 = vld [vmem:[#allocation2 + $0xa0] sm:$0xf]
    %v2596 = vld [vmem:[#allocation2 + $0xa4] sm:$0xf]
    %v2597 = vld [vmem:[#allocation2 + $0xa8] sm:$0xf]
    %v2598 = vld [vmem:[#allocation2 + $0xac] sm:$0xf]
    %v2599 = vld [vmem:[#allocation2 + $0xb0] sm:$0xf]
    %v2600 = vld [vmem:[#allocation2 + $0xb4] sm:$0xf]
    %v2601 = vld [vmem:[#allocation2 + $0xb8] sm:$0xf]
    %v2602 = vld [vmem:[#allocation2 + $0xbc] sm:$0xf]
    %v2603 = vld [vmem:[#allocation2 + $0xc0] sm:$0xf]
    %v2604 = vld [vmem:[#allocation2 + $0xc4] sm:$0xf]
    %v2605 = vld [vmem:[#allocation2 + $0xc8] sm:$0xf]
    %v2606 = vld [vmem:[#allocation2 + $0xcc] sm:$0xf]
    %v2607 = vld [vmem:[#allocation2 + $0xd0] sm:$0xf]
    %v2608 = vld [vmem:[#allocation2 + $0xd4] sm:$0xf]
    %v2609 = vld [vmem:[#allocation2 + $0xd8] sm:$0xf]
    %v2610 = vld [vmem:[#allocation2 + $0xdc] sm:$0xf]
    %v2611 = vld [vmem:[#allocation2 + $0xe0] sm:$0xf]
    %v2612 = vld [vmem:[#allocation2 + $0xe4] sm:$0xf]
    %v2613 = vld [vmem:[#allocation2 + $0xe8] sm:$0xf]
    %v2614 = vld [vmem:[#allocation2 + $0xec] sm:$0xf]
    %v2615 = vld [vmem:[#allocation2 + $0xf0] sm:$0xf]
    %v2616 = vld [vmem:[#allocation2 + $0xf4] sm:$0xf]
    %v2617 = vld [vmem:[#allocation2 + $0xf8] sm:$0xf]
    %v2618 = vld [vmem:[#allocation2 + $0xfc] sm:$0xf]
    %v2619 = vunpack.c.l.bf16 %v2555
    %v2620 = vunpack.c.l.bf16 %v2556
    %v2621 = vunpack.c.l.bf16 %v2557
    %v2622 = vunpack.c.l.bf16 %v2558
    %v2623 = vunpack.c.l.bf16 %v2559
    %v2624 = vunpack.c.l.bf16 %v2560
    %v2625 = vunpack.c.l.bf16 %v2561
    %v2626 = vunpack.c.l.bf16 %v2562
    %v2627 = vunpack.c.l.bf16 %v2563
    %v2628 = vunpack.c.l.bf16 %v2564
    %v2629 = vunpack.c.l.bf16 %v2565
    %v2630 = vunpack.c.l.bf16 %v2566
    %v2631 = vunpack.c.l.bf16 %v2567
    %v2632 = vunpack.c.l.bf16 %v2568
    %v2633 = vunpack.c.l.bf16 %v2569
    %v2634 = vunpack.c.l.bf16 %v2570
    %v2635 = vunpack.c.l.bf16 %v2571
    %v2636 = vunpack.c.l.bf16 %v2572
    %v2637 = vunpack.c.l.bf16 %v2573
    %v2638 = vunpack.c.l.bf16 %v2574
    %v2639 = vunpack.c.l.bf16 %v2575
    %v2640 = vunpack.c.l.bf16 %v2576
    %v2641 = vunpack.c.l.bf16 %v2577
    %v2642 = vunpack.c.l.bf16 %v2578
    %v2643 = vunpack.c.l.bf16 %v2579
    %v2644 = vunpack.c.l.bf16 %v2580
    %v2645 = vunpack.c.l.bf16 %v2581
    %v2646 = vunpack.c.l.bf16 %v2582
    %v2647 = vunpack.c.l.bf16 %v2583
    %v2648 = vunpack.c.l.bf16 %v2584
    %v2649 = vunpack.c.l.bf16 %v2585
    %v2650 = vunpack.c.l.bf16 %v2586
    %v2651 = vunpack.c.l.bf16 %v2587
    %v2652 = vunpack.c.l.bf16 %v2588
    %v2653 = vunpack.c.l.bf16 %v2589
    %v2654 = vunpack.c.l.bf16 %v2590
    %v2655 = vunpack.c.l.bf16 %v2591
    %v2656 = vunpack.c.l.bf16 %v2592
    %v2657 = vunpack.c.l.bf16 %v2593
    %v2658 = vunpack.c.l.bf16 %v2594
    %v2659 = vunpack.c.l.bf16 %v2595
    %v2660 = vunpack.c.l.bf16 %v2596
    %v2661 = vunpack.c.l.bf16 %v2597
    %v2662 = vunpack.c.l.bf16 %v2598
    %v2663 = vunpack.c.l.bf16 %v2599
    %v2664 = vunpack.c.l.bf16 %v2600
    %v2665 = vunpack.c.l.bf16 %v2601
    %v2666 = vunpack.c.l.bf16 %v2602
    %v2667 = vunpack.c.l.bf16 %v2603
    %v2668 = vunpack.c.l.bf16 %v2604
    %v2669 = vunpack.c.l.bf16 %v2605
    %v2670 = vunpack.c.l.bf16 %v2606
    %v2671 = vunpack.c.l.bf16 %v2607
    %v2672 = vunpack.c.l.bf16 %v2608
    %v2673 = vunpack.c.l.bf16 %v2609
    %v2674 = vunpack.c.l.bf16 %v2610
    %v2675 = vunpack.c.l.bf16 %v2611
    %v2676 = vunpack.c.l.bf16 %v2612
    %v2677 = vunpack.c.l.bf16 %v2613
    %v2678 = vunpack.c.l.bf16 %v2614
    %v2679 = vunpack.c.l.bf16 %v2615
    %v2680 = vunpack.c.l.bf16 %v2616
    %v2681 = vunpack.c.l.bf16 %v2617
    %v2682 = vunpack.c.l.bf16 %v2618
    %v2683 = vmul.f32 %v2619, %v2491
    %v2684 = vmul.f32 %v2620, %v2492
    %v2685 = vmul.f32 %v2621, %v2493
    %v2686 = vmul.f32 %v2622, %v2494
    %v2687 = vmul.f32 %v2623, %v2495
    %v2688 = vmul.f32 %v2624, %v2496
    %v2689 = vmul.f32 %v2625, %v2497
    %v2690 = vmul.f32 %v2626, %v2498
    %v2691 = vmul.f32 %v2627, %v2499
    %v2692 = vmul.f32 %v2628, %v2500
    %v2693 = vmul.f32 %v2629, %v2501
    %v2694 = vmul.f32 %v2630, %v2502
    %v2695 = vmul.f32 %v2631, %v2503
    %v2696 = vmul.f32 %v2632, %v2504
    %v2697 = vmul.f32 %v2633, %v2505
    %v2698 = vmul.f32 %v2634, %v2506
    %v2699 = vmul.f32 %v2635, %v2507
    %v2700 = vmul.f32 %v2636, %v2508
    %v2701 = vmul.f32 %v2637, %v2509
    %v2702 = vmul.f32 %v2638, %v2510
    %v2703 = vmul.f32 %v2639, %v2511
    %v2704 = vmul.f32 %v2640, %v2512
    %v2705 = vmul.f32 %v2641, %v2513
    %v2706 = vmul.f32 %v2642, %v2514
    %v2707 = vmul.f32 %v2643, %v2515
    %v2708 = vmul.f32 %v2644, %v2516
    %v2709 = vmul.f32 %v2645, %v2517
    %v2710 = vmul.f32 %v2646, %v2518
    %v2711 = vmul.f32 %v2647, %v2519
    %v2712 = vmul.f32 %v2648, %v2520
    %v2713 = vmul.f32 %v2649, %v2521
    %v2714 = vmul.f32 %v2650, %v2522
    %v2715 = vmul.f32 %v2651, %v2523
    %v2716 = vmul.f32 %v2652, %v2524
    %v2717 = vmul.f32 %v2653, %v2525
    %v2718 = vmul.f32 %v2654, %v2526
    %v2719 = vmul.f32 %v2655, %v2527
    %v2720 = vmul.f32 %v2656, %v2528
    %v2721 = vmul.f32 %v2657, %v2529
    %v2722 = vmul.f32 %v2658, %v2530
    %v2723 = vmul.f32 %v2659, %v2531
    %v2724 = vmul.f32 %v2660, %v2532
    %v2725 = vmul.f32 %v2661, %v2533
    %v2726 = vmul.f32 %v2662, %v2534
    %v2727 = vmul.f32 %v2663, %v2535
    %v2728 = vmul.f32 %v2664, %v2536
    %v2729 = vmul.f32 %v2665, %v2537
    %v2730 = vmul.f32 %v2666, %v2538
    %v2731 = vmul.f32 %v2667, %v2539
    %v2732 = vmul.f32 %v2668, %v2540
    %v2733 = vmul.f32 %v2669, %v2541
    %v2734 = vmul.f32 %v2670, %v2542
    %v2735 = vmul.f32 %v2671, %v2543
    %v2736 = vmul.f32 %v2672, %v2544
    %v2737 = vmul.f32 %v2673, %v2545
    %v2738 = vmul.f32 %v2674, %v2546
    %v2739 = vmul.f32 %v2675, %v2547
    %v2740 = vmul.f32 %v2676, %v2548
    %v2741 = vmul.f32 %v2677, %v2549
    %v2742 = vmul.f32 %v2678, %v2550
    %v2743 = vmul.f32 %v2679, %v2551
    %v2744 = vmul.f32 %v2680, %v2552
    %v2745 = vmul.f32 %v2681, %v2553
    %v2746 = vmul.f32 %v2682, %v2554
    %v2747 = vpack.c.bf16 %v2684, %v2683
    %v2748 = vpack.c.bf16 %v2686, %v2685
    %v2749 = vpack.c.bf16 %v2688, %v2687
    %v2750 = vpack.c.bf16 %v2690, %v2689
    %v2751 = vpack.c.bf16 %v2692, %v2691
    %v2752 = vpack.c.bf16 %v2694, %v2693
    %v2753 = vpack.c.bf16 %v2696, %v2695
    %v2754 = vpack.c.bf16 %v2698, %v2697
    %v2755 = vpack.c.bf16 %v2700, %v2699
    %v2756 = vpack.c.bf16 %v2702, %v2701
    %v2757 = vpack.c.bf16 %v2704, %v2703
    %v2758 = vpack.c.bf16 %v2706, %v2705
    %v2759 = vpack.c.bf16 %v2708, %v2707
    %v2760 = vpack.c.bf16 %v2710, %v2709
    %v2761 = vpack.c.bf16 %v2712, %v2711
    %v2762 = vpack.c.bf16 %v2714, %v2713
    %v2763 = vpack.c.bf16 %v2716, %v2715
    %v2764 = vpack.c.bf16 %v2718, %v2717
    %v2765 = vpack.c.bf16 %v2720, %v2719
    %v2766 = vpack.c.bf16 %v2722, %v2721
    %v2767 = vpack.c.bf16 %v2724, %v2723
    %v2768 = vpack.c.bf16 %v2726, %v2725
    %v2769 = vpack.c.bf16 %v2728, %v2727
    %v2770 = vpack.c.bf16 %v2730, %v2729
    %v2771 = vpack.c.bf16 %v2732, %v2731
    %v2772 = vpack.c.bf16 %v2734, %v2733
    %v2773 = vpack.c.bf16 %v2736, %v2735
    %v2774 = vpack.c.bf16 %v2738, %v2737
    %v2775 = vpack.c.bf16 %v2740, %v2739
    %v2776 = vpack.c.bf16 %v2742, %v2741
    %v2777 = vpack.c.bf16 %v2744, %v2743
    %v2778 = vpack.c.bf16 %v2746, %v2745
    %v2811 = vunpack.c.l.b16 %v2747
    %v2812 = vunpack.c.h.b16 %v2747
    %v2813 = vunpack.c.l.b16 %v2748
    %v2814 = vunpack.c.h.b16 %v2748
    %v2815 = vunpack.c.l.b16 %v2749
    %v2816 = vunpack.c.h.b16 %v2749
    %v2817 = vunpack.c.l.b16 %v2750
    %v2818 = vunpack.c.h.b16 %v2750
    %v2819 = vunpack.c.l.b16 %v2751
    %v2820 = vunpack.c.h.b16 %v2751
    %v2821 = vunpack.c.l.b16 %v2752
    %v2822 = vunpack.c.h.b16 %v2752
    %v2823 = vunpack.c.l.b16 %v2753
    %v2824 = vunpack.c.h.b16 %v2753
    %v2825 = vunpack.c.l.b16 %v2754
    %v2826 = vunpack.c.h.b16 %v2754
    %v2827 = vunpack.c.l.b16 %v2755
    %v2828 = vunpack.c.h.b16 %v2755
    %v2829 = vunpack.c.l.b16 %v2756
    %v2830 = vunpack.c.h.b16 %v2756
    %v2831 = vunpack.c.l.b16 %v2757
    %v2832 = vunpack.c.h.b16 %v2757
    %v2833 = vunpack.c.l.b16 %v2758
    %v2834 = vunpack.c.h.b16 %v2758
    %v2835 = vunpack.c.l.b16 %v2759
    %v2836 = vunpack.c.h.b16 %v2759
    %v2837 = vunpack.c.l.b16 %v2760
    %v2838 = vunpack.c.h.b16 %v2760
    %v2839 = vunpack.c.l.b16 %v2761
    %v2840 = vunpack.c.h.b16 %v2761
    %v2841 = vunpack.c.l.b16 %v2762
    %v2842 = vunpack.c.h.b16 %v2762
    %v2843 = vunpack.c.l.b16 %v2763
    %v2844 = vunpack.c.h.b16 %v2763
    %v2845 = vunpack.c.l.b16 %v2764
    %v2846 = vunpack.c.h.b16 %v2764
    %v2847 = vunpack.c.l.b16 %v2765
    %v2848 = vunpack.c.h.b16 %v2765
    %v2849 = vunpack.c.l.b16 %v2766
    %v2850 = vunpack.c.h.b16 %v2766
    %v2851 = vunpack.c.l.b16 %v2767
    %v2852 = vunpack.c.h.b16 %v2767
    %v2853 = vunpack.c.l.b16 %v2768
    %v2854 = vunpack.c.h.b16 %v2768
    %v2855 = vunpack.c.l.b16 %v2769
    %v2856 = vunpack.c.h.b16 %v2769
    %v2857 = vunpack.c.l.b16 %v2770
    %v2858 = vunpack.c.h.b16 %v2770
    %v2859 = vunpack.c.l.b16 %v2771
    %v2860 = vunpack.c.h.b16 %v2771
    %v2861 = vunpack.c.l.b16 %v2772
    %v2862 = vunpack.c.h.b16 %v2772
    %v2863 = vunpack.c.l.b16 %v2773
    %v2864 = vunpack.c.h.b16 %v2773
    %v2865 = vunpack.c.l.b16 %v2774
    %v2866 = vunpack.c.h.b16 %v2774
    %v2867 = vunpack.c.l.b16 %v2775
    %v2868 = vunpack.c.h.b16 %v2775
    %v2869 = vunpack.c.l.b16 %v2776
    %v2870 = vunpack.c.h.b16 %v2776
    %v2871 = vunpack.c.l.b16 %v2777
    %v2872 = vunpack.c.h.b16 %v2777
    %v2873 = vunpack.c.l.b16 %v2778
    %v2874 = vunpack.c.h.b16 %v2778
    %v2875 = vpack.c.b16 %v2811, %v2811
    %v2876 = vpack.c.b16 %v2812, %v2812
    %v2877 = vpack.c.b16 %v2813, %v2813
    %v2878 = vpack.c.b16 %v2814, %v2814
    %v2879 = vpack.c.b16 %v2815, %v2815
    %v2880 = vpack.c.b16 %v2816, %v2816
    %v2881 = vpack.c.b16 %v2817, %v2817
    %v2882 = vpack.c.b16 %v2818, %v2818
    %v2883 = vpack.c.b16 %v2819, %v2819
    %v2884 = vpack.c.b16 %v2820, %v2820
    %v2885 = vpack.c.b16 %v2821, %v2821
    %v2886 = vpack.c.b16 %v2822, %v2822
    %v2887 = vpack.c.b16 %v2823, %v2823
    %v2888 = vpack.c.b16 %v2824, %v2824
    %v2889 = vpack.c.b16 %v2825, %v2825
    %v2890 = vpack.c.b16 %v2826, %v2826
    %v2891 = vpack.c.b16 %v2827, %v2827
    %v2892 = vpack.c.b16 %v2828, %v2828
    %v2893 = vpack.c.b16 %v2829, %v2829
    %v2894 = vpack.c.b16 %v2830, %v2830
    %v2895 = vpack.c.b16 %v2831, %v2831
    %v2896 = vpack.c.b16 %v2832, %v2832
    %v2897 = vpack.c.b16 %v2833, %v2833
    %v2898 = vpack.c.b16 %v2834, %v2834
    %v2899 = vpack.c.b16 %v2835, %v2835
    %v2900 = vpack.c.b16 %v2836, %v2836
    %v2901 = vpack.c.b16 %v2837, %v2837
    %v2902 = vpack.c.b16 %v2838, %v2838
    %v2903 = vpack.c.b16 %v2839, %v2839
    %v2904 = vpack.c.b16 %v2840, %v2840
    %v2905 = vpack.c.b16 %v2841, %v2841
    %v2906 = vpack.c.b16 %v2842, %v2842
    %v2907 = vpack.c.b16 %v2843, %v2843
    %v2908 = vpack.c.b16 %v2844, %v2844
    %v2909 = vpack.c.b16 %v2845, %v2845
    %v2910 = vpack.c.b16 %v2846, %v2846
    %v2911 = vpack.c.b16 %v2847, %v2847
    %v2912 = vpack.c.b16 %v2848, %v2848
    %v2913 = vpack.c.b16 %v2849, %v2849
    %v2914 = vpack.c.b16 %v2850, %v2850
    %v2915 = vpack.c.b16 %v2851, %v2851
    %v2916 = vpack.c.b16 %v2852, %v2852
    %v2917 = vpack.c.b16 %v2853, %v2853
    %v2918 = vpack.c.b16 %v2854, %v2854
    %v2919 = vpack.c.b16 %v2855, %v2855
    %v2920 = vpack.c.b16 %v2856, %v2856
    %v2921 = vpack.c.b16 %v2857, %v2857
    %v2922 = vpack.c.b16 %v2858, %v2858
    %v2923 = vpack.c.b16 %v2859, %v2859
    %v2924 = vpack.c.b16 %v2860, %v2860
    %v2925 = vpack.c.b16 %v2861, %v2861
    %v2926 = vpack.c.b16 %v2862, %v2862
    %v2927 = vpack.c.b16 %v2863, %v2863
    %v2928 = vpack.c.b16 %v2864, %v2864
    %v2929 = vpack.c.b16 %v2865, %v2865
    %v2930 = vpack.c.b16 %v2866, %v2866
    %v2931 = vpack.c.b16 %v2867, %v2867
    %v2932 = vpack.c.b16 %v2868, %v2868
    %v2933 = vpack.c.b16 %v2869, %v2869
    %v2934 = vpack.c.b16 %v2870, %v2870
    %v2935 = vpack.c.b16 %v2871, %v2871
    %v2936 = vpack.c.b16 %v2872, %v2872
    %v2937 = vpack.c.b16 %v2873, %v2873
    %v2938 = vpack.c.b16 %v2874, %v2874
    %3003 = vst [vmem:[#allocation8] sm:$0xf] %v2875
    %3004 = vst [vmem:[#allocation8 + $0x4] sm:$0xf] %v2876
    %3005 = vst [vmem:[#allocation8 + $0x8] sm:$0xf] %v2877
    %3006 = vst [vmem:[#allocation8 + $0xc] sm:$0xf] %v2878
    %3007 = vst [vmem:[#allocation8 + $0x10] sm:$0xf] %v2879
    %3008 = vst [vmem:[#allocation8 + $0x14] sm:$0xf] %v2880
    %3009 = vst [vmem:[#allocation8 + $0x18] sm:$0xf] %v2881
    %3010 = vst [vmem:[#allocation8 + $0x1c] sm:$0xf] %v2882
    %3011 = vst [vmem:[#allocation8 + $0x20] sm:$0xf] %v2883
    %3012 = vst [vmem:[#allocation8 + $0x24] sm:$0xf] %v2884
    %3013 = vst [vmem:[#allocation8 + $0x28] sm:$0xf] %v2885
    %3014 = vst [vmem:[#allocation8 + $0x2c] sm:$0xf] %v2886
    %3015 = vst [vmem:[#allocation8 + $0x30] sm:$0xf] %v2887
    %3016 = vst [vmem:[#allocation8 + $0x34] sm:$0xf] %v2888
    %3017 = vst [vmem:[#allocation8 + $0x38] sm:$0xf] %v2889
    %3018 = vst [vmem:[#allocation8 + $0x3c] sm:$0xf] %v2890
    %3019 = vst [vmem:[#allocation8 + $0x40] sm:$0xf] %v2891
    %3020 = vst [vmem:[#allocation8 + $0x44] sm:$0xf] %v2892
    %3021 = vst [vmem:[#allocation8 + $0x48] sm:$0xf] %v2893
    %3022 = vst [vmem:[#allocation8 + $0x4c] sm:$0xf] %v2894
    %3023 = vst [vmem:[#allocation8 + $0x50] sm:$0xf] %v2895
    %3024 = vst [vmem:[#allocation8 + $0x54] sm:$0xf] %v2896
    %3025 = vst [vmem:[#allocation8 + $0x58] sm:$0xf] %v2897
    %3026 = vst [vmem:[#allocation8 + $0x5c] sm:$0xf] %v2898
    %3027 = vst [vmem:[#allocation8 + $0x60] sm:$0xf] %v2899
    %3028 = vst [vmem:[#allocation8 + $0x64] sm:$0xf] %v2900
    %3029 = vst [vmem:[#allocation8 + $0x68] sm:$0xf] %v2901
    %3030 = vst [vmem:[#allocation8 + $0x6c] sm:$0xf] %v2902
    %3031 = vst [vmem:[#allocation8 + $0x70] sm:$0xf] %v2903
    %3032 = vst [vmem:[#allocation8 + $0x74] sm:$0xf] %v2904
    %3033 = vst [vmem:[#allocation8 + $0x78] sm:$0xf] %v2905
    %3034 = vst [vmem:[#allocation8 + $0x7c] sm:$0xf] %v2906
    %3035 = vst [vmem:[#allocation8 + $0x80] sm:$0xf] %v2907
    %3036 = vst [vmem:[#allocation8 + $0x84] sm:$0xf] %v2908
    %3037 = vst [vmem:[#allocation8 + $0x88] sm:$0xf] %v2909
    %3038 = vst [vmem:[#allocation8 + $0x8c] sm:$0xf] %v2910
    %3039 = vst [vmem:[#allocation8 + $0x90] sm:$0xf] %v2911
    %3040 = vst [vmem:[#allocation8 + $0x94] sm:$0xf] %v2912
    %3041 = vst [vmem:[#allocation8 + $0x98] sm:$0xf] %v2913
    %3042 = vst [vmem:[#allocation8 + $0x9c] sm:$0xf] %v2914
    %3043 = vst [vmem:[#allocation8 + $0xa0] sm:$0xf] %v2915
    %3044 = vst [vmem:[#allocation8 + $0xa4] sm:$0xf] %v2916
    %3045 = vst [vmem:[#allocation8 + $0xa8] sm:$0xf] %v2917
    %3046 = vst [vmem:[#allocation8 + $0xac] sm:$0xf] %v2918
    %3047 = vst [vmem:[#allocation8 + $0xb0] sm:$0xf] %v2919
    %3048 = vst [vmem:[#allocation8 + $0xb4] sm:$0xf] %v2920
    %3049 = vst [vmem:[#allocation8 + $0xb8] sm:$0xf] %v2921
    %3050 = vst [vmem:[#allocation8 + $0xbc] sm:$0xf] %v2922
    %3051 = vst [vmem:[#allocation8 + $0xc0] sm:$0xf] %v2923
    %3052 = vst [vmem:[#allocation8 + $0xc4] sm:$0xf] %v2924
    %3053 = vst [vmem:[#allocation8 + $0xc8] sm:$0xf] %v2925
    %3054 = vst [vmem:[#allocation8 + $0xcc] sm:$0xf] %v2926
    %3055 = vst [vmem:[#allocation8 + $0xd0] sm:$0xf] %v2927
    %3056 = vst [vmem:[#allocation8 + $0xd4] sm:$0xf] %v2928
    %3057 = vst [vmem:[#allocation8 + $0xd8] sm:$0xf] %v2929
    %3058 = vst [vmem:[#allocation8 + $0xdc] sm:$0xf] %v2930
    %3059 = vst [vmem:[#allocation8 + $0xe0] sm:$0xf] %v2931
    %3060 = vst [vmem:[#allocation8 + $0xe4] sm:$0xf] %v2932
    %3061 = vst [vmem:[#allocation8 + $0xe8] sm:$0xf] %v2933
    %3062 = vst [vmem:[#allocation8 + $0xec] sm:$0xf] %v2934
    %3063 = vst [vmem:[#allocation8 + $0xf0] sm:$0xf] %v2935
    %3064 = vst [vmem:[#allocation8 + $0xf4] sm:$0xf] %v2936
    %3065 = vst [vmem:[#allocation8 + $0xf8] sm:$0xf] %v2937
    %3066 = vst [vmem:[#allocation8 + $0xfc] sm:$0xf] %v2938
    %v3067 = vld [vmem:[%s2] sm:$0xf]
    %v3068 = vld [vmem:[%s2 + $0x4] sm:$0xf]
    %v3069 = vld [vmem:[%s2 + $0x8] sm:$0xf]
    %v3070 = vld [vmem:[%s2 + $0xc] sm:$0xf]
    %v3071 = vld [vmem:[%s2 + $0x10] sm:$0xf]
    %v3072 = vld [vmem:[%s2 + $0x14] sm:$0xf]
    %v3073 = vld [vmem:[%s2 + $0x18] sm:$0xf]
    %v3074 = vld [vmem:[%s2 + $0x1c] sm:$0xf]
    %v3075 = vld [vmem:[%s2 + $0x20] sm:$0xf]
    %v3076 = vld [vmem:[%s2 + $0x24] sm:$0xf]
    %v3077 = vld [vmem:[%s2 + $0x28] sm:$0xf]
    %v3078 = vld [vmem:[%s2 + $0x2c] sm:$0xf]
    %v3079 = vld [vmem:[%s2 + $0x30] sm:$0xf]
    %v3080 = vld [vmem:[%s2 + $0x34] sm:$0xf]
    %v3081 = vld [vmem:[%s2 + $0x38] sm:$0xf]
    %v3082 = vld [vmem:[%s2 + $0x3c] sm:$0xf]
    %v3083 = vld [vmem:[%s2 + $0x40] sm:$0xf]
    %v3084 = vld [vmem:[%s2 + $0x44] sm:$0xf]
    %v3085 = vld [vmem:[%s2 + $0x48] sm:$0xf]
    %v3086 = vld [vmem:[%s2 + $0x4c] sm:$0xf]
    %v3087 = vld [vmem:[%s2 + $0x50] sm:$0xf]
    %v3088 = vld [vmem:[%s2 + $0x54] sm:$0xf]
    %v3089 = vld [vmem:[%s2 + $0x58] sm:$0xf]
    %v3090 = vld [vmem:[%s2 + $0x5c] sm:$0xf]
    %v3091 = vld [vmem:[%s2 + $0x60] sm:$0xf]
    %v3092 = vld [vmem:[%s2 + $0x64] sm:$0xf]
    %v3093 = vld [vmem:[%s2 + $0x68] sm:$0xf]
    %v3094 = vld [vmem:[%s2 + $0x6c] sm:$0xf]
    %v3095 = vld [vmem:[%s2 + $0x70] sm:$0xf]
    %v3096 = vld [vmem:[%s2 + $0x74] sm:$0xf]
    %v3097 = vld [vmem:[%s2 + $0x78] sm:$0xf]
    %v3098 = vld [vmem:[%s2 + $0x7c] sm:$0xf]
    %v3099 = vld [vmem:[%s2 + $0x80] sm:$0xf]
    %v3100 = vld [vmem:[%s2 + $0x84] sm:$0xf]
    %v3101 = vld [vmem:[%s2 + $0x88] sm:$0xf]
    %v3102 = vld [vmem:[%s2 + $0x8c] sm:$0xf]
    %v3103 = vld [vmem:[%s2 + $0x90] sm:$0xf]
    %v3104 = vld [vmem:[%s2 + $0x94] sm:$0xf]
    %v3105 = vld [vmem:[%s2 + $0x98] sm:$0xf]
    %v3106 = vld [vmem:[%s2 + $0x9c] sm:$0xf]
    %v3107 = vld [vmem:[%s2 + $0xa0] sm:$0xf]
    %v3108 = vld [vmem:[%s2 + $0xa4] sm:$0xf]
    %v3109 = vld [vmem:[%s2 + $0xa8] sm:$0xf]
    %v3110 = vld [vmem:[%s2 + $0xac] sm:$0xf]
    %v3111 = vld [vmem:[%s2 + $0xb0] sm:$0xf]
    %v3112 = vld [vmem:[%s2 + $0xb4] sm:$0xf]
    %v3113 = vld [vmem:[%s2 + $0xb8] sm:$0xf]
    %v3114 = vld [vmem:[%s2 + $0xbc] sm:$0xf]
    %v3115 = vld [vmem:[%s2 + $0xc0] sm:$0xf]
    %v3116 = vld [vmem:[%s2 + $0xc4] sm:$0xf]
    %v3117 = vld [vmem:[%s2 + $0xc8] sm:$0xf]
    %v3118 = vld [vmem:[%s2 + $0xcc] sm:$0xf]
    %v3119 = vld [vmem:[%s2 + $0xd0] sm:$0xf]
    %v3120 = vld [vmem:[%s2 + $0xd4] sm:$0xf]
    %v3121 = vld [vmem:[%s2 + $0xd8] sm:$0xf]
    %v3122 = vld [vmem:[%s2 + $0xdc] sm:$0xf]
    %v3123 = vld [vmem:[%s2 + $0xe0] sm:$0xf]
    %v3124 = vld [vmem:[%s2 + $0xe4] sm:$0xf]
    %v3125 = vld [vmem:[%s2 + $0xe8] sm:$0xf]
    %v3126 = vld [vmem:[%s2 + $0xec] sm:$0xf]
    %v3127 = vld [vmem:[%s2 + $0xf0] sm:$0xf]
    %v3128 = vld [vmem:[%s2 + $0xf4] sm:$0xf]
    %v3129 = vld [vmem:[%s2 + $0xf8] sm:$0xf]
    %v3130 = vld [vmem:[%s2 + $0xfc] sm:$0xf]
    %v3131 = vunpack.c.l.bf16 %v3067
    %v3132 = vunpack.c.l.bf16 %v3068
    %v3133 = vunpack.c.l.bf16 %v3069
    %v3134 = vunpack.c.l.bf16 %v3070
    %v3135 = vunpack.c.l.bf16 %v3071
    %v3136 = vunpack.c.l.bf16 %v3072
    %v3137 = vunpack.c.l.bf16 %v3073
    %v3138 = vunpack.c.l.bf16 %v3074
    %v3139 = vunpack.c.l.bf16 %v3075
    %v3140 = vunpack.c.l.bf16 %v3076
    %v3141 = vunpack.c.l.bf16 %v3077
    %v3142 = vunpack.c.l.bf16 %v3078
    %v3143 = vunpack.c.l.bf16 %v3079
    %v3144 = vunpack.c.l.bf16 %v3080
    %v3145 = vunpack.c.l.bf16 %v3081
    %v3146 = vunpack.c.l.bf16 %v3082
    %v3147 = vunpack.c.l.bf16 %v3083
    %v3148 = vunpack.c.l.bf16 %v3084
    %v3149 = vunpack.c.l.bf16 %v3085
    %v3150 = vunpack.c.l.bf16 %v3086
    %v3151 = vunpack.c.l.bf16 %v3087
    %v3152 = vunpack.c.l.bf16 %v3088
    %v3153 = vunpack.c.l.bf16 %v3089
    %v3154 = vunpack.c.l.bf16 %v3090
    %v3155 = vunpack.c.l.bf16 %v3091
    %v3156 = vunpack.c.l.bf16 %v3092
    %v3157 = vunpack.c.l.bf16 %v3093
    %v3158 = vunpack.c.l.bf16 %v3094
    %v3159 = vunpack.c.l.bf16 %v3095
    %v3160 = vunpack.c.l.bf16 %v3096
    %v3161 = vunpack.c.l.bf16 %v3097
    %v3162 = vunpack.c.l.bf16 %v3098
    %v3163 = vunpack.c.l.bf16 %v3099
    %v3164 = vunpack.c.l.bf16 %v3100
    %v3165 = vunpack.c.l.bf16 %v3101
    %v3166 = vunpack.c.l.bf16 %v3102
    %v3167 = vunpack.c.l.bf16 %v3103
    %v3168 = vunpack.c.l.bf16 %v3104
    %v3169 = vunpack.c.l.bf16 %v3105
    %v3170 = vunpack.c.l.bf16 %v3106
    %v3171 = vunpack.c.l.bf16 %v3107
    %v3172 = vunpack.c.l.bf16 %v3108
    %v3173 = vunpack.c.l.bf16 %v3109
    %v3174 = vunpack.c.l.bf16 %v3110
    %v3175 = vunpack.c.l.bf16 %v3111
    %v3176 = vunpack.c.l.bf16 %v3112
    %v3177 = vunpack.c.l.bf16 %v3113
    %v3178 = vunpack.c.l.bf16 %v3114
    %v3179 = vunpack.c.l.bf16 %v3115
    %v3180 = vunpack.c.l.bf16 %v3116
    %v3181 = vunpack.c.l.bf16 %v3117
    %v3182 = vunpack.c.l.bf16 %v3118
    %v3183 = vunpack.c.l.bf16 %v3119
    %v3184 = vunpack.c.l.bf16 %v3120
    %v3185 = vunpack.c.l.bf16 %v3121
    %v3186 = vunpack.c.l.bf16 %v3122
    %v3187 = vunpack.c.l.bf16 %v3123
    %v3188 = vunpack.c.l.bf16 %v3124
    %v3189 = vunpack.c.l.bf16 %v3125
    %v3190 = vunpack.c.l.bf16 %v3126
    %v3191 = vunpack.c.l.bf16 %v3127
    %v3192 = vunpack.c.l.bf16 %v3128
    %v3193 = vunpack.c.l.bf16 %v3129
    %v3194 = vunpack.c.l.bf16 %v3130
    %v3195 = vmul.f32 %v3131, %v2491
    %v3196 = vmul.f32 %v3132, %v2492
    %v3197 = vmul.f32 %v3133, %v2493
    %v3198 = vmul.f32 %v3134, %v2494
    %v3199 = vmul.f32 %v3135, %v2495
    %v3200 = vmul.f32 %v3136, %v2496
    %v3201 = vmul.f32 %v3137, %v2497
    %v3202 = vmul.f32 %v3138, %v2498
    %v3203 = vmul.f32 %v3139, %v2499
    %v3204 = vmul.f32 %v3140, %v2500
    %v3205 = vmul.f32 %v3141, %v2501
    %v3206 = vmul.f32 %v3142, %v2502
    %v3207 = vmul.f32 %v3143, %v2503
    %v3208 = vmul.f32 %v3144, %v2504
    %v3209 = vmul.f32 %v3145, %v2505
    %v3210 = vmul.f32 %v3146, %v2506
    %v3211 = vmul.f32 %v3147, %v2507
    %v3212 = vmul.f32 %v3148, %v2508
    %v3213 = vmul.f32 %v3149, %v2509
    %v3214 = vmul.f32 %v3150, %v2510
    %v3215 = vmul.f32 %v3151, %v2511
    %v3216 = vmul.f32 %v3152, %v2512
    %v3217 = vmul.f32 %v3153, %v2513
    %v3218 = vmul.f32 %v3154, %v2514
    %v3219 = vmul.f32 %v3155, %v2515
    %v3220 = vmul.f32 %v3156, %v2516
    %v3221 = vmul.f32 %v3157, %v2517
    %v3222 = vmul.f32 %v3158, %v2518
    %v3223 = vmul.f32 %v3159, %v2519
    %v3224 = vmul.f32 %v3160, %v2520
    %v3225 = vmul.f32 %v3161, %v2521
    %v3226 = vmul.f32 %v3162, %v2522
    %v3227 = vmul.f32 %v3163, %v2523
    %v3228 = vmul.f32 %v3164, %v2524
    %v3229 = vmul.f32 %v3165, %v2525
    %v3230 = vmul.f32 %v3166, %v2526
    %v3231 = vmul.f32 %v3167, %v2527
    %v3232 = vmul.f32 %v3168, %v2528
    %v3233 = vmul.f32 %v3169, %v2529
    %v3234 = vmul.f32 %v3170, %v2530
    %v3235 = vmul.f32 %v3171, %v2531
    %v3236 = vmul.f32 %v3172, %v2532
    %v3237 = vmul.f32 %v3173, %v2533
    %v3238 = vmul.f32 %v3174, %v2534
    %v3239 = vmul.f32 %v3175, %v2535
    %v3240 = vmul.f32 %v3176, %v2536
    %v3241 = vmul.f32 %v3177, %v2537
    %v3242 = vmul.f32 %v3178, %v2538
    %v3243 = vmul.f32 %v3179, %v2539
    %v3244 = vmul.f32 %v3180, %v2540
    %v3245 = vmul.f32 %v3181, %v2541
    %v3246 = vmul.f32 %v3182, %v2542
    %v3247 = vmul.f32 %v3183, %v2543
    %v3248 = vmul.f32 %v3184, %v2544
    %v3249 = vmul.f32 %v3185, %v2545
    %v3250 = vmul.f32 %v3186, %v2546
    %v3251 = vmul.f32 %v3187, %v2547
    %v3252 = vmul.f32 %v3188, %v2548
    %v3253 = vmul.f32 %v3189, %v2549
    %v3254 = vmul.f32 %v3190, %v2550
    %v3255 = vmul.f32 %v3191, %v2551
    %v3256 = vmul.f32 %v3192, %v2552
    %v3257 = vmul.f32 %v3193, %v2553
    %v3258 = vmul.f32 %v3194, %v2554
    %v3259 = vpack.c.bf16 %v3196, %v3195
    %v3260 = vpack.c.bf16 %v3198, %v3197
    %v3261 = vpack.c.bf16 %v3200, %v3199
    %v3262 = vpack.c.bf16 %v3202, %v3201
    %v3263 = vpack.c.bf16 %v3204, %v3203
    %v3264 = vpack.c.bf16 %v3206, %v3205
    %v3265 = vpack.c.bf16 %v3208, %v3207
    %v3266 = vpack.c.bf16 %v3210, %v3209
    %v3267 = vpack.c.bf16 %v3212, %v3211
    %v3268 = vpack.c.bf16 %v3214, %v3213
    %v3269 = vpack.c.bf16 %v3216, %v3215
    %v3270 = vpack.c.bf16 %v3218, %v3217
    %v3271 = vpack.c.bf16 %v3220, %v3219
    %v3272 = vpack.c.bf16 %v3222, %v3221
    %v3273 = vpack.c.bf16 %v3224, %v3223
    %v3274 = vpack.c.bf16 %v3226, %v3225
    %v3275 = vpack.c.bf16 %v3228, %v3227
    %v3276 = vpack.c.bf16 %v3230, %v3229
    %v3277 = vpack.c.bf16 %v3232, %v3231
    %v3278 = vpack.c.bf16 %v3234, %v3233
    %v3279 = vpack.c.bf16 %v3236, %v3235
    %v3280 = vpack.c.bf16 %v3238, %v3237
    %v3281 = vpack.c.bf16 %v3240, %v3239
    %v3282 = vpack.c.bf16 %v3242, %v3241
    %v3283 = vpack.c.bf16 %v3244, %v3243
    %v3284 = vpack.c.bf16 %v3246, %v3245
    %v3285 = vpack.c.bf16 %v3248, %v3247
    %v3286 = vpack.c.bf16 %v3250, %v3249
    %v3287 = vpack.c.bf16 %v3252, %v3251
    %v3288 = vpack.c.bf16 %v3254, %v3253
    %v3289 = vpack.c.bf16 %v3256, %v3255
    %v3290 = vpack.c.bf16 %v3258, %v3257
    %v3323 = vunpack.c.l.b16 %v3259
    %v3324 = vunpack.c.h.b16 %v3259
    %v3325 = vunpack.c.l.b16 %v3260
    %v3326 = vunpack.c.h.b16 %v3260
    %v3327 = vunpack.c.l.b16 %v3261
    %v3328 = vunpack.c.h.b16 %v3261
    %v3329 = vunpack.c.l.b16 %v3262
    %v3330 = vunpack.c.h.b16 %v3262
    %v3331 = vunpack.c.l.b16 %v3263
    %v3332 = vunpack.c.h.b16 %v3263
    %v3333 = vunpack.c.l.b16 %v3264
    %v3334 = vunpack.c.h.b16 %v3264
    %v3335 = vunpack.c.l.b16 %v3265
    %v3336 = vunpack.c.h.b16 %v3265
    %v3337 = vunpack.c.l.b16 %v3266
    %v3338 = vunpack.c.h.b16 %v3266
    %v3339 = vunpack.c.l.b16 %v3267
    %v3340 = vunpack.c.h.b16 %v3267
    %v3341 = vunpack.c.l.b16 %v3268
    %v3342 = vunpack.c.h.b16 %v3268
    %v3343 = vunpack.c.l.b16 %v3269
    %v3344 = vunpack.c.h.b16 %v3269
    %v3345 = vunpack.c.l.b16 %v3270
    %v3346 = vunpack.c.h.b16 %v3270
    %v3347 = vunpack.c.l.b16 %v3271
    %v3348 = vunpack.c.h.b16 %v3271
    %v3349 = vunpack.c.l.b16 %v3272
    %v3350 = vunpack.c.h.b16 %v3272
    %v3351 = vunpack.c.l.b16 %v3273
    %v3352 = vunpack.c.h.b16 %v3273
    %v3353 = vunpack.c.l.b16 %v3274
    %v3354 = vunpack.c.h.b16 %v3274
    %v3355 = vunpack.c.l.b16 %v3275
    %v3356 = vunpack.c.h.b16 %v3275
    %v3357 = vunpack.c.l.b16 %v3276
    %v3358 = vunpack.c.h.b16 %v3276
    %v3359 = vunpack.c.l.b16 %v3277
    %v3360 = vunpack.c.h.b16 %v3277
    %v3361 = vunpack.c.l.b16 %v3278
    %v3362 = vunpack.c.h.b16 %v3278
    %v3363 = vunpack.c.l.b16 %v3279
    %v3364 = vunpack.c.h.b16 %v3279
    %v3365 = vunpack.c.l.b16 %v3280
    %v3366 = vunpack.c.h.b16 %v3280
    %v3367 = vunpack.c.l.b16 %v3281
    %v3368 = vunpack.c.h.b16 %v3281
    %v3369 = vunpack.c.l.b16 %v3282
    %v3370 = vunpack.c.h.b16 %v3282
    %v3371 = vunpack.c.l.b16 %v3283
    %v3372 = vunpack.c.h.b16 %v3283
    %v3373 = vunpack.c.l.b16 %v3284
    %v3374 = vunpack.c.h.b16 %v3284
    %v3375 = vunpack.c.l.b16 %v3285
    %v3376 = vunpack.c.h.b16 %v3285
    %v3377 = vunpack.c.l.b16 %v3286
    %v3378 = vunpack.c.h.b16 %v3286
    %v3379 = vunpack.c.l.b16 %v3287
    %v3380 = vunpack.c.h.b16 %v3287
    %v3381 = vunpack.c.l.b16 %v3288
    %v3382 = vunpack.c.h.b16 %v3288
    %v3383 = vunpack.c.l.b16 %v3289
    %v3384 = vunpack.c.h.b16 %v3289
    %v3385 = vunpack.c.l.b16 %v3290
    %v3386 = vunpack.c.h.b16 %v3290
    %v3387 = vpack.c.b16 %v3323, %v3323
    %v3388 = vpack.c.b16 %v3324, %v3324
    %v3389 = vpack.c.b16 %v3325, %v3325
    %v3390 = vpack.c.b16 %v3326, %v3326
    %v3391 = vpack.c.b16 %v3327, %v3327
    %v3392 = vpack.c.b16 %v3328, %v3328
    %v3393 = vpack.c.b16 %v3329, %v3329
    %v3394 = vpack.c.b16 %v3330, %v3330
    %v3395 = vpack.c.b16 %v3331, %v3331
    %v3396 = vpack.c.b16 %v3332, %v3332
    %v3397 = vpack.c.b16 %v3333, %v3333
    %v3398 = vpack.c.b16 %v3334, %v3334
    %v3399 = vpack.c.b16 %v3335, %v3335
    %v3400 = vpack.c.b16 %v3336, %v3336
    %v3401 = vpack.c.b16 %v3337, %v3337
    %v3402 = vpack.c.b16 %v3338, %v3338
    %v3403 = vpack.c.b16 %v3339, %v3339
    %v3404 = vpack.c.b16 %v3340, %v3340
    %v3405 = vpack.c.b16 %v3341, %v3341
    %v3406 = vpack.c.b16 %v3342, %v3342
    %v3407 = vpack.c.b16 %v3343, %v3343
    %v3408 = vpack.c.b16 %v3344, %v3344
    %v3409 = vpack.c.b16 %v3345, %v3345
    %v3410 = vpack.c.b16 %v3346, %v3346
    %v3411 = vpack.c.b16 %v3347, %v3347
    %v3412 = vpack.c.b16 %v3348, %v3348
    %v3413 = vpack.c.b16 %v3349, %v3349
    %v3414 = vpack.c.b16 %v3350, %v3350
    %v3415 = vpack.c.b16 %v3351, %v3351
    %v3416 = vpack.c.b16 %v3352, %v3352
    %v3417 = vpack.c.b16 %v3353, %v3353
    %v3418 = vpack.c.b16 %v3354, %v3354
    %v3419 = vpack.c.b16 %v3355, %v3355
    %v3420 = vpack.c.b16 %v3356, %v3356
    %v3421 = vpack.c.b16 %v3357, %v3357
    %v3422 = vpack.c.b16 %v3358, %v3358
    %v3423 = vpack.c.b16 %v3359, %v3359
    %v3424 = vpack.c.b16 %v3360, %v3360
    %v3425 = vpack.c.b16 %v3361, %v3361
    %v3426 = vpack.c.b16 %v3362, %v3362
    %v3427 = vpack.c.b16 %v3363, %v3363
    %v3428 = vpack.c.b16 %v3364, %v3364
    %v3429 = vpack.c.b16 %v3365, %v3365
    %v3430 = vpack.c.b16 %v3366, %v3366
    %v3431 = vpack.c.b16 %v3367, %v3367
    %v3432 = vpack.c.b16 %v3368, %v3368
    %v3433 = vpack.c.b16 %v3369, %v3369
    %v3434 = vpack.c.b16 %v3370, %v3370
    %v3435 = vpack.c.b16 %v3371, %v3371
    %v3436 = vpack.c.b16 %v3372, %v3372
    %v3437 = vpack.c.b16 %v3373, %v3373
    %v3438 = vpack.c.b16 %v3374, %v3374
    %v3439 = vpack.c.b16 %v3375, %v3375
    %v3440 = vpack.c.b16 %v3376, %v3376
    %v3441 = vpack.c.b16 %v3377, %v3377
    %v3442 = vpack.c.b16 %v3378, %v3378
    %v3443 = vpack.c.b16 %v3379, %v3379
    %v3444 = vpack.c.b16 %v3380, %v3380
    %v3445 = vpack.c.b16 %v3381, %v3381
    %v3446 = vpack.c.b16 %v3382, %v3382
    %v3447 = vpack.c.b16 %v3383, %v3383
    %v3448 = vpack.c.b16 %v3384, %v3384
    %v3449 = vpack.c.b16 %v3385, %v3385
    %v3450 = vpack.c.b16 %v3386, %v3386
    %3515 = vst [vmem:[#allocation9] sm:$0xf] %v3387
    %3516 = vst [vmem:[#allocation9 + $0x4] sm:$0xf] %v3388
    %3517 = vst [vmem:[#allocation9 + $0x8] sm:$0xf] %v3389
    %3518 = vst [vmem:[#allocation9 + $0xc] sm:$0xf] %v3390
    %3519 = vst [vmem:[#allocation9 + $0x10] sm:$0xf] %v3391
    %3520 = vst [vmem:[#allocation9 + $0x14] sm:$0xf] %v3392
    %3521 = vst [vmem:[#allocation9 + $0x18] sm:$0xf] %v3393
    %3522 = vst [vmem:[#allocation9 + $0x1c] sm:$0xf] %v3394
    %3523 = vst [vmem:[#allocation9 + $0x20] sm:$0xf] %v3395
    %3524 = vst [vmem:[#allocation9 + $0x24] sm:$0xf] %v3396
    %3525 = vst [vmem:[#allocation9 + $0x28] sm:$0xf] %v3397
    %3526 = vst [vmem:[#allocation9 + $0x2c] sm:$0xf] %v3398
    %3527 = vst [vmem:[#allocation9 + $0x30] sm:$0xf] %v3399
    %3528 = vst [vmem:[#allocation9 + $0x34] sm:$0xf] %v3400
    %3529 = vst [vmem:[#allocation9 + $0x38] sm:$0xf] %v3401
    %3530 = vst [vmem:[#allocation9 + $0x3c] sm:$0xf] %v3402
    %3531 = vst [vmem:[#allocation9 + $0x40] sm:$0xf] %v3403
    %3532 = vst [vmem:[#allocation9 + $0x44] sm:$0xf] %v3404
    %3533 = vst [vmem:[#allocation9 + $0x48] sm:$0xf] %v3405
    %3534 = vst [vmem:[#allocation9 + $0x4c] sm:$0xf] %v3406
    %3535 = vst [vmem:[#allocation9 + $0x50] sm:$0xf] %v3407
    %3536 = vst [vmem:[#allocation9 + $0x54] sm:$0xf] %v3408
    %3537 = vst [vmem:[#allocation9 + $0x58] sm:$0xf] %v3409
    %3538 = vst [vmem:[#allocation9 + $0x5c] sm:$0xf] %v3410
    %3539 = vst [vmem:[#allocation9 + $0x60] sm:$0xf] %v3411
    %3540 = vst [vmem:[#allocation9 + $0x64] sm:$0xf] %v3412
    %3541 = vst [vmem:[#allocation9 + $0x68] sm:$0xf] %v3413
    %3542 = vst [vmem:[#allocation9 + $0x6c] sm:$0xf] %v3414
    %3543 = vst [vmem:[#allocation9 + $0x70] sm:$0xf] %v3415
    %3544 = vst [vmem:[#allocation9 + $0x74] sm:$0xf] %v3416
    %3545 = vst [vmem:[#allocation9 + $0x78] sm:$0xf] %v3417
    %3546 = vst [vmem:[#allocation9 + $0x7c] sm:$0xf] %v3418
    %3547 = vst [vmem:[#allocation9 + $0x80] sm:$0xf] %v3419
    %3548 = vst [vmem:[#allocation9 + $0x84] sm:$0xf] %v3420
    %3549 = vst [vmem:[#allocation9 + $0x88] sm:$0xf] %v3421
    %3550 = vst [vmem:[#allocation9 + $0x8c] sm:$0xf] %v3422
    %3551 = vst [vmem:[#allocation9 + $0x90] sm:$0xf] %v3423
    %3552 = vst [vmem:[#allocation9 + $0x94] sm:$0xf] %v3424
    %3553 = vst [vmem:[#allocation9 + $0x98] sm:$0xf] %v3425
    %3554 = vst [vmem:[#allocation9 + $0x9c] sm:$0xf] %v3426
    %3555 = vst [vmem:[#allocation9 + $0xa0] sm:$0xf] %v3427
    %3556 = vst [vmem:[#allocation9 + $0xa4] sm:$0xf] %v3428
    %3557 = vst [vmem:[#allocation9 + $0xa8] sm:$0xf] %v3429
    %3558 = vst [vmem:[#allocation9 + $0xac] sm:$0xf] %v3430
    %3559 = vst [vmem:[#allocation9 + $0xb0] sm:$0xf] %v3431
    %3560 = vst [vmem:[#allocation9 + $0xb4] sm:$0xf] %v3432
    %3561 = vst [vmem:[#allocation9 + $0xb8] sm:$0xf] %v3433
    %3562 = vst [vmem:[#allocation9 + $0xbc] sm:$0xf] %v3434
    %3563 = vst [vmem:[#allocation9 + $0xc0] sm:$0xf] %v3435
    %3564 = vst [vmem:[#allocation9 + $0xc4] sm:$0xf] %v3436
    %3565 = vst [vmem:[#allocation9 + $0xc8] sm:$0xf] %v3437
    %3566 = vst [vmem:[#allocation9 + $0xcc] sm:$0xf] %v3438
    %3567 = vst [vmem:[#allocation9 + $0xd0] sm:$0xf] %v3439
    %3568 = vst [vmem:[#allocation9 + $0xd4] sm:$0xf] %v3440
    %3569 = vst [vmem:[#allocation9 + $0xd8] sm:$0xf] %v3441
    %3570 = vst [vmem:[#allocation9 + $0xdc] sm:$0xf] %v3442
    %3571 = vst [vmem:[#allocation9 + $0xe0] sm:$0xf] %v3443
    %3572 = vst [vmem:[#allocation9 + $0xe4] sm:$0xf] %v3444
    %3573 = vst [vmem:[#allocation9 + $0xe8] sm:$0xf] %v3445
    %3574 = vst [vmem:[#allocation9 + $0xec] sm:$0xf] %v3446
    %3575 = vst [vmem:[#allocation9 + $0xf0] sm:$0xf] %v3447
    %3576 = vst [vmem:[#allocation9 + $0xf4] sm:$0xf] %v3448
    %3577 = vst [vmem:[#allocation9 + $0xf8] sm:$0xf] %v3449
    %3578 = vst [vmem:[#allocation9 + $0xfc] sm:$0xf] %v3450
    // Predicated region
    $region46: #{tpu_custom_call.1} parent=1 // pred_check
      _
    $region47: #{tpu_custom_call.1} parent=1 // pred_check_branch
      %3580 = sbr.rel (0) target = $region49
    $region48: #{tpu_custom_call.1} parent=1 // pred_region
      %s3582 = ssub.s32 4096, 4096
      %3583 = vsyncadd [#allocation4], %s3582
      %s3584 = sshll.u32 [#allocation8], 4
      %s3585 = int_to_ptr.vmem [resolvable:$true] %s3584
      %3590 = dma.vmem_to_hbm [thread:$0]  %s3585, 4096, %s8, [#allocation4], 64, 64, 4
    $region49: #{tpu_custom_call.1} parent=1 // pred_fallthru
      _
    // Predicated region
    $region50: #{tpu_custom_call.1} parent=1 // pred_check
      _
    $region51: #{tpu_custom_call.1} parent=1 // pred_check_branch
      %3592 = sbr.rel (0) target = $region53
    $region52: #{tpu_custom_call.1} parent=1 // pred_region
      %s3594 = ssub.s32 4096, 4096
      %3595 = vsyncadd [#allocation10], %s3594
      %s3596 = sshll.u32 [#allocation9], 4
      %s3597 = int_to_ptr.vmem [resolvable:$true] %s3596
      %3602 = dma.vmem_to_hbm [thread:$0]  %s3597, 4096, %s9, [#allocation10], 64, 64, 4
    $region53: #{tpu_custom_call.1} parent=1 // pred_fallthru
      _
    // Predicated region
    $region54: #{tpu_custom_call.1} parent=1 // pred_check
      _
    $region55: #{tpu_custom_call.1} parent=1 // pred_check_branch
      %3604 = sbr.rel (0) target = $region57
    $region56: #{tpu_custom_call.1} parent=1 // pred_region
      %3605 = dma.done [#allocation4], 4096
    $region57: #{tpu_custom_call.1} parent=1 // pred_fallthru
      _
    // Predicated region
    $region58: #{tpu_custom_call.1} parent=1 // pred_check
      _
    $region59: #{tpu_custom_call.1} parent=1 // pred_check_branch
      %3607 = sbr.rel (0) target = $region61
    $region60: #{tpu_custom_call.1} parent=1 // pred_region
      %3608 = dma.done [#allocation10], 4096
    $region61: #{tpu_custom_call.1} parent=1 // pred_fallthru
      _
    %3609 = vsyncpa [#allocation3], 1
    %3610 = vsyncpa [#allocation6], 1
    %3611 = vsyncpa [#allocation4], 1
    %3612 = vsyncpa [#allocation10], 1

</llo_original>
